<compile_context>
chip_gen: v7x
topology: tpu7x:2x2x1
jax: 0.10.0
libtpu: 0.0.40
codegen_flags: <defaults>
</compile_context>

<pallas_src>
import functools

import jax
import jax.numpy as jnp
from jax.experimental import pallas as pl
from jax.experimental.pallas import tpu as pltpu


def _vmem_limit_bytes():
    """Per-generation scoped-VMEM cap (~3/4 of physical); safe fallback."""
    try:
        cap = int(pltpu.get_tpu_info().vmem_capacity_bytes)
        return int(min(96 * 1024 * 1024, cap * 3 // 4))
    except Exception:  # conservative default, valid on every generation
        return 32 * 1024 * 1024


def _cp(semantics):
    return pltpu.CompilerParams(dimension_semantics=semantics,
                                vmem_limit_bytes=_vmem_limit_bytes())


def _const_spec(shape):
    """Whole-array block, resident across the grid (constant index_map)."""
    n = len(shape)
    return pl.BlockSpec(tuple(shape), lambda b, _n=n: (0,) * _n)


def _batch_spec(shape):
    """One batch element per grid step; all other dims whole."""
    n = len(shape)
    return pl.BlockSpec((1,) + tuple(shape[1:]),
                        lambda b, _n=n: (b,) + (0,) * (_n - 1))


# ----------------------------------------------------------------------------
# In-kernel helpers: depthwise-3x3 taps without a halo scratch.
# t[h, w] = a[h + dh, w + dw] with zeros outside the image (exact "pad=1").
# ----------------------------------------------------------------------------

def _shift_rows(a, dh):
    if dh == 0:
        return a
    z = jnp.zeros((1,) + a.shape[1:], a.dtype)
    if dh > 0:                       # t[h] = a[h+1], last row zero
        return jnp.concatenate([a[1:], z], axis=0)
    return jnp.concatenate([z, a[:-1]], axis=0)   # t[h] = a[h-1]


def _shift_cols(a, dw):
    if dw == 0:
        return a
    z = jnp.zeros((a.shape[0], 1, a.shape[2]), a.dtype)
    if dw > 0:                       # t[:, w] = a[:, w+1], last col zero
        return jnp.concatenate([a[:, 1:], z], axis=1)
    return jnp.concatenate([z, a[:, :-1]], axis=1)


# ----------------------------------------------------------------------------
# Fully fused kernel:
#   stem 3x3/s2 conv (single K=27 bf16 matmul) + BN + SiLU
#   -> MBConv (expand 1x1 -> depthwise 3x3 -> SE -> project 1x1 + residual)
#   -> head 1x1 conv + BN + SiLU + global average pool
#   -> classifier Linear -> BatchNorm1d(eval) -> ReLU -> Linear
# Packed-vector row layouts:
#   vec_c1: [s_stem, b_stem, s_proj, b_proj]          (4, C1)
#   vec_c4: [s_exp, b_exp, s_dw, b_dw, b_se2]         (5, C4)
#   vec_f : [s_head, b_head]                          (2, F)
#   vec_i : [b1, bn_scale, bn_shift]                  (3, I)
# ----------------------------------------------------------------------------

def _fused_kernel(im_ref, w_stem_ref, vec_c1_ref,
                  w_exp_ref, vec_c4_ref, w_dw_ref,
                  w_se1_ref, b_se1_ref, w_se2_ref,
                  w_proj_ref, w_head_ref, vec_f_ref,
                  w_cls1_ref, vec_i_ref, w_cls2_ref, b_cls2_ref,
                  o_ref, *, Ho, Wo):
    C1 = w_stem_ref.shape[-1]
    C4 = w_exp_ref.shape[-1]
    F = w_head_ref.shape[-1]
    NCp = w_cls2_ref.shape[-1]
    HW = Ho * Wo
    inv_hw = 1.0 / float(HW)

    vc1 = vec_c1_ref[...]
    vc4 = vec_c4_ref[...]

    # --- stem: single K=27 bf16 MXU matmul + folded BN + SiLU (f32 epilogue) ---
    im = im_ref[...].reshape(HW, -1)                       # (HW, 27) bf16
    x0 = jnp.dot(im, w_stem_ref[...], preferred_element_type=jnp.float32)
    x0 = x0 * vc1[0:1] + vc1[1:2]
    x0 = x0 * jax.nn.sigmoid(x0)                           # SiLU, f32 (HW, C1)

    # --- expand 1x1 conv + folded BN + SiLU ---
    e = jnp.dot(x0.astype(jnp.bfloat16), w_exp_ref[...],
                preferred_element_type=jnp.float32)
    e = e * vc4[0:1] + vc4[1:2]
    e = e * jax.nn.sigmoid(e)                              # (HW, C4)

    # --- depthwise 3x3 (stride 1, pad 1): scratch-free shifted taps ---
    e3 = e.reshape(Ho, Wo, C4)
    wdw = w_dw_ref[...]                                    # (9, C4)
    acc = jnp.zeros((Ho, Wo, C4), jnp.float32)
    for kh in range(3):
        rh = _shift_rows(e3, kh - 1)                       # leading-dim shift
        for kw in range(3):
            t = _shift_cols(rh, kw - 1)                    # sublane shift
            acc = acc + t * wdw[kh * 3 + kw][None, None, :]
    d = acc.reshape(HW, C4) * vc4[2:3] + vc4[3:4]
    d = d * jax.nn.sigmoid(d)                              # SiLU

    # --- squeeze-excite on the pooled vector; gate folded as per-channel scale ---
    pooled = jnp.sum(d, axis=0, keepdims=True) * inv_hw    # (1, C4)
    h1 = jnp.dot(pooled, w_se1_ref[...],
                 preferred_element_type=jnp.float32) + b_se1_ref[...]
    h1 = h1 * jax.nn.sigmoid(h1)                           # SiLU
    gate = jax.nn.sigmoid(jnp.dot(h1, w_se2_ref[...],
                                  preferred_element_type=jnp.float32) + vc4[4:5])
    d = d * gate

    # --- project 1x1 + folded BN + residual add (stride 1, Cin == Cout) ---
    p = jnp.dot(d.astype(jnp.bfloat16), w_proj_ref[...],
                preferred_element_type=jnp.float32)
    p = p * vc1[2:3] + vc1[3:4] + x0                       # (HW, C1)

    # --- head 1x1 conv + folded BN + SiLU + global average pool ---
    f = jnp.dot(p.astype(jnp.bfloat16), w_head_ref[...],
                preferred_element_type=jnp.float32)
    f = f * vec_f_ref[0:1] + vec_f_ref[1:2]
    f = f * jax.nn.sigmoid(f)                              # (HW, F)
    feats = jnp.sum(f, axis=0, keepdims=True) * inv_hw     # (1, F)

    # --- classifier: Dropout(id) -> Linear -> BN1d(eval) -> ReLU -> Dropout(id) -> Linear ---
    vi = vec_i_ref[...]
    h = jnp.dot(feats.astype(jnp.bfloat16), w_cls1_ref[...],
                preferred_element_type=jnp.float32) + vi[0:1]
    h = h * vi[1:2] + vi[2:3]                              # BatchNorm1d, running stats
    h = jnp.maximum(h, 0.0)                                # ReLU
    logits = jnp.dot(h.astype(jnp.bfloat16), w_cls2_ref[...],
                     preferred_element_type=jnp.float32) + b_cls2_ref[...]
    o_ref[...] = logits.reshape(1, 1, NCp).astype(o_ref.dtype)


def pallas_efficientnet(im2col, weights, Ho, Wo):
    B = im2col.shape[0]
    ncp = weights[-2].shape[-1]                            # w_cls2: (I, ncp)
    args = [im2col] + list(weights)
    in_specs = [_batch_spec(im2col.shape)] + [_const_spec(a.shape) for a in weights]
    out = pl.pallas_call(
        functools.partial(_fused_kernel, Ho=Ho, Wo=Wo),
        grid=(B,),
        out_shape=jax.ShapeDtypeStruct((B, 1, ncp), jnp.float32),
        in_specs=in_specs,
        out_specs=_batch_spec((B, 1, ncp)),
        compiler_params=_cp(("parallel",)),
    )(*args)
    return out.reshape(B, ncp)


# ----------------------------------------------------------------------------
# Plain-JAX glue: BN folding, parameter setup, forward
# ----------------------------------------------------------------------------

def fold_bn(bn, eps=1e-5):
    gamma, beta, mean, var = bn
    s = gamma / jnp.sqrt(var + eps)
    b = beta - mean * s
    return s.reshape(1, -1).astype(jnp.float32), b.reshape(1, -1).astype(jnp.float32)


def init_params(key, in_ch=3, stem_ch=128, expand=4, feat_dim=256,
                intermediate_dim=512, num_classes=48):
    """Lane-dense surrogate sizes: stem 128, expanded 512, head 256, inter 512."""
    ks = jax.random.split(key, 12)
    norm = lambda k, s: 0.05 * jax.random.normal(k, s, jnp.float32)
    bn_init = lambda c: (jnp.ones((c,), jnp.float32), jnp.zeros((c,), jnp.float32),
                         jnp.zeros((c,), jnp.float32), jnp.ones((c,), jnp.float32))

    def xavier(k, fan_in, fan_out):
        lim = (6.0 / (fan_in + fan_out)) ** 0.5
        return jax.random.uniform(k, (fan_in, fan_out), jnp.float32, -lim, lim)

    cexp = stem_ch * expand
    cse = max(8, stem_ch // 4)
    ncp = ((num_classes + 127) // 128) * 128     # lane-dense, zero-padded class dim

    w2 = jnp.zeros((intermediate_dim, ncp), jnp.float32)
    w2 = w2.at[:, :num_classes].set(xavier(ks[8], intermediate_dim, num_classes))

    return {
        # stem Conv2d(3, stem_ch, 3, stride=2, pad=1, bias=False) + BN + SiLU
        # weight layout: (tap = kh*3+kw, cin, cout)
        "stem": {"w": norm(ks[0], (9, in_ch, stem_ch)), "bn": bn_init(stem_ch)},
        # one MBConv block (expand=4, stride=1, SE ratio 0.25)
        "mbconv": {
            "w_exp": norm(ks[1], (stem_ch, cexp)).astype(jnp.bfloat16),
            "bn_exp": bn_init(cexp),
            "w_dw": norm(ks[2], (9, cexp)), "bn_dw": bn_init(cexp),
            "w_se1": norm(ks[3], (cexp, cse)),
            "b_se1": jnp.zeros((1, cse), jnp.float32),
            "w_se2": norm(ks[4], (cse, cexp)),
            "b_se2": jnp.zeros((1, cexp), jnp.float32),
            "w_proj": norm(ks[5], (cexp, stem_ch)).astype(jnp.bfloat16),
            "bn_proj": bn_init(stem_ch),
        },
        # head Conv2d(stem_ch, feat_dim, 1, bias=False) + BN + SiLU
        "head_conv": {"w": norm(ks[6], (stem_ch, feat_dim)).astype(jnp.bfloat16),
                      "bn": bn_init(feat_dim)},
        # custom classifier (xavier Linear weights, zero bias, BN ones/zeros as in
        # _initialize_weights); last dim zero-padded to `ncp` lanes.
        "classifier": {
            "w1": xavier(ks[7], feat_dim, intermediate_dim).astype(jnp.bfloat16),
            "b1": jnp.zeros((1, intermediate_dim), jnp.float32),
            "bn": bn_init(intermediate_dim),
            "w2": w2.astype(jnp.bfloat16),
            "b2": jnp.zeros((1, ncp), jnp.float32),
        },
    }


def efficientnet_large_scale_forward(params, x_nchw, *, num_classes):
    """Inference-mode forward. Input NCHW (PyTorch convention)."""
    x = jnp.transpose(x_nchw, (0, 2, 3, 1)).astype(jnp.float32)   # -> NHWC
    B, H, W, cin = x.shape
    assert H % 2 == 0 and W % 2 == 0, "surrogate stem assumes even spatial dims"
    Ho, Wo = H // 2, W // 2

    # --- lane-dense im2col for the stride-2 stem: tap (kh,kw) at output (oh,ow)
    #     is padded-x[2*oh+kh, 2*ow+kw]; 27 = 9 taps * 3 input channels.
    xp = jnp.pad(x, ((0, 0), (1, 1), (1, 1), (0, 0)))
    taps = [xp[:, kh:kh + 2 * Ho:2, kw:kw + 2 * Wo:2, :]
            for kh in range(3) for kw in range(3)]
    im2col = jnp.concatenate(taps, axis=-1).reshape(B, Ho * Wo, 9 * cin)
    im2col = im2col.astype(jnp.bfloat16)

    # --- fold every eval-mode BatchNorm and pack the small per-stage vectors.
    mb, hd, cl = params["mbconv"], params["head_conv"], params["classifier"]
    s_stem, b_stem = fold_bn(params["stem"]["bn"])
    s_exp, b_exp = fold_bn(mb["bn_exp"])
    s_dw, b_dw = fold_bn(mb["bn_dw"])
    s_proj, b_proj = fold_bn(mb["bn_proj"])
    s_head, b_head = fold_bn(hd["bn"])
    bn_s, bn_b = fold_bn(cl["bn"])

    w_stem = params["stem"]["w"].reshape(9 * cin, -1).astype(jnp.bfloat16)
    vec_c1 = jnp.concatenate([s_stem, b_stem, s_proj, b_proj], axis=0)       # (4, C1)
    vec_c4 = jnp.concatenate([s_exp, b_exp, s_dw, b_dw, mb["b_se2"]], axis=0)  # (5, C4)
    vec_f = jnp.concatenate([s_head, b_head], axis=0)                        # (2, F)
    vec_i = jnp.concatenate([cl["b1"], bn_s, bn_b], axis=0)                  # (3, I)

    weights = (w_stem, vec_c1,
               mb["w_exp"], vec_c4, mb["w_dw"],
               mb["w_se1"], mb["b_se1"], mb["w_se2"],
               mb["w_proj"], hd["w"], vec_f,
               cl["w1"], vec_i, cl["w2"], cl["b2"])

    logits = pallas_efficientnet(im2col, weights, Ho, Wo)    # (B, ncp)
    return logits[:, :num_classes]                           # drop padded classes


# ----------------------------------------------------------------------------

if __name__ == "__main__":
    key = jax.random.PRNGKey(0)
    pkey, xkey = jax.random.split(key)
    NUM_CLASSES = 48
    params = init_params(pkey, num_classes=NUM_CLASSES)
    x = jax.random.normal(xkey, (2, 3, 16, 16), jnp.float32)   # NCHW image batch

    fwd = jax.jit(functools.partial(efficientnet_large_scale_forward,
                                    num_classes=NUM_CLASSES))
    out = jax.block_until_ready(fwd(params, x))

    assert out.shape == (2, NUM_CLASSES), out.shape
    assert bool(jnp.all(jnp.isfinite(out)))
    print("KERNEL_OK")
</pallas_src>

<mosaic_0001>
module attributes {stable_mosaic.version = 11 : i64} {
  func.func @_fused_kernel(%arg0: i32, %arg1: memref<1x64x27xbf16, #tpu.memory_space<vmem>>, %arg2: memref<27x128xbf16, #tpu.memory_space<vmem>>, %arg3: memref<4x128xf32, #tpu.memory_space<vmem>>, %arg4: memref<128x512xbf16, #tpu.memory_space<vmem>>, %arg5: memref<5x512xf32, #tpu.memory_space<vmem>>, %arg6: memref<9x512xf32, #tpu.memory_space<vmem>>, %arg7: memref<512x32xf32, #tpu.memory_space<vmem>>, %arg8: memref<1x32xf32, #tpu.memory_space<vmem>>, %arg9: memref<32x512xf32, #tpu.memory_space<vmem>>, %arg10: memref<512x128xbf16, #tpu.memory_space<vmem>>, %arg11: memref<128x256xbf16, #tpu.memory_space<vmem>>, %arg12: memref<2x256xf32, #tpu.memory_space<vmem>>, %arg13: memref<256x512xbf16, #tpu.memory_space<vmem>>, %arg14: memref<3x512xf32, #tpu.memory_space<vmem>>, %arg15: memref<512x128xbf16, #tpu.memory_space<vmem>>, %arg16: memref<1x128xf32, #tpu.memory_space<vmem>>, %arg17: memref<1x1x128xf32, #tpu.memory_space<vmem>>) attributes {dimension_semantics = [#tpu.dimension_semantics<parallel>], iteration_bounds = array<i64: 2>, scalar_prefetch = 0 : i64, scratch_operands = 0 : i64, tpu.core_type = #tpu.core_type<tc>, window_params = [{transform_indices = @transform_0, window_bounds = array<i64: 1, 64, 27>}, {pipeline_mode = #tpu.pipeline_mode<synchronous>, transform_indices = @transform_1, window_bounds = array<i64: 27, 128>}, {pipeline_mode = #tpu.pipeline_mode<synchronous>, transform_indices = @transform_2, window_bounds = array<i64: 4, 128>}, {pipeline_mode = #tpu.pipeline_mode<synchronous>, transform_indices = @transform_3, window_bounds = array<i64: 128, 512>}, {pipeline_mode = #tpu.pipeline_mode<synchronous>, transform_indices = @transform_4, window_bounds = array<i64: 5, 512>}, {pipeline_mode = #tpu.pipeline_mode<synchronous>, transform_indices = @transform_5, window_bounds = array<i64: 9, 512>}, {pipeline_mode = #tpu.pipeline_mode<synchronous>, transform_indices = @transform_6, window_bounds = array<i64: 512, 32>}, {pipeline_mode = #tpu.pipeline_mode<synchronous>, transform_indices = @transform_7, window_bounds = array<i64: 1, 32>}, {pipeline_mode = #tpu.pipeline_mode<synchronous>, transform_indices = @transform_8, window_bounds = array<i64: 32, 512>}, {pipeline_mode = #tpu.pipeline_mode<synchronous>, transform_indices = @transform_9, window_bounds = array<i64: 512, 128>}, {pipeline_mode = #tpu.pipeline_mode<synchronous>, transform_indices = @transform_10, window_bounds = array<i64: 128, 256>}, {pipeline_mode = #tpu.pipeline_mode<synchronous>, transform_indices = @transform_11, window_bounds = array<i64: 2, 256>}, {pipeline_mode = #tpu.pipeline_mode<synchronous>, transform_indices = @transform_12, window_bounds = array<i64: 256, 512>}, {pipeline_mode = #tpu.pipeline_mode<synchronous>, transform_indices = @transform_13, window_bounds = array<i64: 3, 512>}, {pipeline_mode = #tpu.pipeline_mode<synchronous>, transform_indices = @transform_14, window_bounds = array<i64: 512, 128>}, {pipeline_mode = #tpu.pipeline_mode<synchronous>, transform_indices = @transform_15, window_bounds = array<i64: 1, 128>}, {transform_indices = @transform_16, window_bounds = array<i64: 1, 1, 128>}]} {
    %c0 = arith.constant 0 : index
    %c0_0 = arith.constant 0 : index
    %0 = vector.load %arg3[%c0, %c0_0] : memref<4x128xf32, #tpu.memory_space<vmem>>, vector<4x128xf32>
    %c0_1 = arith.constant 0 : index
    %c0_2 = arith.constant 0 : index
    %1 = vector.load %arg5[%c0_1, %c0_2] : memref<5x512xf32, #tpu.memory_space<vmem>>, vector<5x512xf32>
    %c0_3 = arith.constant 0 : index
    %c0_4 = arith.constant 0 : index
    %c0_5 = arith.constant 0 : index
    %2 = vector.load %arg1[%c0_3, %c0_4, %c0_5] : memref<1x64x27xbf16, #tpu.memory_space<vmem>>, vector<1x64x27xbf16>
    %3 = vector.shape_cast %2 : vector<1x64x27xbf16> to vector<64x27xbf16>
    %c0_6 = arith.constant 0 : index
    %c0_7 = arith.constant 0 : index
    %4 = vector.load %arg2[%c0_6, %c0_7] : memref<27x128xbf16, #tpu.memory_space<vmem>>, vector<27x128xbf16>
    %cst = arith.constant dense<0.000000e+00> : vector<64x128xf32>
    %5 = tpu.matmul %3, %4, %cst {dimension_numbers = #tpu.dot_dimension_numbers<[1], [0], [0], [1], [0, 0, 1, 1], [], []>} : vector<64x27xbf16>, vector<27x128xbf16>, vector<64x128xf32> -> vector<64x128xf32>
    %6 = vector.extract_strided_slice %0 {offsets = [0, 0], sizes = [1, 128], strides = [1, 1]} : vector<4x128xf32> to vector<1x128xf32>
    %7 = vector.broadcast %6 : vector<1x128xf32> to vector<64x128xf32>
    %8 = arith.mulf %5, %7 : vector<64x128xf32>
    %9 = vector.extract_strided_slice %0 {offsets = [1, 0], sizes = [1, 128], strides = [1, 1]} : vector<4x128xf32> to vector<1x128xf32>
    %10 = vector.broadcast %9 : vector<1x128xf32> to vector<64x128xf32>
    %11 = arith.addf %8, %10 : vector<64x128xf32>
    %12 = arith.negf %11 : vector<64x128xf32>
    %13 = math.exp %12 : vector<64x128xf32>
    %cst_8 = arith.constant 1.000000e+00 : f32
    %14 = vector.broadcast %cst_8 : f32 to vector<64x128xf32>
    %15 = arith.addf %14, %13 : vector<64x128xf32>
    %16 = arith.divf %14, %15 : vector<64x128xf32>
    %17 = arith.mulf %11, %16 : vector<64x128xf32>
    %18 = arith.truncf %17 : vector<64x128xf32> to vector<64x128xbf16>
    %c0_9 = arith.constant 0 : index
    %c0_10 = arith.constant 0 : index
    %19 = vector.load %arg4[%c0_9, %c0_10] : memref<128x512xbf16, #tpu.memory_space<vmem>>, vector<128x512xbf16>
    %cst_11 = arith.constant dense<0.000000e+00> : vector<64x512xf32>
    %20 = tpu.matmul %18, %19, %cst_11 {dimension_numbers = #tpu.dot_dimension_numbers<[1], [0], [0], [1], [0, 0, 1, 1], [], []>} : vector<64x128xbf16>, vector<128x512xbf16>, vector<64x512xf32> -> vector<64x512xf32>
    %21 = vector.extract_strided_slice %1 {offsets = [0, 0], sizes = [1, 512], strides = [1, 1]} : vector<5x512xf32> to vector<1x512xf32>
    %22 = vector.broadcast %21 : vector<1x512xf32> to vector<64x512xf32>
    %23 = arith.mulf %20, %22 : vector<64x512xf32>
    %24 = vector.extract_strided_slice %1 {offsets = [1, 0], sizes = [1, 512], strides = [1, 1]} : vector<5x512xf32> to vector<1x512xf32>
    %25 = vector.broadcast %24 : vector<1x512xf32> to vector<64x512xf32>
    %26 = arith.addf %23, %25 : vector<64x512xf32>
    %27 = arith.negf %26 : vector<64x512xf32>
    %28 = math.exp %27 : vector<64x512xf32>
    %cst_12 = arith.constant 1.000000e+00 : f32
    %29 = vector.broadcast %cst_12 : f32 to vector<64x512xf32>
    %30 = arith.addf %29, %28 : vector<64x512xf32>
    %31 = arith.divf %29, %30 : vector<64x512xf32>
    %32 = arith.mulf %26, %31 : vector<64x512xf32>
    %33 = vector.shape_cast %32 : vector<64x512xf32> to vector<8x8x512xf32>
    %c0_13 = arith.constant 0 : index
    %c0_14 = arith.constant 0 : index
    %34 = vector.load %arg6[%c0_13, %c0_14] : memref<9x512xf32, #tpu.memory_space<vmem>>, vector<9x512xf32>
    %cst_15 = arith.constant 0.000000e+00 : f32
    %35 = vector.broadcast %cst_15 : f32 to vector<8x8x512xf32>
    %cst_16 = arith.constant 0.000000e+00 : f32
    %36 = vector.broadcast %cst_16 : f32 to vector<1x8x512xf32>
    %37 = vector.extract_strided_slice %33 {offsets = [0, 0, 0], sizes = [7, 8, 512], strides = [1, 1, 1]} : vector<8x8x512xf32> to vector<7x8x512xf32>
    %38 = tpu.concatenate %36, %37 in 0 : vector<1x8x512xf32>, vector<7x8x512xf32> -> vector<8x8x512xf32>
    %cst_17 = arith.constant 0.000000e+00 : f32
    %39 = vector.broadcast %cst_17 : f32 to vector<8x1x512xf32>
    %40 = vector.extract_strided_slice %38 {offsets = [0, 0, 0], sizes = [8, 7, 512], strides = [1, 1, 1]} : vector<8x8x512xf32> to vector<8x7x512xf32>
    %41 = tpu.concatenate %39, %40 in 1 : vector<8x1x512xf32>, vector<8x7x512xf32> -> vector<8x8x512xf32>
    %42 = vector.extract_strided_slice %34 {offsets = [0, 0], sizes = [1, 512], strides = [1, 1]} : vector<9x512xf32> to vector<1x512xf32>
    %43 = vector.shape_cast %42 : vector<1x512xf32> to vector<512xf32>
    %44 = vector.shape_cast %43 : vector<512xf32> to vector<1x1x512xf32>
    %45 = vector.broadcast %44 : vector<1x1x512xf32> to vector<8x8x512xf32>
    %46 = arith.mulf %41, %45 : vector<8x8x512xf32>
    %47 = arith.addf %35, %46 : vector<8x8x512xf32>
    %48 = vector.extract_strided_slice %34 {offsets = [1, 0], sizes = [1, 512], strides = [1, 1]} : vector<9x512xf32> to vector<1x512xf32>
    %49 = vector.shape_cast %48 : vector<1x512xf32> to vector<512xf32>
    %50 = vector.shape_cast %49 : vector<512xf32> to vector<1x1x512xf32>
    %51 = vector.broadcast %50 : vector<1x1x512xf32> to vector<8x8x512xf32>
    %52 = arith.mulf %38, %51 : vector<8x8x512xf32>
    %53 = arith.addf %47, %52 : vector<8x8x512xf32>
    %cst_18 = arith.constant 0.000000e+00 : f32
    %54 = vector.broadcast %cst_18 : f32 to vector<8x1x512xf32>
    %55 = vector.extract_strided_slice %38 {offsets = [0, 1, 0], sizes = [8, 7, 512], strides = [1, 1, 1]} : vector<8x8x512xf32> to vector<8x7x512xf32>
    %56 = tpu.concatenate %55, %54 in 1 : vector<8x7x512xf32>, vector<8x1x512xf32> -> vector<8x8x512xf32>
    %57 = vector.extract_strided_slice %34 {offsets = [2, 0], sizes = [1, 512], strides = [1, 1]} : vector<9x512xf32> to vector<1x512xf32>
    %58 = vector.shape_cast %57 : vector<1x512xf32> to vector<512xf32>
    %59 = vector.shape_cast %58 : vector<512xf32> to vector<1x1x512xf32>
    %60 = vector.broadcast %59 : vector<1x1x512xf32> to vector<8x8x512xf32>
    %61 = arith.mulf %56, %60 : vector<8x8x512xf32>
    %62 = arith.addf %53, %61 : vector<8x8x512xf32>
    %cst_19 = arith.constant 0.000000e+00 : f32
    %63 = vector.broadcast %cst_19 : f32 to vector<8x1x512xf32>
    %64 = vector.extract_strided_slice %33 {offsets = [0, 0, 0], sizes = [8, 7, 512], strides = [1, 1, 1]} : vector<8x8x512xf32> to vector<8x7x512xf32>
    %65 = tpu.concatenate %63, %64 in 1 : vector<8x1x512xf32>, vector<8x7x512xf32> -> vector<8x8x512xf32>
    %66 = vector.extract_strided_slice %34 {offsets = [3, 0], sizes = [1, 512], strides = [1, 1]} : vector<9x512xf32> to vector<1x512xf32>
    %67 = vector.shape_cast %66 : vector<1x512xf32> to vector<512xf32>
    %68 = vector.shape_cast %67 : vector<512xf32> to vector<1x1x512xf32>
    %69 = vector.broadcast %68 : vector<1x1x512xf32> to vector<8x8x512xf32>
    %70 = arith.mulf %65, %69 : vector<8x8x512xf32>
    %71 = arith.addf %62, %70 : vector<8x8x512xf32>
    %72 = vector.extract_strided_slice %34 {offsets = [4, 0], sizes = [1, 512], strides = [1, 1]} : vector<9x512xf32> to vector<1x512xf32>
    %73 = vector.shape_cast %72 : vector<1x512xf32> to vector<512xf32>
    %74 = vector.shape_cast %73 : vector<512xf32> to vector<1x1x512xf32>
    %75 = vector.broadcast %74 : vector<1x1x512xf32> to vector<8x8x512xf32>
    %76 = arith.mulf %33, %75 : vector<8x8x512xf32>
    %77 = arith.addf %71, %76 : vector<8x8x512xf32>
    %cst_20 = arith.constant 0.000000e+00 : f32
    %78 = vector.broadcast %cst_20 : f32 to vector<8x1x512xf32>
    %79 = vector.extract_strided_slice %33 {offsets = [0, 1, 0], sizes = [8, 7, 512], strides = [1, 1, 1]} : vector<8x8x512xf32> to vector<8x7x512xf32>
    %80 = tpu.concatenate %79, %78 in 1 : vector<8x7x512xf32>, vector<8x1x512xf32> -> vector<8x8x512xf32>
    %81 = vector.extract_strided_slice %34 {offsets = [5, 0], sizes = [1, 512], strides = [1, 1]} : vector<9x512xf32> to vector<1x512xf32>
    %82 = vector.shape_cast %81 : vector<1x512xf32> to vector<512xf32>
    %83 = vector.shape_cast %82 : vector<512xf32> to vector<1x1x512xf32>
    %84 = vector.broadcast %83 : vector<1x1x512xf32> to vector<8x8x512xf32>
    %85 = arith.mulf %80, %84 : vector<8x8x512xf32>
    %86 = arith.addf %77, %85 : vector<8x8x512xf32>
    %cst_21 = arith.constant 0.000000e+00 : f32
    %87 = vector.broadcast %cst_21 : f32 to vector<1x8x512xf32>
    %88 = vector.extract_strided_slice %33 {offsets = [1, 0, 0], sizes = [7, 8, 512], strides = [1, 1, 1]} : vector<8x8x512xf32> to vector<7x8x512xf32>
    %89 = tpu.concatenate %88, %87 in 0 : vector<7x8x512xf32>, vector<1x8x512xf32> -> vector<8x8x512xf32>
    %cst_22 = arith.constant 0.000000e+00 : f32
    %90 = vector.broadcast %cst_22 : f32 to vector<8x1x512xf32>
    %91 = vector.extract_strided_slice %89 {offsets = [0, 0, 0], sizes = [8, 7, 512], strides = [1, 1, 1]} : vector<8x8x512xf32> to vector<8x7x512xf32>
    %92 = tpu.concatenate %90, %91 in 1 : vector<8x1x512xf32>, vector<8x7x512xf32> -> vector<8x8x512xf32>
    %93 = vector.extract_strided_slice %34 {offsets = [6, 0], sizes = [1, 512], strides = [1, 1]} : vector<9x512xf32> to vector<1x512xf32>
    %94 = vector.shape_cast %93 : vector<1x512xf32> to vector<512xf32>
    %95 = vector.shape_cast %94 : vector<512xf32> to vector<1x1x512xf32>
    %96 = vector.broadcast %95 : vector<1x1x512xf32> to vector<8x8x512xf32>
    %97 = arith.mulf %92, %96 : vector<8x8x512xf32>
    %98 = arith.addf %86, %97 : vector<8x8x512xf32>
    %99 = vector.extract_strided_slice %34 {offsets = [7, 0], sizes = [1, 512], strides = [1, 1]} : vector<9x512xf32> to vector<1x512xf32>
    %100 = vector.shape_cast %99 : vector<1x512xf32> to vector<512xf32>
    %101 = vector.shape_cast %100 : vector<512xf32> to vector<1x1x512xf32>
    %102 = vector.broadcast %101 : vector<1x1x512xf32> to vector<8x8x512xf32>
    %103 = arith.mulf %89, %102 : vector<8x8x512xf32>
    %104 = arith.addf %98, %103 : vector<8x8x512xf32>
    %cst_23 = arith.constant 0.000000e+00 : f32
    %105 = vector.broadcast %cst_23 : f32 to vector<8x1x512xf32>
    %106 = vector.extract_strided_slice %89 {offsets = [0, 1, 0], sizes = [8, 7, 512], strides = [1, 1, 1]} : vector<8x8x512xf32> to vector<8x7x512xf32>
    %107 = tpu.concatenate %106, %105 in 1 : vector<8x7x512xf32>, vector<8x1x512xf32> -> vector<8x8x512xf32>
    %108 = vector.extract_strided_slice %34 {offsets = [8, 0], sizes = [1, 512], strides = [1, 1]} : vector<9x512xf32> to vector<1x512xf32>
    %109 = vector.shape_cast %108 : vector<1x512xf32> to vector<512xf32>
    %110 = vector.shape_cast %109 : vector<512xf32> to vector<1x1x512xf32>
    %111 = vector.broadcast %110 : vector<1x1x512xf32> to vector<8x8x512xf32>
    %112 = arith.mulf %107, %111 : vector<8x8x512xf32>
    %113 = arith.addf %104, %112 : vector<8x8x512xf32>
    %114 = vector.shape_cast %113 : vector<8x8x512xf32> to vector<64x512xf32>
    %115 = vector.extract_strided_slice %1 {offsets = [2, 0], sizes = [1, 512], strides = [1, 1]} : vector<5x512xf32> to vector<1x512xf32>
    %116 = vector.broadcast %115 : vector<1x512xf32> to vector<64x512xf32>
    %117 = arith.mulf %114, %116 : vector<64x512xf32>
    %118 = vector.extract_strided_slice %1 {offsets = [3, 0], sizes = [1, 512], strides = [1, 1]} : vector<5x512xf32> to vector<1x512xf32>
    %119 = vector.broadcast %118 : vector<1x512xf32> to vector<64x512xf32>
    %120 = arith.addf %117, %119 : vector<64x512xf32>
    %121 = arith.negf %120 : vector<64x512xf32>
    %122 = math.exp %121 : vector<64x512xf32>
    %cst_24 = arith.constant 1.000000e+00 : f32
    %123 = vector.broadcast %cst_24 : f32 to vector<64x512xf32>
    %124 = arith.addf %123, %122 : vector<64x512xf32>
    %125 = arith.divf %123, %124 : vector<64x512xf32>
    %126 = arith.mulf %120, %125 : vector<64x512xf32>
    %cst_25 = arith.constant dense<0.000000e+00> : vector<512xf32>
    %127 = vector.multi_reduction <add>, %126, %cst_25 [0] : vector<64x512xf32> to vector<512xf32>
    %128 = vector.shape_cast %127 : vector<512xf32> to vector<1x512xf32>
    %cst_26 = arith.constant 1.562500e-02 : f32
    %129 = vector.broadcast %cst_26 : f32 to vector<1x512xf32>
    %130 = arith.mulf %128, %129 : vector<1x512xf32>
    %c0_27 = arith.constant 0 : index
    %c0_28 = arith.constant 0 : index
    %131 = vector.load %arg7[%c0_27, %c0_28] : memref<512x32xf32, #tpu.memory_space<vmem>>, vector<512x32xf32>
    %cst_29 = arith.constant dense<0.000000e+00> : vector<1x32xf32>
    %132 = tpu.matmul %130, %131, %cst_29 {dimension_numbers = #tpu.dot_dimension_numbers<[1], [0], [0], [1], [0, 0, 1, 1], [], []>} : vector<1x512xf32>, vector<512x32xf32>, vector<1x32xf32> -> vector<1x32xf32>
    %c0_30 = arith.constant 0 : index
    %c0_31 = arith.constant 0 : index
    %133 = vector.load %arg8[%c0_30, %c0_31] : memref<1x32xf32, #tpu.memory_space<vmem>>, vector<1x32xf32>
    %134 = arith.addf %132, %133 : vector<1x32xf32>
    %135 = arith.negf %134 : vector<1x32xf32>
    %136 = math.exp %135 : vector<1x32xf32>
    %cst_32 = arith.constant 1.000000e+00 : f32
    %137 = vector.broadcast %cst_32 : f32 to vector<1x32xf32>
    %138 = arith.addf %137, %136 : vector<1x32xf32>
    %139 = arith.divf %137, %138 : vector<1x32xf32>
    %140 = arith.mulf %134, %139 : vector<1x32xf32>
    %c0_33 = arith.constant 0 : index
    %c0_34 = arith.constant 0 : index
    %141 = vector.load %arg9[%c0_33, %c0_34] : memref<32x512xf32, #tpu.memory_space<vmem>>, vector<32x512xf32>
    %cst_35 = arith.constant dense<0.000000e+00> : vector<1x512xf32>
    %142 = tpu.matmul %140, %141, %cst_35 {dimension_numbers = #tpu.dot_dimension_numbers<[1], [0], [0], [1], [0, 0, 1, 1], [], []>} : vector<1x32xf32>, vector<32x512xf32>, vector<1x512xf32> -> vector<1x512xf32>
    %143 = vector.extract_strided_slice %1 {offsets = [4, 0], sizes = [1, 512], strides = [1, 1]} : vector<5x512xf32> to vector<1x512xf32>
    %144 = arith.addf %142, %143 : vector<1x512xf32>
    %145 = arith.negf %144 : vector<1x512xf32>
    %146 = math.exp %145 : vector<1x512xf32>
    %cst_36 = arith.constant 1.000000e+00 : f32
    %147 = vector.broadcast %cst_36 : f32 to vector<1x512xf32>
    %148 = arith.addf %147, %146 : vector<1x512xf32>
    %149 = arith.divf %147, %148 : vector<1x512xf32>
    %150 = vector.broadcast %149 : vector<1x512xf32> to vector<64x512xf32>
    %151 = arith.mulf %126, %150 : vector<64x512xf32>
    %152 = arith.truncf %151 : vector<64x512xf32> to vector<64x512xbf16>
    %c0_37 = arith.constant 0 : index
    %c0_38 = arith.constant 0 : index
    %153 = vector.load %arg10[%c0_37, %c0_38] : memref<512x128xbf16, #tpu.memory_space<vmem>>, vector<512x128xbf16>
    %cst_39 = arith.constant dense<0.000000e+00> : vector<64x128xf32>
    %154 = tpu.matmul %152, %153, %cst_39 {dimension_numbers = #tpu.dot_dimension_numbers<[1], [0], [0], [1], [0, 0, 1, 1], [], []>} : vector<64x512xbf16>, vector<512x128xbf16>, vector<64x128xf32> -> vector<64x128xf32>
    %155 = vector.extract_strided_slice %0 {offsets = [2, 0], sizes = [1, 128], strides = [1, 1]} : vector<4x128xf32> to vector<1x128xf32>
    %156 = vector.broadcast %155 : vector<1x128xf32> to vector<64x128xf32>
    %157 = arith.mulf %154, %156 : vector<64x128xf32>
    %158 = vector.extract_strided_slice %0 {offsets = [3, 0], sizes = [1, 128], strides = [1, 1]} : vector<4x128xf32> to vector<1x128xf32>
    %159 = vector.broadcast %158 : vector<1x128xf32> to vector<64x128xf32>
    %160 = arith.addf %157, %159 : vector<64x128xf32>
    %161 = arith.addf %160, %17 : vector<64x128xf32>
    %162 = arith.truncf %161 : vector<64x128xf32> to vector<64x128xbf16>
    %c0_40 = arith.constant 0 : index
    %c0_41 = arith.constant 0 : index
    %163 = vector.load %arg11[%c0_40, %c0_41] : memref<128x256xbf16, #tpu.memory_space<vmem>>, vector<128x256xbf16>
    %cst_42 = arith.constant dense<0.000000e+00> : vector<64x256xf32>
    %164 = tpu.matmul %162, %163, %cst_42 {dimension_numbers = #tpu.dot_dimension_numbers<[1], [0], [0], [1], [0, 0, 1, 1], [], []>} : vector<64x128xbf16>, vector<128x256xbf16>, vector<64x256xf32> -> vector<64x256xf32>
    %c0_43 = arith.constant 0 : index
    %c0_44 = arith.constant 0 : index
    %165 = vector.load %arg12[%c0_43, %c0_44] : memref<2x256xf32, #tpu.memory_space<vmem>>, vector<1x256xf32>
    %166 = vector.broadcast %165 : vector<1x256xf32> to vector<64x256xf32>
    %167 = arith.mulf %164, %166 : vector<64x256xf32>
    %c1 = arith.constant 1 : index
    %c0_45 = arith.constant 0 : index
    %168 = vector.load %arg12[%c1, %c0_45] : memref<2x256xf32, #tpu.memory_space<vmem>>, vector<1x256xf32>
    %169 = vector.broadcast %168 : vector<1x256xf32> to vector<64x256xf32>
    %170 = arith.addf %167, %169 : vector<64x256xf32>
    %171 = arith.negf %170 : vector<64x256xf32>
    %172 = math.exp %171 : vector<64x256xf32>
    %cst_46 = arith.constant 1.000000e+00 : f32
    %173 = vector.broadcast %cst_46 : f32 to vector<64x256xf32>
    %174 = arith.addf %173, %172 : vector<64x256xf32>
    %175 = arith.divf %173, %174 : vector<64x256xf32>
    %176 = arith.mulf %170, %175 : vector<64x256xf32>
    %cst_47 = arith.constant dense<0.000000e+00> : vector<256xf32>
    %177 = vector.multi_reduction <add>, %176, %cst_47 [0] : vector<64x256xf32> to vector<256xf32>
    %178 = vector.shape_cast %177 : vector<256xf32> to vector<1x256xf32>
    %cst_48 = arith.constant 1.562500e-02 : f32
    %179 = vector.broadcast %cst_48 : f32 to vector<1x256xf32>
    %180 = arith.mulf %178, %179 : vector<1x256xf32>
    %c0_49 = arith.constant 0 : index
    %c0_50 = arith.constant 0 : index
    %181 = vector.load %arg14[%c0_49, %c0_50] : memref<3x512xf32, #tpu.memory_space<vmem>>, vector<3x512xf32>
    %182 = arith.truncf %180 : vector<1x256xf32> to vector<1x256xbf16>
    %c0_51 = arith.constant 0 : index
    %c0_52 = arith.constant 0 : index
    %183 = vector.load %arg13[%c0_51, %c0_52] : memref<256x512xbf16, #tpu.memory_space<vmem>>, vector<256x512xbf16>
    %cst_53 = arith.constant dense<0.000000e+00> : vector<1x512xf32>
    %184 = tpu.matmul %182, %183, %cst_53 {dimension_numbers = #tpu.dot_dimension_numbers<[1], [0], [0], [1], [0, 0, 1, 1], [], []>} : vector<1x256xbf16>, vector<256x512xbf16>, vector<1x512xf32> -> vector<1x512xf32>
    %185 = vector.extract_strided_slice %181 {offsets = [0, 0], sizes = [1, 512], strides = [1, 1]} : vector<3x512xf32> to vector<1x512xf32>
    %186 = arith.addf %184, %185 : vector<1x512xf32>
    %187 = vector.extract_strided_slice %181 {offsets = [1, 0], sizes = [1, 512], strides = [1, 1]} : vector<3x512xf32> to vector<1x512xf32>
    %188 = arith.mulf %186, %187 : vector<1x512xf32>
    %189 = vector.extract_strided_slice %181 {offsets = [2, 0], sizes = [1, 512], strides = [1, 1]} : vector<3x512xf32> to vector<1x512xf32>
    %190 = arith.addf %188, %189 : vector<1x512xf32>
    %cst_54 = arith.constant 0.000000e+00 : f32
    %191 = vector.broadcast %cst_54 : f32 to vector<1x512xf32>
    %192 = arith.maximumf %190, %191 : vector<1x512xf32>
    %193 = arith.truncf %192 : vector<1x512xf32> to vector<1x512xbf16>
    %c0_55 = arith.constant 0 : index
    %c0_56 = arith.constant 0 : index
    %194 = vector.load %arg15[%c0_55, %c0_56] : memref<512x128xbf16, #tpu.memory_space<vmem>>, vector<512x128xbf16>
    %cst_57 = arith.constant dense<0.000000e+00> : vector<1x128xf32>
    %195 = tpu.matmul %193, %194, %cst_57 {dimension_numbers = #tpu.dot_dimension_numbers<[1], [0], [0], [1], [0, 0, 1, 1], [], []>} : vector<1x512xbf16>, vector<512x128xbf16>, vector<1x128xf32> -> vector<1x128xf32>
    %c0_58 = arith.constant 0 : index
    %c0_59 = arith.constant 0 : index
    %196 = vector.load %arg16[%c0_58, %c0_59] : memref<1x128xf32, #tpu.memory_space<vmem>>, vector<1x128xf32>
    %197 = arith.addf %195, %196 : vector<1x128xf32>
    %198 = vector.shape_cast %197 : vector<1x128xf32> to vector<1x1x128xf32>
    %c0_60 = arith.constant 0 : index
    %c0_61 = arith.constant 0 : index
    %c0_62 = arith.constant 0 : index
    %199 = vector.load %arg17[%c0_60, %c0_61, %c0_62] : memref<1x1x128xf32, #tpu.memory_space<vmem>>, vector<1x1x128xf32>
    tpu.vector_store %arg17[%c0_60, %c0_61, %c0_62], %198 {strides = array<i32>} : memref<1x1x128xf32, #tpu.memory_space<vmem>>, vector<1x1x128xf32>,
    return
  }
  func.func @transform_0(%arg0: i32) -> (i32, i32, i32) {
    %c0_i32 = arith.constant 0 : i32
    %c0_i32_0 = arith.constant 0 : i32
    %c0_i32_1 = arith.constant 0 : i32
    return %arg0, %c0_i32, %c0_i32_0 : i32, i32, i32
  }
  func.func @transform_1(%arg0: i32) -> (i32, i32) {
    %c0_i32 = arith.constant 0 : i32
    %c0_i32_0 = arith.constant 0 : i32
    %c0_i32_1 = arith.constant 0 : i32
    return %c0_i32, %c0_i32_0 : i32, i32
  }
  func.func @transform_2(%arg0: i32) -> (i32, i32) {
    %c0_i32 = arith.constant 0 : i32
    %c0_i32_0 = arith.constant 0 : i32
    %c0_i32_1 = arith.constant 0 : i32
    return %c0_i32, %c0_i32_0 : i32, i32
  }
  func.func @transform_3(%arg0: i32) -> (i32, i32) {
    %c0_i32 = arith.constant 0 : i32
    %c0_i32_0 = arith.constant 0 : i32
    %c0_i32_1 = arith.constant 0 : i32
    return %c0_i32, %c0_i32_0 : i32, i32
  }
  func.func @transform_4(%arg0: i32) -> (i32, i32) {
    %c0_i32 = arith.constant 0 : i32
    %c0_i32_0 = arith.constant 0 : i32
    %c0_i32_1 = arith.constant 0 : i32
    return %c0_i32, %c0_i32_0 : i32, i32
  }
  func.func @transform_5(%arg0: i32) -> (i32, i32) {
    %c0_i32 = arith.constant 0 : i32
    %c0_i32_0 = arith.constant 0 : i32
    %c0_i32_1 = arith.constant 0 : i32
    return %c0_i32, %c0_i32_0 : i32, i32
  }
  func.func @transform_6(%arg0: i32) -> (i32, i32) {
    %c0_i32 = arith.constant 0 : i32
    %c0_i32_0 = arith.constant 0 : i32
    %c0_i32_1 = arith.constant 0 : i32
    return %c0_i32, %c0_i32_0 : i32, i32
  }
  func.func @transform_7(%arg0: i32) -> (i32, i32) {
    %c0_i32 = arith.constant 0 : i32
    %c0_i32_0 = arith.constant 0 : i32
    %c0_i32_1 = arith.constant 0 : i32
    return %c0_i32, %c0_i32_0 : i32, i32
  }
  func.func @transform_8(%arg0: i32) -> (i32, i32) {
    %c0_i32 = arith.constant 0 : i32
    %c0_i32_0 = arith.constant 0 : i32
    %c0_i32_1 = arith.constant 0 : i32
    return %c0_i32, %c0_i32_0 : i32, i32
  }
  func.func @transform_9(%arg0: i32) -> (i32, i32) {
    %c0_i32 = arith.constant 0 : i32
    %c0_i32_0 = arith.constant 0 : i32
    %c0_i32_1 = arith.constant 0 : i32
    return %c0_i32, %c0_i32_0 : i32, i32
  }
  func.func @transform_10(%arg0: i32) -> (i32, i32) {
    %c0_i32 = arith.constant 0 : i32
    %c0_i32_0 = arith.constant 0 : i32
    %c0_i32_1 = arith.constant 0 : i32
    return %c0_i32, %c0_i32_0 : i32, i32
  }
  func.func @transform_11(%arg0: i32) -> (i32, i32) {
    %c0_i32 = arith.constant 0 : i32
    %c0_i32_0 = arith.constant 0 : i32
    %c0_i32_1 = arith.constant 0 : i32
    return %c0_i32, %c0_i32_0 : i32, i32
  }
  func.func @transform_12(%arg0: i32) -> (i32, i32) {
    %c0_i32 = arith.constant 0 : i32
    %c0_i32_0 = arith.constant 0 : i32
    %c0_i32_1 = arith.constant 0 : i32
    return %c0_i32, %c0_i32_0 : i32, i32
  }
  func.func @transform_13(%arg0: i32) -> (i32, i32) {
    %c0_i32 = arith.constant 0 : i32
    %c0_i32_0 = arith.constant 0 : i32
    %c0_i32_1 = arith.constant 0 : i32
    return %c0_i32, %c0_i32_0 : i32, i32
  }
  func.func @transform_14(%arg0: i32) -> (i32, i32) {
    %c0_i32 = arith.constant 0 : i32
    %c0_i32_0 = arith.constant 0 : i32
    %c0_i32_1 = arith.constant 0 : i32
    return %c0_i32, %c0_i32_0 : i32, i32
  }
  func.func @transform_15(%arg0: i32) -> (i32, i32) {
    %c0_i32 = arith.constant 0 : i32
    %c0_i32_0 = arith.constant 0 : i32
    %c0_i32_1 = arith.constant 0 : i32
    return %c0_i32, %c0_i32_0 : i32, i32
  }
  func.func @transform_16(%arg0: i32) -> (i32, i32, i32) {
    %c0_i32 = arith.constant 0 : i32
    %c0_i32_0 = arith.constant 0 : i32
    %c0_i32_1 = arith.constant 0 : i32
    return %arg0, %c0_i32, %c0_i32_0 : i32, i32, i32
  }
}

</mosaic_0001>

<llo_original>
// kernel: efficientnet_large_scale_forward.1
$region0: #{efficientnet_large_scale_forward.1}
  #allocation0 [shape = 'u32[]', space=smem, size = 0x4, offset = 0x4, fixed_abs, tag = 'smem constant byte address 0x4 - core index']
  #allocation1 [shape = 'u32[144,128]{1,0:T(1,128)}', space=vmem, size = 0x12000, scoped, tag = 'internal scratch']
  %s0 = inlined_call_operand.vmem [shape: bf16[2,64,27], index: 0, kind: input, shape index: {}]
  %s1 = inlined_call_operand.vmem [shape: bf16[27,128], index: 1, kind: input, shape index: {}]
  %s2 = inlined_call_operand.vmem [shape: f32[4,128], index: 2, kind: input, shape index: {}]
  %s3 = inlined_call_operand.vmem [shape: bf16[128,512], index: 3, kind: input, shape index: {}]
  %s4 = inlined_call_operand.vmem [shape: f32[5,512], index: 4, kind: input, shape index: {}]
  %s5 = inlined_call_operand.vmem [shape: f32[9,512], index: 5, kind: input, shape index: {}]
  %s6 = inlined_call_operand.vmem [shape: f32[512,32], index: 6, kind: input, shape index: {}]
  %s7 = inlined_call_operand.vmem [shape: f32[1,32], index: 7, kind: input, shape index: {}]
  %s8 = inlined_call_operand.vmem [shape: f32[32,512], index: 8, kind: input, shape index: {}]
  %s9 = inlined_call_operand.vmem [shape: bf16[512,128], index: 9, kind: input, shape index: {}]
  %s10 = inlined_call_operand.vmem [shape: bf16[128,256], index: 10, kind: input, shape index: {}]
  %s11 = inlined_call_operand.vmem [shape: f32[2,256], index: 11, kind: input, shape index: {}]
  %s12 = inlined_call_operand.vmem [shape: bf16[256,512], index: 12, kind: input, shape index: {}]
  %s13 = inlined_call_operand.vmem [shape: f32[3,512], index: 13, kind: input, shape index: {}]
  %s14 = inlined_call_operand.vmem [shape: bf16[512,128], index: 14, kind: input, shape index: {}]
  %s15 = inlined_call_operand.vmem [shape: f32[1,128], index: 15, kind: input, shape index: {}]
  %s16 = inlined_call_operand.hbm [shape: f32[2,1,128], index: 16, kind: output, shape index: {}]
  %s17 = sld [smem:[#allocation0]]
  $region97: #{efficientnet_large_scale_forward.1} parent=0
    _
  %s19 = ssub.s32 1, %s17
  %s20 = scalar_select 0, %s19, %s17
  $region1: #{efficientnet_large_scale_forward.1} parent=0
    #allocation2 [shape = 'u8[1024]{0}', space=vmem, size = 0x400, scoped, tag = 'output window, operand 0']
    #allocation3 [shape = 's32[2]{0}', space=sflag, size = 0x8, scoped, tag = 'scoped memory for efficientnet_large_scale_forward.1']
    %21 = vsyncpa [#allocation3], 0
    %s22 = scalar_lea.sflag [#allocation3], 1
    %23 = vsyncpa %s22, 0
    loop: start=0, step=1, limit=4
    $region2: #{efficientnet_large_scale_forward.1} parent=1 // loop_pre_header
      _
    $region3: #{efficientnet_large_scale_forward.1} parent=1 // loop_header
      %s25 = sphi 0, %s29
      %p26 = scmp.ge.s32.totalorder %s25, 4
      %s35 = sphi 0, %s37
      %s38 = sphi 0, %s35
      %s39 = sphi 0, %s38
      %s55 = sphi 0, %s39
      %s59 = sphi 0, %s59
      %s61 = sphi 0, %s59
      %s62 = sphi 0, %s61
      %s76 = sphi 0, %s62
      %s80 = sphi 0, %s80
      %s82 = sphi 0, %s80
      %s83 = sphi 0, %s82
      %s97 = sphi 0, %s83
      %s101 = sphi 0, %s101
      %s103 = sphi 0, %s101
      %s104 = sphi 0, %s103
      %s118 = sphi 0, %s104
      %s122 = sphi 0, %s122
      %s124 = sphi 0, %s122
      %s125 = sphi 0, %s124
      %s139 = sphi 0, %s125
      %s143 = sphi 0, %s143
      %s145 = sphi 0, %s143
      %s146 = sphi 0, %s145
      %s160 = sphi 0, %s146
      %s164 = sphi 0, %s164
      %s166 = sphi 0, %s164
      %s167 = sphi 0, %s166
      %s181 = sphi 0, %s167
      %s185 = sphi 0, %s185
      %s187 = sphi 0, %s185
      %s188 = sphi 0, %s187
      %s202 = sphi 0, %s188
      %s206 = sphi 0, %s206
      %s208 = sphi 0, %s206
      %s209 = sphi 0, %s208
      %s223 = sphi 0, %s209
      %s227 = sphi 0, %s227
      %s229 = sphi 0, %s227
      %s230 = sphi 0, %s229
      %s244 = sphi 0, %s230
      %s248 = sphi 0, %s248
      %s250 = sphi 0, %s248
      %s251 = sphi 0, %s250
      %s265 = sphi 0, %s251
      %s269 = sphi 0, %s269
      %s271 = sphi 0, %s269
      %s272 = sphi 0, %s271
      %s286 = sphi 0, %s272
      %s290 = sphi 0, %s290
      %s292 = sphi 0, %s290
      %s293 = sphi 0, %s292
      %s307 = sphi 0, %s293
      %s311 = sphi 0, %s311
      %s313 = sphi 0, %s311
      %s314 = sphi 0, %s313
      %s328 = sphi 0, %s314
      %s332 = sphi 0, %s332
      %s334 = sphi 0, %s332
      %s335 = sphi 0, %s334
      %s349 = sphi 0, %s335
      %s353 = sphi 0, %s353
      %s355 = sphi 0, %s353
      %s356 = sphi 0, %s355
      %s370 = sphi 0, %s356
      %s376 = sphi 0, %s378
      %s379 = sphi 0, %s376
      %s380 = sphi 0, %s379
      %s396 = sphi 0, %s380
    $region4: #{efficientnet_large_scale_forward.1} parent=1 // loop_header_branch
      %28 = sbr.rel (%p26) target = $region8
    $region5: #{efficientnet_large_scale_forward.1} parent=1 // loop_body
      %s30 = ssub.s32 %s25, 1
      %s31 = ssub.s32 %s25, 2
      %s32 = sadd.s32 %s25, 1
      %s33 = ssub.s32 %s25, %s32
      %p34 = scmp.eq.s32.totalorder %s33, 0
      %s36 = sadd.s32 %s35, 1
      %s37 = scalar_select %p34, %s35, %s36
      %p40 = pneg %p34
      %p41 = scmp.eq.s32.totalorder %s25, 1
      %p42 = por %p40, %p41
      %p43 = scmp.ne.s32.totalorder %s35, %s38
      %p44 = scmp.eq.s32.totalorder %s25, 0
      %p45 = por %p43, %p44
      %p46 = scmp.ne.s32.totalorder %s35, %s38
      %p47 = scmp.eq.s32.totalorder %s30, 1
      %p48 = por %p46, %p47
      %p49 = scmp.ne.s32.totalorder %s38, %s39
      %p50 = scmp.eq.s32.totalorder %s30, 0
      %p51 = por %p49, %p50
      %p52 = scmp.ne.s32.totalorder %s38, %s39
      %p53 = scmp.eq.s32.totalorder %s31, 1
      %p54 = por %p52, %p53
      %p56 = scmp.ne.s32.totalorder %s39, %s55
      %p57 = scmp.eq.s32.totalorder %s31, 0
      %p58 = por %p56, %p57
      %s60 = sadd.s32 %s59, 1
      %p63 = scmp.eq.s32.totalorder %s25, 1
      %p64 = scmp.ne.s32.totalorder %s59, %s61
      %p65 = scmp.eq.s32.totalorder %s25, 0
      %p66 = por %p64, %p65
      %p67 = scmp.ne.s32.totalorder %s59, %s61
      %p68 = scmp.eq.s32.totalorder %s30, 1
      %p69 = por %p67, %p68
      %p70 = scmp.ne.s32.totalorder %s61, %s62
      %p71 = scmp.eq.s32.totalorder %s30, 0
      %p72 = por %p70, %p71
      %p73 = scmp.ne.s32.totalorder %s61, %s62
      %p74 = scmp.eq.s32.totalorder %s31, 1
      %p75 = por %p73, %p74
      %p77 = scmp.ne.s32.totalorder %s62, %s76
      %p78 = scmp.eq.s32.totalorder %s31, 0
      %p79 = por %p77, %p78
      %s81 = sadd.s32 %s80, 1
      %p84 = scmp.eq.s32.totalorder %s25, 1
      %p85 = scmp.ne.s32.totalorder %s80, %s82
      %p86 = scmp.eq.s32.totalorder %s25, 0
      %p87 = por %p85, %p86
      %p88 = scmp.ne.s32.totalorder %s80, %s82
      %p89 = scmp.eq.s32.totalorder %s30, 1
      %p90 = por %p88, %p89
      %p91 = scmp.ne.s32.totalorder %s82, %s83
      %p92 = scmp.eq.s32.totalorder %s30, 0
      %p93 = por %p91, %p92
      %p94 = scmp.ne.s32.totalorder %s82, %s83
      %p95 = scmp.eq.s32.totalorder %s31, 1
      %p96 = por %p94, %p95
      %p98 = scmp.ne.s32.totalorder %s83, %s97
      %p99 = scmp.eq.s32.totalorder %s31, 0
      %p100 = por %p98, %p99
      %s102 = sadd.s32 %s101, 1
      %p105 = scmp.eq.s32.totalorder %s25, 1
      %p106 = scmp.ne.s32.totalorder %s101, %s103
      %p107 = scmp.eq.s32.totalorder %s25, 0
      %p108 = por %p106, %p107
      %p109 = scmp.ne.s32.totalorder %s101, %s103
      %p110 = scmp.eq.s32.totalorder %s30, 1
      %p111 = por %p109, %p110
      %p112 = scmp.ne.s32.totalorder %s103, %s104
      %p113 = scmp.eq.s32.totalorder %s30, 0
      %p114 = por %p112, %p113
      %p115 = scmp.ne.s32.totalorder %s103, %s104
      %p116 = scmp.eq.s32.totalorder %s31, 1
      %p117 = por %p115, %p116
      %p119 = scmp.ne.s32.totalorder %s104, %s118
      %p120 = scmp.eq.s32.totalorder %s31, 0
      %p121 = por %p119, %p120
      %s123 = sadd.s32 %s122, 1
      %p126 = scmp.eq.s32.totalorder %s25, 1
      %p127 = scmp.ne.s32.totalorder %s122, %s124
      %p128 = scmp.eq.s32.totalorder %s25, 0
      %p129 = por %p127, %p128
      %p130 = scmp.ne.s32.totalorder %s122, %s124
      %p131 = scmp.eq.s32.totalorder %s30, 1
      %p132 = por %p130, %p131
      %p133 = scmp.ne.s32.totalorder %s124, %s125
      %p134 = scmp.eq.s32.totalorder %s30, 0
      %p135 = por %p133, %p134
      %p136 = scmp.ne.s32.totalorder %s124, %s125
      %p137 = scmp.eq.s32.totalorder %s31, 1
      %p138 = por %p136, %p137
      %p140 = scmp.ne.s32.totalorder %s125, %s139
      %p141 = scmp.eq.s32.totalorder %s31, 0
      %p142 = por %p140, %p141
      %s144 = sadd.s32 %s143, 1
      %p147 = scmp.eq.s32.totalorder %s25, 1
      %p148 = scmp.ne.s32.totalorder %s143, %s145
      %p149 = scmp.eq.s32.totalorder %s25, 0
      %p150 = por %p148, %p149
      %p151 = scmp.ne.s32.totalorder %s143, %s145
      %p152 = scmp.eq.s32.totalorder %s30, 1
      %p153 = por %p151, %p152
      %p154 = scmp.ne.s32.totalorder %s145, %s146
      %p155 = scmp.eq.s32.totalorder %s30, 0
      %p156 = por %p154, %p155
      %p157 = scmp.ne.s32.totalorder %s145, %s146
      %p158 = scmp.eq.s32.totalorder %s31, 1
      %p159 = por %p157, %p158
      %p161 = scmp.ne.s32.totalorder %s146, %s160
      %p162 = scmp.eq.s32.totalorder %s31, 0
      %p163 = por %p161, %p162
      %s165 = sadd.s32 %s164, 1
      %p168 = scmp.eq.s32.totalorder %s25, 1
      %p169 = scmp.ne.s32.totalorder %s164, %s166
      %p170 = scmp.eq.s32.totalorder %s25, 0
      %p171 = por %p169, %p170
      %p172 = scmp.ne.s32.totalorder %s164, %s166
      %p173 = scmp.eq.s32.totalorder %s30, 1
      %p174 = por %p172, %p173
      %p175 = scmp.ne.s32.totalorder %s166, %s167
      %p176 = scmp.eq.s32.totalorder %s30, 0
      %p177 = por %p175, %p176
      %p178 = scmp.ne.s32.totalorder %s166, %s167
      %p179 = scmp.eq.s32.totalorder %s31, 1
      %p180 = por %p178, %p179
      %p182 = scmp.ne.s32.totalorder %s167, %s181
      %p183 = scmp.eq.s32.totalorder %s31, 0
      %p184 = por %p182, %p183
      %s186 = sadd.s32 %s185, 1
      %p189 = scmp.eq.s32.totalorder %s25, 1
      %p190 = scmp.ne.s32.totalorder %s185, %s187
      %p191 = scmp.eq.s32.totalorder %s25, 0
      %p192 = por %p190, %p191
      %p193 = scmp.ne.s32.totalorder %s185, %s187
      %p194 = scmp.eq.s32.totalorder %s30, 1
      %p195 = por %p193, %p194
      %p196 = scmp.ne.s32.totalorder %s187, %s188
      %p197 = scmp.eq.s32.totalorder %s30, 0
      %p198 = por %p196, %p197
      %p199 = scmp.ne.s32.totalorder %s187, %s188
      %p200 = scmp.eq.s32.totalorder %s31, 1
      %p201 = por %p199, %p200
      %p203 = scmp.ne.s32.totalorder %s188, %s202
      %p204 = scmp.eq.s32.totalorder %s31, 0
      %p205 = por %p203, %p204
      %s207 = sadd.s32 %s206, 1
      %p210 = scmp.eq.s32.totalorder %s25, 1
      %p211 = scmp.ne.s32.totalorder %s206, %s208
      %p212 = scmp.eq.s32.totalorder %s25, 0
      %p213 = por %p211, %p212
      %p214 = scmp.ne.s32.totalorder %s206, %s208
      %p215 = scmp.eq.s32.totalorder %s30, 1
      %p216 = por %p214, %p215
      %p217 = scmp.ne.s32.totalorder %s208, %s209
      %p218 = scmp.eq.s32.totalorder %s30, 0
      %p219 = por %p217, %p218
      %p220 = scmp.ne.s32.totalorder %s208, %s209
      %p221 = scmp.eq.s32.totalorder %s31, 1
      %p222 = por %p220, %p221
      %p224 = scmp.ne.s32.totalorder %s209, %s223
      %p225 = scmp.eq.s32.totalorder %s31, 0
      %p226 = por %p224, %p225
      %s228 = sadd.s32 %s227, 1
      %p231 = scmp.eq.s32.totalorder %s25, 1
      %p232 = scmp.ne.s32.totalorder %s227, %s229
      %p233 = scmp.eq.s32.totalorder %s25, 0
      %p234 = por %p232, %p233
      %p235 = scmp.ne.s32.totalorder %s227, %s229
      %p236 = scmp.eq.s32.totalorder %s30, 1
      %p237 = por %p235, %p236
      %p238 = scmp.ne.s32.totalorder %s229, %s230
      %p239 = scmp.eq.s32.totalorder %s30, 0
      %p240 = por %p238, %p239
      %p241 = scmp.ne.s32.totalorder %s229, %s230
      %p242 = scmp.eq.s32.totalorder %s31, 1
      %p243 = por %p241, %p242
      %p245 = scmp.ne.s32.totalorder %s230, %s244
      %p246 = scmp.eq.s32.totalorder %s31, 0
      %p247 = por %p245, %p246
      %s249 = sadd.s32 %s248, 1
      %p252 = scmp.eq.s32.totalorder %s25, 1
      %p253 = scmp.ne.s32.totalorder %s248, %s250
      %p254 = scmp.eq.s32.totalorder %s25, 0
      %p255 = por %p253, %p254
      %p256 = scmp.ne.s32.totalorder %s248, %s250
      %p257 = scmp.eq.s32.totalorder %s30, 1
      %p258 = por %p256, %p257
      %p259 = scmp.ne.s32.totalorder %s250, %s251
      %p260 = scmp.eq.s32.totalorder %s30, 0
      %p261 = por %p259, %p260
      %p262 = scmp.ne.s32.totalorder %s250, %s251
      %p263 = scmp.eq.s32.totalorder %s31, 1
      %p264 = por %p262, %p263
      %p266 = scmp.ne.s32.totalorder %s251, %s265
      %p267 = scmp.eq.s32.totalorder %s31, 0
      %p268 = por %p266, %p267
      %s270 = sadd.s32 %s269, 1
      %p273 = scmp.eq.s32.totalorder %s25, 1
      %p274 = scmp.ne.s32.totalorder %s269, %s271
      %p275 = scmp.eq.s32.totalorder %s25, 0
      %p276 = por %p274, %p275
      %p277 = scmp.ne.s32.totalorder %s269, %s271
      %p278 = scmp.eq.s32.totalorder %s30, 1
      %p279 = por %p277, %p278
      %p280 = scmp.ne.s32.totalorder %s271, %s272
      %p281 = scmp.eq.s32.totalorder %s30, 0
      %p282 = por %p280, %p281
      %p283 = scmp.ne.s32.totalorder %s271, %s272
      %p284 = scmp.eq.s32.totalorder %s31, 1
      %p285 = por %p283, %p284
      %p287 = scmp.ne.s32.totalorder %s272, %s286
      %p288 = scmp.eq.s32.totalorder %s31, 0
      %p289 = por %p287, %p288
      %s291 = sadd.s32 %s290, 1
      %p294 = scmp.eq.s32.totalorder %s25, 1
      %p295 = scmp.ne.s32.totalorder %s290, %s292
      %p296 = scmp.eq.s32.totalorder %s25, 0
      %p297 = por %p295, %p296
      %p298 = scmp.ne.s32.totalorder %s290, %s292
      %p299 = scmp.eq.s32.totalorder %s30, 1
      %p300 = por %p298, %p299
      %p301 = scmp.ne.s32.totalorder %s292, %s293
      %p302 = scmp.eq.s32.totalorder %s30, 0
      %p303 = por %p301, %p302
      %p304 = scmp.ne.s32.totalorder %s292, %s293
      %p305 = scmp.eq.s32.totalorder %s31, 1
      %p306 = por %p304, %p305
      %p308 = scmp.ne.s32.totalorder %s293, %s307
      %p309 = scmp.eq.s32.totalorder %s31, 0
      %p310 = por %p308, %p309
      %s312 = sadd.s32 %s311, 1
      %p315 = scmp.eq.s32.totalorder %s25, 1
      %p316 = scmp.ne.s32.totalorder %s311, %s313
      %p317 = scmp.eq.s32.totalorder %s25, 0
      %p318 = por %p316, %p317
      %p319 = scmp.ne.s32.totalorder %s311, %s313
      %p320 = scmp.eq.s32.totalorder %s30, 1
      %p321 = por %p319, %p320
      %p322 = scmp.ne.s32.totalorder %s313, %s314
      %p323 = scmp.eq.s32.totalorder %s30, 0
      %p324 = por %p322, %p323
      %p325 = scmp.ne.s32.totalorder %s313, %s314
      %p326 = scmp.eq.s32.totalorder %s31, 1
      %p327 = por %p325, %p326
      %p329 = scmp.ne.s32.totalorder %s314, %s328
      %p330 = scmp.eq.s32.totalorder %s31, 0
      %p331 = por %p329, %p330
      %s333 = sadd.s32 %s332, 1
      %p336 = scmp.eq.s32.totalorder %s25, 1
      %p337 = scmp.ne.s32.totalorder %s332, %s334
      %p338 = scmp.eq.s32.totalorder %s25, 0
      %p339 = por %p337, %p338
      %p340 = scmp.ne.s32.totalorder %s332, %s334
      %p341 = scmp.eq.s32.totalorder %s30, 1
      %p342 = por %p340, %p341
      %p343 = scmp.ne.s32.totalorder %s334, %s335
      %p344 = scmp.eq.s32.totalorder %s30, 0
      %p345 = por %p343, %p344
      %p346 = scmp.ne.s32.totalorder %s334, %s335
      %p347 = scmp.eq.s32.totalorder %s31, 1
      %p348 = por %p346, %p347
      %p350 = scmp.ne.s32.totalorder %s335, %s349
      %p351 = scmp.eq.s32.totalorder %s31, 0
      %p352 = por %p350, %p351
      %s354 = sadd.s32 %s353, 1
      %p357 = scmp.eq.s32.totalorder %s25, 1
      %p358 = scmp.ne.s32.totalorder %s353, %s355
      %p359 = scmp.eq.s32.totalorder %s25, 0
      %p360 = por %p358, %p359
      %p361 = scmp.ne.s32.totalorder %s353, %s355
      %p362 = scmp.eq.s32.totalorder %s30, 1
      %p363 = por %p361, %p362
      %p364 = scmp.ne.s32.totalorder %s355, %s356
      %p365 = scmp.eq.s32.totalorder %s30, 0
      %p366 = por %p364, %p365
      %p367 = scmp.ne.s32.totalorder %s355, %s356
      %p368 = scmp.eq.s32.totalorder %s31, 1
      %p369 = por %p367, %p368
      %p371 = scmp.ne.s32.totalorder %s356, %s370
      %p372 = scmp.eq.s32.totalorder %s31, 0
      %p373 = por %p371, %p372
      %s374 = ssub.s32 %s25, %s32
      %p375 = scmp.eq.s32.totalorder %s374, 0
      %s377 = sadd.s32 %s376, 1
      %s378 = scalar_select %p375, %s376, %s377
      %p381 = pneg %p375
      %p382 = scmp.eq.s32.totalorder %s25, 1
      %p383 = por %p381, %p382
      %p384 = scmp.ne.s32.totalorder %s376, %s379
      %p385 = scmp.eq.s32.totalorder %s25, 0
      %p386 = por %p384, %p385
      %p387 = scmp.ne.s32.totalorder %s376, %s379
      %p388 = scmp.eq.s32.totalorder %s30, 1
      %p389 = por %p387, %p388
      %p390 = scmp.ne.s32.totalorder %s379, %s380
      %p391 = scmp.eq.s32.totalorder %s30, 0
      %p392 = por %p390, %p391
      %p393 = scmp.ne.s32.totalorder %s379, %s380
      %p394 = scmp.eq.s32.totalorder %s31, 1
      %p395 = por %p393, %p394
      %p397 = scmp.ne.s32.totalorder %s380, %s396
      %p398 = scmp.eq.s32.totalorder %s31, 0
      %p399 = por %p397, %p398
      %p400 = scmp.le.s32.totalorder 1, %s25
      %p401 = scmp.lt.s32.totalorder %s25, 3
      %p402 = pnand %p400, %p401
      %p403 = pneg %p402
      // Predicated region
      $region9: #{efficientnet_large_scale_forward.1} parent=5 // pred_check
        _
      $region10: #{efficientnet_large_scale_forward.1} parent=5 // pred_check_branch
        %405 = sbr.rel (%p402) target = $region12
      $region11: #{efficientnet_large_scale_forward.1} parent=5 // pred_region
        %s406 = ssub.s32 %s25, 1
        // Predicated region
        $region13: #{efficientnet_large_scale_forward.1} parent=11 // pred_check
          %p407 = pneg %p72
        $region14: #{efficientnet_large_scale_forward.1} parent=11 // pred_check_branch
          %409 = sbr.rel (%p407) target = $region16
        $region15: #{efficientnet_large_scale_forward.1} parent=11 // pred_region
          _
        $region16: #{efficientnet_large_scale_forward.1} parent=11 // pred_fallthru
          _
        // Predicated region
        $region17: #{efficientnet_large_scale_forward.1} parent=11 // pred_check
          %p410 = pneg %p93
        $region18: #{efficientnet_large_scale_forward.1} parent=11 // pred_check_branch
          %412 = sbr.rel (%p410) target = $region20
        $region19: #{efficientnet_large_scale_forward.1} parent=11 // pred_region
          _
        $region20: #{efficientnet_large_scale_forward.1} parent=11 // pred_fallthru
          _
        // Predicated region
        $region21: #{efficientnet_large_scale_forward.1} parent=11 // pred_check
          %p413 = pneg %p114
        $region22: #{efficientnet_large_scale_forward.1} parent=11 // pred_check_branch
          %415 = sbr.rel (%p413) target = $region24
        $region23: #{efficientnet_large_scale_forward.1} parent=11 // pred_region
          _
        $region24: #{efficientnet_large_scale_forward.1} parent=11 // pred_fallthru
          _
        // Predicated region
        $region25: #{efficientnet_large_scale_forward.1} parent=11 // pred_check
          %p416 = pneg %p135
        $region26: #{efficientnet_large_scale_forward.1} parent=11 // pred_check_branch
          %418 = sbr.rel (%p416) target = $region28
        $region27: #{efficientnet_large_scale_forward.1} parent=11 // pred_region
          _
        $region28: #{efficientnet_large_scale_forward.1} parent=11 // pred_fallthru
          _
        // Predicated region
        $region29: #{efficientnet_large_scale_forward.1} parent=11 // pred_check
          %p419 = pneg %p156
        $region30: #{efficientnet_large_scale_forward.1} parent=11 // pred_check_branch
          %421 = sbr.rel (%p419) target = $region32
        $region31: #{efficientnet_large_scale_forward.1} parent=11 // pred_region
          _
        $region32: #{efficientnet_large_scale_forward.1} parent=11 // pred_fallthru
          _
        // Predicated region
        $region33: #{efficientnet_large_scale_forward.1} parent=11 // pred_check
          %p422 = pneg %p177
        $region34: #{efficientnet_large_scale_forward.1} parent=11 // pred_check_branch
          %424 = sbr.rel (%p422) target = $region36
        $region35: #{efficientnet_large_scale_forward.1} parent=11 // pred_region
          _
        $region36: #{efficientnet_large_scale_forward.1} parent=11 // pred_fallthru
          _
        // Predicated region
        $region37: #{efficientnet_large_scale_forward.1} parent=11 // pred_check
          %p425 = pneg %p198
        $region38: #{efficientnet_large_scale_forward.1} parent=11 // pred_check_branch
          %427 = sbr.rel (%p425) target = $region40
        $region39: #{efficientnet_large_scale_forward.1} parent=11 // pred_region
          _
        $region40: #{efficientnet_large_scale_forward.1} parent=11 // pred_fallthru
          _
        // Predicated region
        $region41: #{efficientnet_large_scale_forward.1} parent=11 // pred_check
          %p428 = pneg %p219
        $region42: #{efficientnet_large_scale_forward.1} parent=11 // pred_check_branch
          %430 = sbr.rel (%p428) target = $region44
        $region43: #{efficientnet_large_scale_forward.1} parent=11 // pred_region
          _
        $region44: #{efficientnet_large_scale_forward.1} parent=11 // pred_fallthru
          _
        // Predicated region
        $region45: #{efficientnet_large_scale_forward.1} parent=11 // pred_check
          %p431 = pneg %p240
        $region46: #{efficientnet_large_scale_forward.1} parent=11 // pred_check_branch
          %433 = sbr.rel (%p431) target = $region48
        $region47: #{efficientnet_large_scale_forward.1} parent=11 // pred_region
          _
        $region48: #{efficientnet_large_scale_forward.1} parent=11 // pred_fallthru
          _
        // Predicated region
        $region49: #{efficientnet_large_scale_forward.1} parent=11 // pred_check
          %p434 = pneg %p261
        $region50: #{efficientnet_large_scale_forward.1} parent=11 // pred_check_branch
          %436 = sbr.rel (%p434) target = $region52
        $region51: #{efficientnet_large_scale_forward.1} parent=11 // pred_region
          _
        $region52: #{efficientnet_large_scale_forward.1} parent=11 // pred_fallthru
          _
        // Predicated region
        $region53: #{efficientnet_large_scale_forward.1} parent=11 // pred_check
          %p437 = pneg %p282
        $region54: #{efficientnet_large_scale_forward.1} parent=11 // pred_check_branch
          %439 = sbr.rel (%p437) target = $region56
        $region55: #{efficientnet_large_scale_forward.1} parent=11 // pred_region
          _
        $region56: #{efficientnet_large_scale_forward.1} parent=11 // pred_fallthru
          _
        // Predicated region
        $region57: #{efficientnet_large_scale_forward.1} parent=11 // pred_check
          %p440 = pneg %p303
        $region58: #{efficientnet_large_scale_forward.1} parent=11 // pred_check_branch
          %442 = sbr.rel (%p440) target = $region60
        $region59: #{efficientnet_large_scale_forward.1} parent=11 // pred_region
          _
        $region60: #{efficientnet_large_scale_forward.1} parent=11 // pred_fallthru
          _
        // Predicated region
        $region61: #{efficientnet_large_scale_forward.1} parent=11 // pred_check
          %p443 = pneg %p324
        $region62: #{efficientnet_large_scale_forward.1} parent=11 // pred_check_branch
          %445 = sbr.rel (%p443) target = $region64
        $region63: #{efficientnet_large_scale_forward.1} parent=11 // pred_region
          _
        $region64: #{efficientnet_large_scale_forward.1} parent=11 // pred_fallthru
          _
        // Predicated region
        $region65: #{efficientnet_large_scale_forward.1} parent=11 // pred_check
          %p446 = pneg %p345
        $region66: #{efficientnet_large_scale_forward.1} parent=11 // pred_check_branch
          %448 = sbr.rel (%p446) target = $region68
        $region67: #{efficientnet_large_scale_forward.1} parent=11 // pred_region
          _
        $region68: #{efficientnet_large_scale_forward.1} parent=11 // pred_fallthru
          _
        // Predicated region
        $region69: #{efficientnet_large_scale_forward.1} parent=11 // pred_check
          %p449 = pneg %p366
        $region70: #{efficientnet_large_scale_forward.1} parent=11 // pred_check_branch
          %451 = sbr.rel (%p449) target = $region72
        $region71: #{efficientnet_large_scale_forward.1} parent=11 // pred_region
          _
        $region72: #{efficientnet_large_scale_forward.1} parent=11 // pred_fallthru
          _
      $region12: #{efficientnet_large_scale_forward.1} parent=5 // pred_fallthru
        _
      %p452 = scmp.lt.s32.totalorder %s25, 2
      // Predicated region
      $region73: #{efficientnet_large_scale_forward.1} parent=5 // pred_check
        %p453 = pneg %p452
      $region74: #{efficientnet_large_scale_forward.1} parent=5 // pred_check_branch
        %455 = sbr.rel (%p453) target = $region76
      $region75: #{efficientnet_large_scale_forward.1} parent=5 // pred_region
        // Predicated region
        $region77: #{efficientnet_large_scale_forward.1} parent=75 // pred_check
          %p456 = pneg %p45
        $region78: #{efficientnet_large_scale_forward.1} parent=75 // pred_check_branch
          %458 = sbr.rel (%p456) target = $region80
        $region79: #{efficientnet_large_scale_forward.1} parent=75 // pred_region
          %p459 = scmp.lt.s32.totalorder %s25, 1
          %s460 = scalar_select %p459, %s25, 1
          %s461 = smul.addr %s460, 8
          %s462 = smul.addr %s461, 4
          %s463 = scalar_lea.vmem %s0, %s462
        $region80: #{efficientnet_large_scale_forward.1} parent=75 // pred_fallthru
          _
      $region76: #{efficientnet_large_scale_forward.1} parent=5 // pred_fallthru
        _
      %p464 = scmp.le.s32.totalorder 1, %s25
      %p465 = scmp.lt.s32.totalorder %s25, 3
      %p466 = pnand %p464, %p465
      %p467 = pneg %p466
      // Predicated region
      $region81: #{efficientnet_large_scale_forward.1} parent=5 // pred_check
        _
      $region82: #{efficientnet_large_scale_forward.1} parent=5 // pred_check_branch
        %469 = sbr.rel (%p466) target = $region84
      $region83: #{efficientnet_large_scale_forward.1} parent=5 // pred_region
        %s470 = ssub.s32 %s25, 1
        %p471 = scmp.lt.s32.totalorder %s30, 1
        %s472 = scalar_select %p471, %s30, 1
        %s473 = smul.addr %s472, 8
        %s474 = smul.addr %s473, 4
        %s475 = scalar_lea.vmem %s0, %s474
        %p476 = pneg %p51
        %p477 = pneg %p48
        %p478 = pneg %p72
        %p479 = pneg %p69
        %p480 = pneg %p93
        %p481 = pneg %p90
        %p482 = pneg %p114
        %p483 = pneg %p111
        %p484 = pneg %p135
        %p485 = pneg %p132
        %p486 = pneg %p156
        %p487 = pneg %p153
        %p488 = pneg %p177
        %p489 = pneg %p174
        %p490 = pneg %p198
        %p491 = pneg %p195
        %p492 = pneg %p219
        %p493 = pneg %p216
        %p494 = pneg %p240
        %p495 = pneg %p237
        %p496 = pneg %p261
        %p497 = pneg %p258
        %p498 = pneg %p282
        %p499 = pneg %p279
        %p500 = pneg %p303
        %p501 = pneg %p300
        %p502 = pneg %p324
        %p503 = pneg %p321
        %p504 = pneg %p345
        %p505 = pneg %p342
        %p506 = pneg %p366
        %p507 = pneg %p363
        %p508 = pneg %p392
        %p509 = pneg %p389
        %s510 = sand.u32 %s379, 1
        %s511 = scalar_lea.sflag [#allocation3], %s510
        %s512 = sand.u32 %s379, 1
        %s513 = scalar_lea.vmem [#allocation2], %s512
        %p514 = scmp.lt.s32.totalorder %s30, 1
        %s515 = scalar_select %p514, %s30, 1
        %s516 = smul.addr %s515, 8
        %s517 = smul.addr %s516, 4
        %s518 = scalar_lea.vmem %s0, %s517
        %v520 = vld [vmem:[%s2] sm:$0xf]
        %v521 = vld [vmem:[%s4] sm:$0x1f]
        %v522 = vld [vmem:[%s4 + $0x8] sm:$0x1f]
        %v523 = vld [vmem:[%s4 + $0x10] sm:$0x1f]
        %v524 = vld [vmem:[%s4 + $0x18] sm:$0x1f]
        %v525 = vld [vmem:[%s518] sm:$0xf]
        %v526 = vld [vmem:[%s518 + $0x4] sm:$0xf]
        %v527 = vld [vmem:[%s518 + $0x8] sm:$0xf]
        %v528 = vld [vmem:[%s518 + $0xc] sm:$0xf]
        %v529 = vld [vmem:[%s518 + $0x10] sm:$0xf]
        %v530 = vld [vmem:[%s518 + $0x14] sm:$0xf]
        %v531 = vld [vmem:[%s518 + $0x18] sm:$0xf]
        %v532 = vld [vmem:[%s518 + $0x1c] sm:$0xf]
        %v533 = vld [vmem:[%s1] sm:$0xf]
        %v534 = vld [vmem:[%s1 + $0x4] sm:$0xf]
        %v535 = vld [vmem:[%s1 + $0x8] sm:$0xf]
        %v536 = vld [vmem:[%s1 + $0xc] sm:$0x3]
        %v545 = vunpack.c.l.b16 %v525
        %v546 = vunpack.c.l.b16 %v526
        %v547 = vunpack.c.l.b16 %v527
        %v548 = vunpack.c.l.b16 %v528
        %v549 = vunpack.c.l.b16 %v529
        %v550 = vunpack.c.l.b16 %v530
        %v551 = vunpack.c.l.b16 %v531
        %v552 = vunpack.c.l.b16 %v532
        %v553 = vpack.c.b16 %v546, %v545
        %v554 = vpack.c.b16 %v548, %v547
        %v555 = vpack.c.b16 %v550, %v549
        %v556 = vpack.c.b16 %v552, %v551
        %v561 = vunpack.c.l.b16 %v533
        %v562 = vunpack.c.l.b16 %v534
        %v563 = vunpack.c.l.b16 %v535
        %v564 = vunpack.c.l.b16 %v536
        %v565 = vpack.c.b16 %v562, %v561
        %v566 = vpack.c.b16 %v564, %v563
        %vm568 = vcmask 220160
        %v570 = vsel %vm568, %v553, 0
        %v573 = vsel %vm568, %v554, 0
        %v576 = vsel %vm568, %v555, 0
        %v579 = vsel %vm568, %v556, 0
        %vm581 = vcmask 1044480
        %vm582 = vcmask 1045504
        %v583 = vsel %vm581, 4294967295, 65535
        %v584 = vsel %vm582, %v583, 0
        %v586 = vand.u32 %v566, %v584
        %588 = vmatprep.subr.bf16.mxu0 0
        %589 = vmatpush1.bf16.msra.mxu0 %v565
        %590 = vmatprep.subr.bf16.mxu0 0
        %591 = vmatpush1.bf16.msra.mxu0 %v586
        %592 = vmatprep.subr.bf16.mxu0 0
        %593 = vmatpush1.bf16.msra.mxu0 0
        %594 = vmatprep.subr.bf16.mxu0 0
        %595 = vmatpush1.bf16.msra.mxu0 0
        %596 = vmatprep.subr.bf16.mxu0 0
        %597 = vmatpush1.bf16.msra.mxu0 0
        %598 = vmatprep.subr.bf16.mxu0 0
        %599 = vmatpush1.bf16.msra.mxu0 0
        %600 = vmatprep.subr.bf16.mxu0 0
        %601 = vmatpush1.bf16.msra.mxu0 0
        %602 = vmatprep.subr.bf16.mxu0 0
        %603 = vmatpush1.bf16.msra.mxu0 0
        %604 = vmatprep.subr.bf16.mxu0 0
        %605 = vmatpush1.bf16.msra.mxu0 0
        %606 = vmatprep.subr.bf16.mxu0 0
        %607 = vmatpush1.bf16.msra.mxu0 0
        %608 = vmatprep.subr.bf16.mxu0 0
        %609 = vmatpush1.bf16.msra.mxu0 0
        %610 = vmatprep.subr.bf16.mxu0 0
        %611 = vmatpush1.bf16.msra.mxu0 0
        %612 = vmatprep.subr.bf16.mxu0 0
        %613 = vmatpush1.bf16.msra.mxu0 0
        %614 = vmatprep.subr.bf16.mxu0 0
        %615 = vmatpush1.bf16.msra.mxu0 0
        %616 = vmatprep.subr.bf16.mxu0 0
        %617 = vmatpush1.bf16.msra.mxu0 0
        %618 = vmatprep.subr.bf16.mxu0 0
        %619 = vmatpush1.bf16.msra.mxu0 0
        %620 = vmatprep.mubr.bf16.mxu0 0
        %621 = vmatmul.mubr.bf16.gmra.mrb[0].mxu0 %v570
        %v622 = vpop.f32.mrb[0].mxu0
        %v623 = vadd.f32 0.0, %v622
        %v624 = vpop.f32.mrb[0].mxu0
        %v625 = vpop.f32.mrb[0].mxu0
        %v626 = vadd.f32 0.0, %v625
        %v627 = vpop.f32.mrb[0].mxu0
        %628 = vmatprep.mubr.bf16.mxu0 0
        %629 = vmatmul.mubr.bf16.gmra.mrb[0].mxu0 %v573
        %v630 = vpop.f32.mrb[0].mxu0
        %v631 = vadd.f32 0.0, %v630
        %v632 = vpop.f32.mrb[0].mxu0
        %v633 = vpop.f32.mrb[0].mxu0
        %v634 = vadd.f32 0.0, %v633
        %v635 = vpop.f32.mrb[0].mxu0
        %636 = vmatprep.mubr.bf16.mxu0 0
        %637 = vmatmul.mubr.bf16.gmra.mrb[0].mxu0 %v576
        %v638 = vpop.f32.mrb[0].mxu0
        %v639 = vadd.f32 0.0, %v638
        %v640 = vpop.f32.mrb[0].mxu0
        %v641 = vpop.f32.mrb[0].mxu0
        %v642 = vadd.f32 0.0, %v641
        %v643 = vpop.f32.mrb[0].mxu0
        %644 = vmatprep.mubr.bf16.mxu0 0
        %645 = vmatmul.mubr.bf16.gmra.mrb[0].mxu0 %v579
        %v646 = vpop.f32.mrb[0].mxu0
        %v647 = vadd.f32 0.0, %v646
        %v648 = vpop.f32.mrb[0].mxu0
        %v649 = vpop.f32.mrb[0].mxu0
        %v650 = vadd.f32 0.0, %v649
        %v651 = vpop.f32.mrb[0].mxu0
        %652 = vdwg.mxu0
        %v653 = vlaneseq
        %v654 = vshrl.u32 %v653, 7
        %v655 = vsub.s32 0, %v654
        %v656 = vrot.slane %v520, %v655
        %v657 = vmul.f32 %v623, %v656
        %v658 = vmul.f32 %v626, %v656
        %v659 = vmul.f32 %v631, %v656
        %v660 = vmul.f32 %v634, %v656
        %v661 = vmul.f32 %v639, %v656
        %v662 = vmul.f32 %v642, %v656
        %v663 = vmul.f32 %v647, %v656
        %v664 = vmul.f32 %v650, %v656
        %v665 = vlaneseq
        %v666 = vshrl.u32 %v665, 7
        %v667 = vsub.s32 1, %v666
        %v668 = vrot.slane %v520, %v667
        %v669 = vadd.f32 %v657, %v668
        %v670 = vadd.f32 %v658, %v668
        %v671 = vadd.f32 %v659, %v668
        %v672 = vadd.f32 %v660, %v668
        %v673 = vadd.f32 %v661, %v668
        %v674 = vadd.f32 %v662, %v668
        %v675 = vadd.f32 %v663, %v668
        %v676 = vadd.f32 %v664, %v668
        %v677 = vxor.u32 %v669, 2147483648
        %v678 = vxor.u32 %v670, 2147483648
        %v679 = vxor.u32 %v671, 2147483648
        %v680 = vxor.u32 %v672, 2147483648
        %v681 = vxor.u32 %v673, 2147483648
        %v682 = vxor.u32 %v674, 2147483648
        %v683 = vxor.u32 %v675, 2147483648
        %v684 = vxor.u32 %v676, 2147483648
        %v685 = vmul.f32 %v677, 1.442695
        %v686 = vpow.pop %v685
        %v687 = vmul.f32 %v678, 1.442695
        %v688 = vpow.pop %v687
        %v689 = vmul.f32 %v679, 1.442695
        %v690 = vpow.pop %v689
        %v691 = vmul.f32 %v680, 1.442695
        %v692 = vpow.pop %v691
        %v693 = vmul.f32 %v681, 1.442695
        %v694 = vpow.pop %v693
        %v695 = vmul.f32 %v682, 1.442695
        %v696 = vpow.pop %v695
        %v697 = vmul.f32 %v683, 1.442695
        %v698 = vpow.pop %v697
        %v699 = vmul.f32 %v684, 1.442695
        %v700 = vpow.pop %v699
        %v701 = vadd.f32 %v686, 1.0
        %v702 = vadd.f32 %v688, 1.0
        %v703 = vadd.f32 %v690, 1.0
        %v704 = vadd.f32 %v692, 1.0
        %v705 = vadd.f32 %v694, 1.0
        %v706 = vadd.f32 %v696, 1.0
        %v707 = vadd.f32 %v698, 1.0
        %v708 = vadd.f32 %v700, 1.0
        %v709 = vrcp.pop %v701
        %v710 = vmul.f32 1.0, %v709
        %v711 = vrcp.pop %v702
        %v712 = vmul.f32 1.0, %v711
        %v713 = vrcp.pop %v703
        %v714 = vmul.f32 1.0, %v713
        %v715 = vrcp.pop %v704
        %v716 = vmul.f32 1.0, %v715
        %v717 = vrcp.pop %v705
        %v718 = vmul.f32 1.0, %v717
        %v719 = vrcp.pop %v706
        %v720 = vmul.f32 1.0, %v719
        %v721 = vrcp.pop %v707
        %v722 = vmul.f32 1.0, %v721
        %v723 = vrcp.pop %v708
        %v724 = vmul.f32 1.0, %v723
        %v725 = vmul.f32 %v669, %v710
        %v726 = vmul.f32 %v670, %v712
        %v727 = vmul.f32 %v671, %v714
        %v728 = vmul.f32 %v672, %v716
        %v729 = vmul.f32 %v673, %v718
        %v730 = vmul.f32 %v674, %v720
        %v731 = vmul.f32 %v675, %v722
        %v732 = vmul.f32 %v676, %v724
        %v733 = vpack.c.bf16 %v726, %v725
        %v734 = vpack.c.bf16 %v728, %v727
        %v735 = vpack.c.bf16 %v730, %v729
        %v736 = vpack.c.bf16 %v732, %v731
        %v737 = vld [vmem:[%s3] sm:$0xff]
        %v738 = vld [vmem:[%s3 + $0x8] sm:$0xff]
        %v739 = vld [vmem:[%s3 + $0x10] sm:$0xff]
        %v740 = vld [vmem:[%s3 + $0x18] sm:$0xff]
        %v741 = vld [vmem:[%s3 + $0x20] sm:$0xff]
        %v742 = vld [vmem:[%s3 + $0x28] sm:$0xff]
        %v743 = vld [vmem:[%s3 + $0x30] sm:$0xff]
        %v744 = vld [vmem:[%s3 + $0x38] sm:$0xff]
        %v745 = vld [vmem:[%s3 + $0x40] sm:$0xff]
        %v746 = vld [vmem:[%s3 + $0x48] sm:$0xff]
        %v747 = vld [vmem:[%s3 + $0x50] sm:$0xff]
        %v748 = vld [vmem:[%s3 + $0x58] sm:$0xff]
        %v749 = vld [vmem:[%s3 + $0x60] sm:$0xff]
        %v750 = vld [vmem:[%s3 + $0x68] sm:$0xff]
        %v751 = vld [vmem:[%s3 + $0x70] sm:$0xff]
        %v752 = vld [vmem:[%s3 + $0x78] sm:$0xff]
        %v753 = vld [vmem:[%s3 + $0x80] sm:$0xff]
        %v754 = vld [vmem:[%s3 + $0x88] sm:$0xff]
        %v755 = vld [vmem:[%s3 + $0x90] sm:$0xff]
        %v756 = vld [vmem:[%s3 + $0x98] sm:$0xff]
        %v757 = vld [vmem:[%s3 + $0xa0] sm:$0xff]
        %v758 = vld [vmem:[%s3 + $0xa8] sm:$0xff]
        %v759 = vld [vmem:[%s3 + $0xb0] sm:$0xff]
        %v760 = vld [vmem:[%s3 + $0xb8] sm:$0xff]
        %v761 = vld [vmem:[%s3 + $0xc0] sm:$0xff]
        %v762 = vld [vmem:[%s3 + $0xc8] sm:$0xff]
        %v763 = vld [vmem:[%s3 + $0xd0] sm:$0xff]
        %v764 = vld [vmem:[%s3 + $0xd8] sm:$0xff]
        %v765 = vld [vmem:[%s3 + $0xe0] sm:$0xff]
        %v766 = vld [vmem:[%s3 + $0xe8] sm:$0xff]
        %v767 = vld [vmem:[%s3 + $0xf0] sm:$0xff]
        %v768 = vld [vmem:[%s3 + $0xf8] sm:$0xff]
        %v801 = vunpack.c.l.b16 %v737
        %v802 = vunpack.c.h.b16 %v737
        %v803 = vunpack.c.l.b16 %v738
        %v804 = vunpack.c.h.b16 %v738
        %v805 = vunpack.c.l.b16 %v739
        %v806 = vunpack.c.h.b16 %v739
        %v807 = vunpack.c.l.b16 %v740
        %v808 = vunpack.c.h.b16 %v740
        %v809 = vunpack.c.l.b16 %v741
        %v810 = vunpack.c.h.b16 %v741
        %v811 = vunpack.c.l.b16 %v742
        %v812 = vunpack.c.h.b16 %v742
        %v813 = vunpack.c.l.b16 %v743
        %v814 = vunpack.c.h.b16 %v743
        %v815 = vunpack.c.l.b16 %v744
        %v816 = vunpack.c.h.b16 %v744
        %v817 = vunpack.c.l.b16 %v745
        %v818 = vunpack.c.h.b16 %v745
        %v819 = vunpack.c.l.b16 %v746
        %v820 = vunpack.c.h.b16 %v746
        %v821 = vunpack.c.l.b16 %v747
        %v822 = vunpack.c.h.b16 %v747
        %v823 = vunpack.c.l.b16 %v748
        %v824 = vunpack.c.h.b16 %v748
        %v825 = vunpack.c.l.b16 %v749
        %v826 = vunpack.c.h.b16 %v749
        %v827 = vunpack.c.l.b16 %v750
        %v828 = vunpack.c.h.b16 %v750
        %v829 = vunpack.c.l.b16 %v751
        %v830 = vunpack.c.h.b16 %v751
        %v831 = vunpack.c.l.b16 %v752
        %v832 = vunpack.c.h.b16 %v752
        %v833 = vunpack.c.l.b16 %v753
        %v834 = vunpack.c.h.b16 %v753
        %v835 = vunpack.c.l.b16 %v754
        %v836 = vunpack.c.h.b16 %v754
        %v837 = vunpack.c.l.b16 %v755
        %v838 = vunpack.c.h.b16 %v755
        %v839 = vunpack.c.l.b16 %v756
        %v840 = vunpack.c.h.b16 %v756
        %v841 = vunpack.c.l.b16 %v757
        %v842 = vunpack.c.h.b16 %v757
        %v843 = vunpack.c.l.b16 %v758
        %v844 = vunpack.c.h.b16 %v758
        %v845 = vunpack.c.l.b16 %v759
        %v846 = vunpack.c.h.b16 %v759
        %v847 = vunpack.c.l.b16 %v760
        %v848 = vunpack.c.h.b16 %v760
        %v849 = vunpack.c.l.b16 %v761
        %v850 = vunpack.c.h.b16 %v761
        %v851 = vunpack.c.l.b16 %v762
        %v852 = vunpack.c.h.b16 %v762
        %v853 = vunpack.c.l.b16 %v763
        %v854 = vunpack.c.h.b16 %v763
        %v855 = vunpack.c.l.b16 %v764
        %v856 = vunpack.c.h.b16 %v764
        %v857 = vunpack.c.l.b16 %v765
        %v858 = vunpack.c.h.b16 %v765
        %v859 = vunpack.c.l.b16 %v766
        %v860 = vunpack.c.h.b16 %v766
        %v861 = vunpack.c.l.b16 %v767
        %v862 = vunpack.c.h.b16 %v767
        %v863 = vunpack.c.l.b16 %v768
        %v864 = vunpack.c.h.b16 %v768
        %v865 = vpack.c.b16 %v805, %v801
        %v866 = vpack.c.b16 %v806, %v802
        %v867 = vpack.c.b16 %v807, %v803
        %v868 = vpack.c.b16 %v808, %v804
        %v869 = vpack.c.b16 %v813, %v809
        %v870 = vpack.c.b16 %v814, %v810
        %v871 = vpack.c.b16 %v815, %v811
        %v872 = vpack.c.b16 %v816, %v812
        %v873 = vpack.c.b16 %v821, %v817
        %v874 = vpack.c.b16 %v822, %v818
        %v875 = vpack.c.b16 %v823, %v819
        %v876 = vpack.c.b16 %v824, %v820
        %v877 = vpack.c.b16 %v829, %v825
        %v878 = vpack.c.b16 %v830, %v826
        %v879 = vpack.c.b16 %v831, %v827
        %v880 = vpack.c.b16 %v832, %v828
        %v881 = vpack.c.b16 %v837, %v833
        %v882 = vpack.c.b16 %v838, %v834
        %v883 = vpack.c.b16 %v839, %v835
        %v884 = vpack.c.b16 %v840, %v836
        %v885 = vpack.c.b16 %v845, %v841
        %v886 = vpack.c.b16 %v846, %v842
        %v887 = vpack.c.b16 %v847, %v843
        %v888 = vpack.c.b16 %v848, %v844
        %v889 = vpack.c.b16 %v853, %v849
        %v890 = vpack.c.b16 %v854, %v850
        %v891 = vpack.c.b16 %v855, %v851
        %v892 = vpack.c.b16 %v856, %v852
        %v893 = vpack.c.b16 %v861, %v857
        %v894 = vpack.c.b16 %v862, %v858
        %v895 = vpack.c.b16 %v863, %v859
        %v896 = vpack.c.b16 %v864, %v860
        %929 = vmatprep.subr.bf16.mxu0 %v866
        %930 = vmatpush1.bf16.msra.mxu0 %v865
        %931 = vmatprep.subr.bf16.mxu0 %v870
        %932 = vmatpush1.bf16.msra.mxu0 %v869
        %933 = vmatprep.subr.bf16.mxu0 %v874
        %934 = vmatpush1.bf16.msra.mxu0 %v873
        %935 = vmatprep.subr.bf16.mxu0 %v878
        %936 = vmatpush1.bf16.msra.mxu0 %v877
        %937 = vmatprep.subr.bf16.mxu0 %v882
        %938 = vmatpush1.bf16.msra.mxu0 %v881
        %939 = vmatprep.subr.bf16.mxu0 %v886
        %940 = vmatpush1.bf16.msra.mxu0 %v885
        %941 = vmatprep.subr.bf16.mxu0 %v890
        %942 = vmatpush1.bf16.msra.mxu0 %v889
        %943 = vmatprep.subr.bf16.mxu0 %v894
        %944 = vmatpush1.bf16.msra.mxu0 %v893
        %945 = vmatprep.subr.bf16.mxu0 0
        %946 = vmatpush1.bf16.msra.mxu0 0
        %947 = vmatprep.subr.bf16.mxu0 0
        %948 = vmatpush1.bf16.msra.mxu0 0
        %949 = vmatprep.subr.bf16.mxu0 0
        %950 = vmatpush1.bf16.msra.mxu0 0
        %951 = vmatprep.subr.bf16.mxu0 0
        %952 = vmatpush1.bf16.msra.mxu0 0
        %953 = vmatprep.subr.bf16.mxu0 0
        %954 = vmatpush1.bf16.msra.mxu0 0
        %955 = vmatprep.subr.bf16.mxu0 0
        %956 = vmatpush1.bf16.msra.mxu0 0
        %957 = vmatprep.subr.bf16.mxu0 0
        %958 = vmatpush1.bf16.msra.mxu0 0
        %959 = vmatprep.subr.bf16.mxu0 0
        %960 = vmatpush1.bf16.msra.mxu0 0
        %961 = vmatprep.mubr.bf16.mxu0 0
        %962 = vmatmul.mubr.bf16.gmra.mrb[0].mxu0 %v733
        %v963 = vpop.f32.mrb[0].mxu0
        %v964 = vadd.f32 0.0, %v963
        %v965 = vpop.f32.mrb[0].mxu0
        %v966 = vadd.f32 0.0, %v965
        %v967 = vpop.f32.mrb[0].mxu0
        %v968 = vadd.f32 0.0, %v967
        %v969 = vpop.f32.mrb[0].mxu0
        %v970 = vadd.f32 0.0, %v969
        %971 = vmatprep.mubr.bf16.mxu0 0
        %972 = vmatmul.mubr.bf16.gmra.mrb[0].mxu0 %v734
        %v973 = vpop.f32.mrb[0].mxu0
        %v974 = vadd.f32 0.0, %v973
        %v975 = vpop.f32.mrb[0].mxu0
        %v976 = vadd.f32 0.0, %v975
        %v977 = vpop.f32.mrb[0].mxu0
        %v978 = vadd.f32 0.0, %v977
        %v979 = vpop.f32.mrb[0].mxu0
        %v980 = vadd.f32 0.0, %v979
        %981 = vmatprep.mubr.bf16.mxu0 0
        %982 = vmatmul.mubr.bf16.gmra.mrb[0].mxu0 %v735
        %v983 = vpop.f32.mrb[0].mxu0
        %v984 = vadd.f32 0.0, %v983
        %v985 = vpop.f32.mrb[0].mxu0
        %v986 = vadd.f32 0.0, %v985
        %v987 = vpop.f32.mrb[0].mxu0
        %v988 = vadd.f32 0.0, %v987
        %v989 = vpop.f32.mrb[0].mxu0
        %v990 = vadd.f32 0.0, %v989
        %991 = vmatprep.mubr.bf16.mxu0 0
        %992 = vmatmul.mubr.bf16.gmra.mrb[0].mxu0 %v736
        %v993 = vpop.f32.mrb[0].mxu0
        %v994 = vadd.f32 0.0, %v993
        %v995 = vpop.f32.mrb[0].mxu0
        %v996 = vadd.f32 0.0, %v995
        %v997 = vpop.f32.mrb[0].mxu0
        %v998 = vadd.f32 0.0, %v997
        %v999 = vpop.f32.mrb[0].mxu0
        %v1000 = vadd.f32 0.0, %v999
        %1001 = vdwg.mxu0
        %1002 = vmatprep.subr.bf16.mxu0 %v868
        %1003 = vmatpush1.bf16.msra.mxu0 %v867
        %1004 = vmatprep.subr.bf16.mxu0 %v872
        %1005 = vmatpush1.bf16.msra.mxu0 %v871
        %1006 = vmatprep.subr.bf16.mxu0 %v876
        %1007 = vmatpush1.bf16.msra.mxu0 %v875
        %1008 = vmatprep.subr.bf16.mxu0 %v880
        %1009 = vmatpush1.bf16.msra.mxu0 %v879
        %1010 = vmatprep.subr.bf16.mxu0 %v884
        %1011 = vmatpush1.bf16.msra.mxu0 %v883
        %1012 = vmatprep.subr.bf16.mxu0 %v888
        %1013 = vmatpush1.bf16.msra.mxu0 %v887
        %1014 = vmatprep.subr.bf16.mxu0 %v892
        %1015 = vmatpush1.bf16.msra.mxu0 %v891
        %1016 = vmatprep.subr.bf16.mxu0 %v896
        %1017 = vmatpush1.bf16.msra.mxu0 %v895
        %1018 = vmatprep.subr.bf16.mxu0 0
        %1019 = vmatpush1.bf16.msra.mxu0 0
        %1020 = vmatprep.subr.bf16.mxu0 0
        %1021 = vmatpush1.bf16.msra.mxu0 0
        %1022 = vmatprep.subr.bf16.mxu0 0
        %1023 = vmatpush1.bf16.msra.mxu0 0
        %1024 = vmatprep.subr.bf16.mxu0 0
        %1025 = vmatpush1.bf16.msra.mxu0 0
        %1026 = vmatprep.subr.bf16.mxu0 0
        %1027 = vmatpush1.bf16.msra.mxu0 0
        %1028 = vmatprep.subr.bf16.mxu0 0
        %1029 = vmatpush1.bf16.msra.mxu0 0
        %1030 = vmatprep.subr.bf16.mxu0 0
        %1031 = vmatpush1.bf16.msra.mxu0 0
        %1032 = vmatprep.subr.bf16.mxu0 0
        %1033 = vmatpush1.bf16.msra.mxu0 0
        %1034 = vmatprep.mubr.bf16.mxu0 0
        %1035 = vmatmul.mubr.bf16.gmra.mrb[0].mxu0 %v733
        %v1036 = vpop.f32.mrb[0].mxu0
        %v1037 = vadd.f32 0.0, %v1036
        %v1038 = vpop.f32.mrb[0].mxu0
        %v1039 = vadd.f32 0.0, %v1038
        %v1040 = vpop.f32.mrb[0].mxu0
        %v1041 = vadd.f32 0.0, %v1040
        %v1042 = vpop.f32.mrb[0].mxu0
        %v1043 = vadd.f32 0.0, %v1042
        %1044 = vmatprep.mubr.bf16.mxu0 0
        %1045 = vmatmul.mubr.bf16.gmra.mrb[0].mxu0 %v734
        %v1046 = vpop.f32.mrb[0].mxu0
        %v1047 = vadd.f32 0.0, %v1046
        %v1048 = vpop.f32.mrb[0].mxu0
        %v1049 = vadd.f32 0.0, %v1048
        %v1050 = vpop.f32.mrb[0].mxu0
        %v1051 = vadd.f32 0.0, %v1050
        %v1052 = vpop.f32.mrb[0].mxu0
        %v1053 = vadd.f32 0.0, %v1052
        %1054 = vmatprep.mubr.bf16.mxu0 0
        %1055 = vmatmul.mubr.bf16.gmra.mrb[0].mxu0 %v735
        %v1056 = vpop.f32.mrb[0].mxu0
        %v1057 = vadd.f32 0.0, %v1056
        %v1058 = vpop.f32.mrb[0].mxu0
        %v1059 = vadd.f32 0.0, %v1058
        %v1060 = vpop.f32.mrb[0].mxu0
        %v1061 = vadd.f32 0.0, %v1060
        %v1062 = vpop.f32.mrb[0].mxu0
        %v1063 = vadd.f32 0.0, %v1062
        %1064 = vmatprep.mubr.bf16.mxu0 0
        %1065 = vmatmul.mubr.bf16.gmra.mrb[0].mxu0 %v736
        %v1066 = vpop.f32.mrb[0].mxu0
        %v1067 = vadd.f32 0.0, %v1066
        %v1068 = vpop.f32.mrb[0].mxu0
        %v1069 = vadd.f32 0.0, %v1068
        %v1070 = vpop.f32.mrb[0].mxu0
        %v1071 = vadd.f32 0.0, %v1070
        %v1072 = vpop.f32.mrb[0].mxu0
        %v1073 = vadd.f32 0.0, %v1072
        %1074 = vdwg.mxu0
        %v1075 = vlaneseq
        %v1076 = vshrl.u32 %v1075, 7
        %v1077 = vsub.s32 0, %v1076
        %v1078 = vrot.slane %v521, %v1077
        %v1079 = vlaneseq
        %v1080 = vshrl.u32 %v1079, 7
        %v1081 = vsub.s32 0, %v1080
        %v1082 = vrot.slane %v522, %v1081
        %v1083 = vlaneseq
        %v1084 = vshrl.u32 %v1083, 7
        %v1085 = vsub.s32 0, %v1084
        %v1086 = vrot.slane %v523, %v1085
        %v1087 = vlaneseq
        %v1088 = vshrl.u32 %v1087, 7
        %v1089 = vsub.s32 0, %v1088
        %v1090 = vrot.slane %v524, %v1089
        %v1091 = vmul.f32 %v964, %v1078
        %v1092 = vmul.f32 %v966, %v1082
        %v1093 = vmul.f32 %v1037, %v1086
        %v1094 = vmul.f32 %v1039, %v1090
        %v1095 = vmul.f32 %v968, %v1078
        %v1096 = vmul.f32 %v970, %v1082
        %v1097 = vmul.f32 %v1041, %v1086
        %v1098 = vmul.f32 %v1043, %v1090
        %v1099 = vmul.f32 %v974, %v1078
        %v1100 = vmul.f32 %v976, %v1082
        %v1101 = vmul.f32 %v1047, %v1086
        %v1102 = vmul.f32 %v1049, %v1090
        %v1103 = vmul.f32 %v978, %v1078
        %v1104 = vmul.f32 %v980, %v1082
        %v1105 = vmul.f32 %v1051, %v1086
        %v1106 = vmul.f32 %v1053, %v1090
        %v1107 = vmul.f32 %v984, %v1078
        %v1108 = vmul.f32 %v986, %v1082
        %v1109 = vmul.f32 %v1057, %v1086
        %v1110 = vmul.f32 %v1059, %v1090
        %v1111 = vmul.f32 %v988, %v1078
        %v1112 = vmul.f32 %v990, %v1082
        %v1113 = vmul.f32 %v1061, %v1086
        %v1114 = vmul.f32 %v1063, %v1090
        %v1115 = vmul.f32 %v994, %v1078
        %v1116 = vmul.f32 %v996, %v1082
        %v1117 = vmul.f32 %v1067, %v1086
        %v1118 = vmul.f32 %v1069, %v1090
        %v1119 = vmul.f32 %v998, %v1078
        %v1120 = vmul.f32 %v1000, %v1082
        %v1121 = vmul.f32 %v1071, %v1086
        %v1122 = vmul.f32 %v1073, %v1090
        %v1123 = vlaneseq
        %v1124 = vshrl.u32 %v1123, 7
        %v1125 = vsub.s32 1, %v1124
        %v1126 = vrot.slane %v521, %v1125
        %v1127 = vlaneseq
        %v1128 = vshrl.u32 %v1127, 7
        %v1129 = vsub.s32 1, %v1128
        %v1130 = vrot.slane %v522, %v1129
        %v1131 = vlaneseq
        %v1132 = vshrl.u32 %v1131, 7
        %v1133 = vsub.s32 1, %v1132
        %v1134 = vrot.slane %v523, %v1133
        %v1135 = vlaneseq
        %v1136 = vshrl.u32 %v1135, 7
        %v1137 = vsub.s32 1, %v1136
        %v1138 = vrot.slane %v524, %v1137
        %v1139 = vadd.f32 %v1091, %v1126
        %v1140 = vadd.f32 %v1092, %v1130
        %v1141 = vadd.f32 %v1093, %v1134
        %v1142 = vadd.f32 %v1094, %v1138
        %v1143 = vadd.f32 %v1095, %v1126
        %v1144 = vadd.f32 %v1096, %v1130
        %v1145 = vadd.f32 %v1097, %v1134
        %v1146 = vadd.f32 %v1098, %v1138
        %v1147 = vadd.f32 %v1099, %v1126
        %v1148 = vadd.f32 %v1100, %v1130
        %v1149 = vadd.f32 %v1101, %v1134
        %v1150 = vadd.f32 %v1102, %v1138
        %v1151 = vadd.f32 %v1103, %v1126
        %v1152 = vadd.f32 %v1104, %v1130
        %v1153 = vadd.f32 %v1105, %v1134
        %v1154 = vadd.f32 %v1106, %v1138
        %v1155 = vadd.f32 %v1107, %v1126
        %v1156 = vadd.f32 %v1108, %v1130
        %v1157 = vadd.f32 %v1109, %v1134
        %v1158 = vadd.f32 %v1110, %v1138
        %v1159 = vadd.f32 %v1111, %v1126
        %v1160 = vadd.f32 %v1112, %v1130
        %v1161 = vadd.f32 %v1113, %v1134
        %v1162 = vadd.f32 %v1114, %v1138
        %v1163 = vadd.f32 %v1115, %v1126
        %v1164 = vadd.f32 %v1116, %v1130
        %v1165 = vadd.f32 %v1117, %v1134
        %v1166 = vadd.f32 %v1118, %v1138
        %v1167 = vadd.f32 %v1119, %v1126
        %v1168 = vadd.f32 %v1120, %v1130
        %v1169 = vadd.f32 %v1121, %v1134
        %v1170 = vadd.f32 %v1122, %v1138
        %v1171 = vxor.u32 %v1139, 2147483648
        %v1172 = vxor.u32 %v1140, 2147483648
        %v1173 = vxor.u32 %v1141, 2147483648
        %v1174 = vxor.u32 %v1142, 2147483648
        %v1175 = vxor.u32 %v1143, 2147483648
        %v1176 = vxor.u32 %v1144, 2147483648
        %v1177 = vxor.u32 %v1145, 2147483648
        %v1178 = vxor.u32 %v1146, 2147483648
        %v1179 = vxor.u32 %v1147, 2147483648
        %v1180 = vxor.u32 %v1148, 2147483648
        %v1181 = vxor.u32 %v1149, 2147483648
        %v1182 = vxor.u32 %v1150, 2147483648
        %v1183 = vxor.u32 %v1151, 2147483648
        %v1184 = vxor.u32 %v1152, 2147483648
        %v1185 = vxor.u32 %v1153, 2147483648
        %v1186 = vxor.u32 %v1154, 2147483648
        %v1187 = vxor.u32 %v1155, 2147483648
        %v1188 = vxor.u32 %v1156, 2147483648
        %v1189 = vxor.u32 %v1157, 2147483648
        %v1190 = vxor.u32 %v1158, 2147483648
        %v1191 = vxor.u32 %v1159, 2147483648
        %v1192 = vxor.u32 %v1160, 2147483648
        %v1193 = vxor.u32 %v1161, 2147483648
        %v1194 = vxor.u32 %v1162, 2147483648
        %v1195 = vxor.u32 %v1163, 2147483648
        %v1196 = vxor.u32 %v1164, 2147483648
        %v1197 = vxor.u32 %v1165, 2147483648
        %v1198 = vxor.u32 %v1166, 2147483648
        %v1199 = vxor.u32 %v1167, 2147483648
        %v1200 = vxor.u32 %v1168, 2147483648
        %v1201 = vxor.u32 %v1169, 2147483648
        %v1202 = vxor.u32 %v1170, 2147483648
        %v1203 = vmul.f32 %v1171, 1.442695
        %v1204 = vpow.pop %v1203
        %v1205 = vmul.f32 %v1172, 1.442695
        %v1206 = vpow.pop %v1205
        %v1207 = vmul.f32 %v1173, 1.442695
        %v1208 = vpow.pop %v1207
        %v1209 = vmul.f32 %v1174, 1.442695
        %v1210 = vpow.pop %v1209
        %v1211 = vmul.f32 %v1175, 1.442695
        %v1212 = vpow.pop %v1211
        %v1213 = vmul.f32 %v1176, 1.442695
        %v1214 = vpow.pop %v1213
        %v1215 = vmul.f32 %v1177, 1.442695
        %v1216 = vpow.pop %v1215
        %v1217 = vmul.f32 %v1178, 1.442695
        %v1218 = vpow.pop %v1217
        %v1219 = vmul.f32 %v1179, 1.442695
        %v1220 = vpow.pop %v1219
        %v1221 = vmul.f32 %v1180, 1.442695
        %v1222 = vpow.pop %v1221
        %v1223 = vmul.f32 %v1181, 1.442695
        %v1224 = vpow.pop %v1223
        %v1225 = vmul.f32 %v1182, 1.442695
        %v1226 = vpow.pop %v1225
        %v1227 = vmul.f32 %v1183, 1.442695
        %v1228 = vpow.pop %v1227
        %v1229 = vmul.f32 %v1184, 1.442695
        %v1230 = vpow.pop %v1229
        %v1231 = vmul.f32 %v1185, 1.442695
        %v1232 = vpow.pop %v1231
        %v1233 = vmul.f32 %v1186, 1.442695
        %v1234 = vpow.pop %v1233
        %v1235 = vmul.f32 %v1187, 1.442695
        %v1236 = vpow.pop %v1235
        %v1237 = vmul.f32 %v1188, 1.442695
        %v1238 = vpow.pop %v1237
        %v1239 = vmul.f32 %v1189, 1.442695
        %v1240 = vpow.pop %v1239
        %v1241 = vmul.f32 %v1190, 1.442695
        %v1242 = vpow.pop %v1241
        %v1243 = vmul.f32 %v1191, 1.442695
        %v1244 = vpow.pop %v1243
        %v1245 = vmul.f32 %v1192, 1.442695
        %v1246 = vpow.pop %v1245
        %v1247 = vmul.f32 %v1193, 1.442695
        %v1248 = vpow.pop %v1247
        %v1249 = vmul.f32 %v1194, 1.442695
        %v1250 = vpow.pop %v1249
        %v1251 = vmul.f32 %v1195, 1.442695
        %v1252 = vpow.pop %v1251
        %v1253 = vmul.f32 %v1196, 1.442695
        %v1254 = vpow.pop %v1253
        %v1255 = vmul.f32 %v1197, 1.442695
        %v1256 = vpow.pop %v1255
        %v1257 = vmul.f32 %v1198, 1.442695
        %v1258 = vpow.pop %v1257
        %v1259 = vmul.f32 %v1199, 1.442695
        %v1260 = vpow.pop %v1259
        %v1261 = vmul.f32 %v1200, 1.442695
        %v1262 = vpow.pop %v1261
        %v1263 = vmul.f32 %v1201, 1.442695
        %v1264 = vpow.pop %v1263
        %v1265 = vmul.f32 %v1202, 1.442695
        %v1266 = vpow.pop %v1265
        %v1267 = vadd.f32 %v1204, 1.0
        %v1268 = vadd.f32 %v1206, 1.0
        %v1269 = vadd.f32 %v1208, 1.0
        %v1270 = vadd.f32 %v1210, 1.0
        %v1271 = vadd.f32 %v1212, 1.0
        %v1272 = vadd.f32 %v1214, 1.0
        %v1273 = vadd.f32 %v1216, 1.0
        %v1274 = vadd.f32 %v1218, 1.0
        %v1275 = vadd.f32 %v1220, 1.0
        %v1276 = vadd.f32 %v1222, 1.0
        %v1277 = vadd.f32 %v1224, 1.0
        %v1278 = vadd.f32 %v1226, 1.0
        %v1279 = vadd.f32 %v1228, 1.0
        %v1280 = vadd.f32 %v1230, 1.0
        %v1281 = vadd.f32 %v1232, 1.0
        %v1282 = vadd.f32 %v1234, 1.0
        %v1283 = vadd.f32 %v1236, 1.0
        %v1284 = vadd.f32 %v1238, 1.0
        %v1285 = vadd.f32 %v1240, 1.0
        %v1286 = vadd.f32 %v1242, 1.0
        %v1287 = vadd.f32 %v1244, 1.0
        %v1288 = vadd.f32 %v1246, 1.0
        %v1289 = vadd.f32 %v1248, 1.0
        %v1290 = vadd.f32 %v1250, 1.0
        %v1291 = vadd.f32 %v1252, 1.0
        %v1292 = vadd.f32 %v1254, 1.0
        %v1293 = vadd.f32 %v1256, 1.0
        %v1294 = vadd.f32 %v1258, 1.0
        %v1295 = vadd.f32 %v1260, 1.0
        %v1296 = vadd.f32 %v1262, 1.0
        %v1297 = vadd.f32 %v1264, 1.0
        %v1298 = vadd.f32 %v1266, 1.0
        %v1299 = vrcp.pop %v1267
        %v1300 = vmul.f32 1.0, %v1299
        %v1301 = vrcp.pop %v1268
        %v1302 = vmul.f32 1.0, %v1301
        %v1303 = vrcp.pop %v1269
        %v1304 = vmul.f32 1.0, %v1303
        %v1305 = vrcp.pop %v1270
        %v1306 = vmul.f32 1.0, %v1305
        %v1307 = vrcp.pop %v1271
        %v1308 = vmul.f32 1.0, %v1307
        %v1309 = vrcp.pop %v1272
        %v1310 = vmul.f32 1.0, %v1309
        %v1311 = vrcp.pop %v1273
        %v1312 = vmul.f32 1.0, %v1311
        %v1313 = vrcp.pop %v1274
        %v1314 = vmul.f32 1.0, %v1313
        %v1315 = vrcp.pop %v1275
        %v1316 = vmul.f32 1.0, %v1315
        %v1317 = vrcp.pop %v1276
        %v1318 = vmul.f32 1.0, %v1317
        %v1319 = vrcp.pop %v1277
        %v1320 = vmul.f32 1.0, %v1319
        %v1321 = vrcp.pop %v1278
        %v1322 = vmul.f32 1.0, %v1321
        %v1323 = vrcp.pop %v1279
        %v1324 = vmul.f32 1.0, %v1323
        %v1325 = vrcp.pop %v1280
        %v1326 = vmul.f32 1.0, %v1325
        %v1327 = vrcp.pop %v1281
        %v1328 = vmul.f32 1.0, %v1327
        %v1329 = vrcp.pop %v1282
        %v1330 = vmul.f32 1.0, %v1329
        %v1331 = vrcp.pop %v1283
        %v1332 = vmul.f32 1.0, %v1331
        %v1333 = vrcp.pop %v1284
        %v1334 = vmul.f32 1.0, %v1333
        %v1335 = vrcp.pop %v1285
        %v1336 = vmul.f32 1.0, %v1335
        %v1337 = vrcp.pop %v1286
        %v1338 = vmul.f32 1.0, %v1337
        %v1339 = vrcp.pop %v1287
        %v1340 = vmul.f32 1.0, %v1339
        %v1341 = vrcp.pop %v1288
        %v1342 = vmul.f32 1.0, %v1341
        %v1343 = vrcp.pop %v1289
        %v1344 = vmul.f32 1.0, %v1343
        %v1345 = vrcp.pop %v1290
        %v1346 = vmul.f32 1.0, %v1345
        %v1347 = vrcp.pop %v1291
        %v1348 = vmul.f32 1.0, %v1347
        %v1349 = vrcp.pop %v1292
        %v1350 = vmul.f32 1.0, %v1349
        %v1351 = vrcp.pop %v1293
        %v1352 = vmul.f32 1.0, %v1351
        %v1353 = vrcp.pop %v1294
        %v1354 = vmul.f32 1.0, %v1353
        %v1355 = vrcp.pop %v1295
        %v1356 = vmul.f32 1.0, %v1355
        %v1357 = vrcp.pop %v1296
        %v1358 = vmul.f32 1.0, %v1357
        %v1359 = vrcp.pop %v1297
        %v1360 = vmul.f32 1.0, %v1359
        %v1361 = vrcp.pop %v1298
        %v1362 = vmul.f32 1.0, %v1361
        %v1363 = vmul.f32 %v1139, %v1300
        %v1364 = vmul.f32 %v1140, %v1302
        %v1365 = vmul.f32 %v1141, %v1304
        %v1366 = vmul.f32 %v1142, %v1306
        %v1367 = vmul.f32 %v1143, %v1308
        %v1368 = vmul.f32 %v1144, %v1310
        %v1369 = vmul.f32 %v1145, %v1312
        %v1370 = vmul.f32 %v1146, %v1314
        %v1371 = vmul.f32 %v1147, %v1316
        %v1372 = vmul.f32 %v1148, %v1318
        %v1373 = vmul.f32 %v1149, %v1320
        %v1374 = vmul.f32 %v1150, %v1322
        %v1375 = vmul.f32 %v1151, %v1324
        %v1376 = vmul.f32 %v1152, %v1326
        %v1377 = vmul.f32 %v1153, %v1328
        %v1378 = vmul.f32 %v1154, %v1330
        %v1379 = vmul.f32 %v1155, %v1332
        %v1380 = vmul.f32 %v1156, %v1334
        %v1381 = vmul.f32 %v1157, %v1336
        %v1382 = vmul.f32 %v1158, %v1338
        %v1383 = vmul.f32 %v1159, %v1340
        %v1384 = vmul.f32 %v1160, %v1342
        %v1385 = vmul.f32 %v1161, %v1344
        %v1386 = vmul.f32 %v1162, %v1346
        %v1387 = vmul.f32 %v1163, %v1348
        %v1388 = vmul.f32 %v1164, %v1350
        %v1389 = vmul.f32 %v1165, %v1352
        %v1390 = vmul.f32 %v1166, %v1354
        %v1391 = vmul.f32 %v1167, %v1356
        %v1392 = vmul.f32 %v1168, %v1358
        %v1393 = vmul.f32 %v1169, %v1360
        %v1394 = vmul.f32 %v1170, %v1362
        %v1395 = vld [vmem:[%s5] sm:$0xff]
        %v1396 = vld [vmem:[%s5 + $0x8] sm:$0xff]
        %v1397 = vld [vmem:[%s5 + $0x10] sm:$0xff]
        %v1398 = vld [vmem:[%s5 + $0x18] sm:$0xff]
        %v1399 = vld [vmem:[%s5 + $0x20] sm:$0x1]
        %v1400 = vld [vmem:[%s5 + $0x28] sm:$0x1]
        %v1401 = vld [vmem:[%s5 + $0x30] sm:$0x1]
        %v1402 = vld [vmem:[%s5 + $0x38] sm:$0x1]
        %v1432 = vrot.slane 0.0, 7
        %v1433 = vrot.slane %v1363, 7
        %v1434 = vrot.slane %v1364, 7
        %v1435 = vrot.slane %v1365, 7
        %v1436 = vrot.slane %v1366, 7
        %v1437 = vrot.slane %v1367, 7
        %v1438 = vrot.slane %v1368, 7
        %v1439 = vrot.slane %v1369, 7
        %v1440 = vrot.slane %v1370, 7
        %v1441 = vrot.slane %v1371, 7
        %v1442 = vrot.slane %v1372, 7
        %v1443 = vrot.slane %v1373, 7
        %v1444 = vrot.slane %v1374, 7
        %v1445 = vrot.slane %v1375, 7
        %v1446 = vrot.slane %v1376, 7
        %v1447 = vrot.slane %v1377, 7
        %v1448 = vrot.slane %v1378, 7
        %v1449 = vrot.slane %v1379, 7
        %v1450 = vrot.slane %v1380, 7
        %v1451 = vrot.slane %v1381, 7
        %v1452 = vrot.slane %v1382, 7
        %v1453 = vrot.slane %v1383, 7
        %v1454 = vrot.slane %v1384, 7
        %v1455 = vrot.slane %v1385, 7
        %v1456 = vrot.slane %v1386, 7
        %v1457 = vrot.slane %v1387, 7
        %v1458 = vrot.slane %v1388, 7
        %v1459 = vrot.slane %v1389, 7
        %v1460 = vrot.slane %v1390, 7
        %vm1490 = vcmask 1040384
        %v1491 = vsel %vm1490, 0.0, %v1432
        %v1492 = vsel %vm1490, 0.0, %v1433
        %v1493 = vsel %vm1490, 0.0, %v1434
        %v1494 = vsel %vm1490, 0.0, %v1435
        %v1495 = vsel %vm1490, 0.0, %v1436
        %v1496 = vsel %vm1490, 0.0, %v1437
        %v1497 = vsel %vm1490, 0.0, %v1438
        %v1498 = vsel %vm1490, 0.0, %v1439
        %v1499 = vsel %vm1490, 0.0, %v1440
        %v1500 = vsel %vm1490, 0.0, %v1441
        %v1501 = vsel %vm1490, 0.0, %v1442
        %v1502 = vsel %vm1490, 0.0, %v1443
        %v1503 = vsel %vm1490, 0.0, %v1444
        %v1504 = vsel %vm1490, 0.0, %v1445
        %v1505 = vsel %vm1490, 0.0, %v1446
        %v1506 = vsel %vm1490, 0.0, %v1447
        %v1507 = vsel %vm1490, 0.0, %v1448
        %v1508 = vsel %vm1490, 0.0, %v1449
        %v1509 = vsel %vm1490, 0.0, %v1450
        %v1510 = vsel %vm1490, 0.0, %v1451
        %v1511 = vsel %vm1490, 0.0, %v1452
        %v1512 = vsel %vm1490, 0.0, %v1453
        %v1513 = vsel %vm1490, 0.0, %v1454
        %v1514 = vsel %vm1490, 0.0, %v1455
        %v1515 = vsel %vm1490, 0.0, %v1456
        %v1516 = vsel %vm1490, 0.0, %v1457
        %v1517 = vsel %vm1490, 0.0, %v1458
        %v1518 = vsel %vm1490, 0.0, %v1459
        %v1519 = vsel %vm1490, 0.0, %v1460
        %v1520 = vlaneseq
        %v1521 = vshrl.u32 %v1520, 7
        %v1522 = vsub.s32 0, %v1521
        %v1523 = vrot.slane %v1395, %v1522
        %v1524 = vlaneseq
        %v1525 = vshrl.u32 %v1524, 7
        %v1526 = vsub.s32 0, %v1525
        %v1527 = vrot.slane %v1396, %v1526
        %v1528 = vlaneseq
        %v1529 = vshrl.u32 %v1528, 7
        %v1530 = vsub.s32 0, %v1529
        %v1531 = vrot.slane %v1397, %v1530
        %v1532 = vlaneseq
        %v1533 = vshrl.u32 %v1532, 7
        %v1534 = vsub.s32 0, %v1533
        %v1535 = vrot.slane %v1398, %v1534
        %v1536 = vmul.f32 %v1491, %v1523
        %v1537 = vmul.f32 %v1491, %v1527
        %v1538 = vmul.f32 %v1491, %v1531
        %v1539 = vmul.f32 %v1491, %v1535
        %v1540 = vmul.f32 %v1492, %v1523
        %v1541 = vmul.f32 %v1493, %v1527
        %v1542 = vmul.f32 %v1494, %v1531
        %v1543 = vmul.f32 %v1495, %v1535
        %v1544 = vmul.f32 %v1496, %v1523
        %v1545 = vmul.f32 %v1497, %v1527
        %v1546 = vmul.f32 %v1498, %v1531
        %v1547 = vmul.f32 %v1499, %v1535
        %v1548 = vmul.f32 %v1500, %v1523
        %v1549 = vmul.f32 %v1501, %v1527
        %v1550 = vmul.f32 %v1502, %v1531
        %v1551 = vmul.f32 %v1503, %v1535
        %v1552 = vmul.f32 %v1504, %v1523
        %v1553 = vmul.f32 %v1505, %v1527
        %v1554 = vmul.f32 %v1506, %v1531
        %v1555 = vmul.f32 %v1507, %v1535
        %v1556 = vmul.f32 %v1508, %v1523
        %v1557 = vmul.f32 %v1509, %v1527
        %v1558 = vmul.f32 %v1510, %v1531
        %v1559 = vmul.f32 %v1511, %v1535
        %v1560 = vmul.f32 %v1512, %v1523
        %v1561 = vmul.f32 %v1513, %v1527
        %v1562 = vmul.f32 %v1514, %v1531
        %v1563 = vmul.f32 %v1515, %v1535
        %v1564 = vmul.f32 %v1516, %v1523
        %v1565 = vmul.f32 %v1517, %v1527
        %v1566 = vmul.f32 %v1518, %v1531
        %v1567 = vmul.f32 %v1519, %v1535
        %v1568 = vadd.f32 %v1536, 0.0
        %v1569 = vadd.f32 %v1537, 0.0
        %v1570 = vadd.f32 %v1538, 0.0
        %v1571 = vadd.f32 %v1539, 0.0
        %v1572 = vadd.f32 %v1540, 0.0
        %v1573 = vadd.f32 %v1541, 0.0
        %v1574 = vadd.f32 %v1542, 0.0
        %v1575 = vadd.f32 %v1543, 0.0
        %v1576 = vadd.f32 %v1544, 0.0
        %v1577 = vadd.f32 %v1545, 0.0
        %v1578 = vadd.f32 %v1546, 0.0
        %v1579 = vadd.f32 %v1547, 0.0
        %v1580 = vadd.f32 %v1548, 0.0
        %v1581 = vadd.f32 %v1549, 0.0
        %v1582 = vadd.f32 %v1550, 0.0
        %v1583 = vadd.f32 %v1551, 0.0
        %v1584 = vadd.f32 %v1552, 0.0
        %v1585 = vadd.f32 %v1553, 0.0
        %v1586 = vadd.f32 %v1554, 0.0
        %v1587 = vadd.f32 %v1555, 0.0
        %v1588 = vadd.f32 %v1556, 0.0
        %v1589 = vadd.f32 %v1557, 0.0
        %v1590 = vadd.f32 %v1558, 0.0
        %v1591 = vadd.f32 %v1559, 0.0
        %v1592 = vadd.f32 %v1560, 0.0
        %v1593 = vadd.f32 %v1561, 0.0
        %v1594 = vadd.f32 %v1562, 0.0
        %v1595 = vadd.f32 %v1563, 0.0
        %v1596 = vadd.f32 %v1564, 0.0
        %v1597 = vadd.f32 %v1565, 0.0
        %v1598 = vadd.f32 %v1566, 0.0
        %v1599 = vadd.f32 %v1567, 0.0
        %v1600 = vlaneseq
        %v1601 = vshrl.u32 %v1600, 7
        %v1602 = vsub.s32 1, %v1601
        %v1603 = vrot.slane %v1395, %v1602
        %v1604 = vlaneseq
        %v1605 = vshrl.u32 %v1604, 7
        %v1606 = vsub.s32 1, %v1605
        %v1607 = vrot.slane %v1396, %v1606
        %v1608 = vlaneseq
        %v1609 = vshrl.u32 %v1608, 7
        %v1610 = vsub.s32 1, %v1609
        %v1611 = vrot.slane %v1397, %v1610
        %v1612 = vlaneseq
        %v1613 = vshrl.u32 %v1612, 7
        %v1614 = vsub.s32 1, %v1613
        %v1615 = vrot.slane %v1398, %v1614
        %v1616 = vmul.f32 %v1603, 0.0
        %v1617 = vmul.f32 %v1607, 0.0
        %v1618 = vmul.f32 %v1611, 0.0
        %v1619 = vmul.f32 %v1615, 0.0
        %v1620 = vmul.f32 %v1363, %v1603
        %v1621 = vmul.f32 %v1364, %v1607
        %v1622 = vmul.f32 %v1365, %v1611
        %v1623 = vmul.f32 %v1366, %v1615
        %v1624 = vmul.f32 %v1367, %v1603
        %v1625 = vmul.f32 %v1368, %v1607
        %v1626 = vmul.f32 %v1369, %v1611
        %v1627 = vmul.f32 %v1370, %v1615
        %v1628 = vmul.f32 %v1371, %v1603
        %v1629 = vmul.f32 %v1372, %v1607
        %v1630 = vmul.f32 %v1373, %v1611
        %v1631 = vmul.f32 %v1374, %v1615
        %v1632 = vmul.f32 %v1375, %v1603
        %v1633 = vmul.f32 %v1376, %v1607
        %v1634 = vmul.f32 %v1377, %v1611
        %v1635 = vmul.f32 %v1378, %v1615
        %v1636 = vmul.f32 %v1379, %v1603
        %v1637 = vmul.f32 %v1380, %v1607
        %v1638 = vmul.f32 %v1381, %v1611
        %v1639 = vmul.f32 %v1382, %v1615
        %v1640 = vmul.f32 %v1383, %v1603
        %v1641 = vmul.f32 %v1384, %v1607
        %v1642 = vmul.f32 %v1385, %v1611
        %v1643 = vmul.f32 %v1386, %v1615
        %v1644 = vmul.f32 %v1387, %v1603
        %v1645 = vmul.f32 %v1388, %v1607
        %v1646 = vmul.f32 %v1389, %v1611
        %v1647 = vmul.f32 %v1390, %v1615
        %v1648 = vadd.f32 %v1568, %v1616
        %v1649 = vadd.f32 %v1569, %v1617
        %v1650 = vadd.f32 %v1570, %v1618
        %v1651 = vadd.f32 %v1571, %v1619
        %v1652 = vadd.f32 %v1572, %v1620
        %v1653 = vadd.f32 %v1573, %v1621
        %v1654 = vadd.f32 %v1574, %v1622
        %v1655 = vadd.f32 %v1575, %v1623
        %v1656 = vadd.f32 %v1576, %v1624
        %v1657 = vadd.f32 %v1577, %v1625
        %v1658 = vadd.f32 %v1578, %v1626
        %v1659 = vadd.f32 %v1579, %v1627
        %v1660 = vadd.f32 %v1580, %v1628
        %v1661 = vadd.f32 %v1581, %v1629
        %v1662 = vadd.f32 %v1582, %v1630
        %v1663 = vadd.f32 %v1583, %v1631
        %v1664 = vadd.f32 %v1584, %v1632
        %v1665 = vadd.f32 %v1585, %v1633
        %v1666 = vadd.f32 %v1586, %v1634
        %v1667 = vadd.f32 %v1587, %v1635
        %v1668 = vadd.f32 %v1588, %v1636
        %v1669 = vadd.f32 %v1589, %v1637
        %v1670 = vadd.f32 %v1590, %v1638
        %v1671 = vadd.f32 %v1591, %v1639
        %v1672 = vadd.f32 %v1592, %v1640
        %v1673 = vadd.f32 %v1593, %v1641
        %v1674 = vadd.f32 %v1594, %v1642
        %v1675 = vadd.f32 %v1595, %v1643
        %v1676 = vadd.f32 %v1596, %v1644
        %v1677 = vadd.f32 %v1597, %v1645
        %v1678 = vadd.f32 %v1598, %v1646
        %v1679 = vadd.f32 %v1599, %v1647
        %v1680 = vrot.slane 0.0, 1
        %v1681 = vrot.slane %v1363, 1
        %v1682 = vrot.slane %v1364, 1
        %v1683 = vrot.slane %v1365, 1
        %v1684 = vrot.slane %v1366, 1
        %v1685 = vrot.slane %v1367, 1
        %v1686 = vrot.slane %v1368, 1
        %v1687 = vrot.slane %v1369, 1
        %v1688 = vrot.slane %v1370, 1
        %v1689 = vrot.slane %v1371, 1
        %v1690 = vrot.slane %v1372, 1
        %v1691 = vrot.slane %v1373, 1
        %v1692 = vrot.slane %v1374, 1
        %v1693 = vrot.slane %v1375, 1
        %v1694 = vrot.slane %v1376, 1
        %v1695 = vrot.slane %v1377, 1
        %v1696 = vrot.slane %v1378, 1
        %v1697 = vrot.slane %v1379, 1
        %v1698 = vrot.slane %v1380, 1
        %v1699 = vrot.slane %v1381, 1
        %v1700 = vrot.slane %v1382, 1
        %v1701 = vrot.slane %v1383, 1
        %v1702 = vrot.slane %v1384, 1
        %v1703 = vrot.slane %v1385, 1
        %v1704 = vrot.slane %v1386, 1
        %v1705 = vrot.slane %v1387, 1
        %v1706 = vrot.slane %v1388, 1
        %v1707 = vrot.slane %v1389, 1
        %v1708 = vrot.slane %v1390, 1
        %vm1738 = vcmask 1046528
        %v1739 = vsel %vm1738, %v1680, 0.0
        %v1740 = vsel %vm1738, %v1681, 0.0
        %v1741 = vsel %vm1738, %v1682, 0.0
        %v1742 = vsel %vm1738, %v1683, 0.0
        %v1743 = vsel %vm1738, %v1684, 0.0
        %v1744 = vsel %vm1738, %v1685, 0.0
        %v1745 = vsel %vm1738, %v1686, 0.0
        %v1746 = vsel %vm1738, %v1687, 0.0
        %v1747 = vsel %vm1738, %v1688, 0.0
        %v1748 = vsel %vm1738, %v1689, 0.0
        %v1749 = vsel %vm1738, %v1690, 0.0
        %v1750 = vsel %vm1738, %v1691, 0.0
        %v1751 = vsel %vm1738, %v1692, 0.0
        %v1752 = vsel %vm1738, %v1693, 0.0
        %v1753 = vsel %vm1738, %v1694, 0.0
        %v1754 = vsel %vm1738, %v1695, 0.0
        %v1755 = vsel %vm1738, %v1696, 0.0
        %v1756 = vsel %vm1738, %v1697, 0.0
        %v1757 = vsel %vm1738, %v1698, 0.0
        %v1758 = vsel %vm1738, %v1699, 0.0
        %v1759 = vsel %vm1738, %v1700, 0.0
        %v1760 = vsel %vm1738, %v1701, 0.0
        %v1761 = vsel %vm1738, %v1702, 0.0
        %v1762 = vsel %vm1738, %v1703, 0.0
        %v1763 = vsel %vm1738, %v1704, 0.0
        %v1764 = vsel %vm1738, %v1705, 0.0
        %v1765 = vsel %vm1738, %v1706, 0.0
        %v1766 = vsel %vm1738, %v1707, 0.0
        %v1767 = vsel %vm1738, %v1708, 0.0
        %v1768 = vlaneseq
        %v1769 = vshrl.u32 %v1768, 7
        %v1770 = vsub.s32 2, %v1769
        %v1771 = vrot.slane %v1395, %v1770
        %v1772 = vlaneseq
        %v1773 = vshrl.u32 %v1772, 7
        %v1774 = vsub.s32 2, %v1773
        %v1775 = vrot.slane %v1396, %v1774
        %v1776 = vlaneseq
        %v1777 = vshrl.u32 %v1776, 7
        %v1778 = vsub.s32 2, %v1777
        %v1779 = vrot.slane %v1397, %v1778
        %v1780 = vlaneseq
        %v1781 = vshrl.u32 %v1780, 7
        %v1782 = vsub.s32 2, %v1781
        %v1783 = vrot.slane %v1398, %v1782
        %v1784 = vmul.f32 %v1739, %v1771
        %v1785 = vmul.f32 %v1739, %v1775
        %v1786 = vmul.f32 %v1739, %v1779
        %v1787 = vmul.f32 %v1739, %v1783
        %v1788 = vmul.f32 %v1740, %v1771
        %v1789 = vmul.f32 %v1741, %v1775
        %v1790 = vmul.f32 %v1742, %v1779
        %v1791 = vmul.f32 %v1743, %v1783
        %v1792 = vmul.f32 %v1744, %v1771
        %v1793 = vmul.f32 %v1745, %v1775
        %v1794 = vmul.f32 %v1746, %v1779
        %v1795 = vmul.f32 %v1747, %v1783
        %v1796 = vmul.f32 %v1748, %v1771
        %v1797 = vmul.f32 %v1749, %v1775
        %v1798 = vmul.f32 %v1750, %v1779
        %v1799 = vmul.f32 %v1751, %v1783
        %v1800 = vmul.f32 %v1752, %v1771
        %v1801 = vmul.f32 %v1753, %v1775
        %v1802 = vmul.f32 %v1754, %v1779
        %v1803 = vmul.f32 %v1755, %v1783
        %v1804 = vmul.f32 %v1756, %v1771
        %v1805 = vmul.f32 %v1757, %v1775
        %v1806 = vmul.f32 %v1758, %v1779
        %v1807 = vmul.f32 %v1759, %v1783
        %v1808 = vmul.f32 %v1760, %v1771
        %v1809 = vmul.f32 %v1761, %v1775
        %v1810 = vmul.f32 %v1762, %v1779
        %v1811 = vmul.f32 %v1763, %v1783
        %v1812 = vmul.f32 %v1764, %v1771
        %v1813 = vmul.f32 %v1765, %v1775
        %v1814 = vmul.f32 %v1766, %v1779
        %v1815 = vmul.f32 %v1767, %v1783
        %v1816 = vadd.f32 %v1648, %v1784
        %v1817 = vadd.f32 %v1649, %v1785
        %v1818 = vadd.f32 %v1650, %v1786
        %v1819 = vadd.f32 %v1651, %v1787
        %v1820 = vadd.f32 %v1652, %v1788
        %v1821 = vadd.f32 %v1653, %v1789
        %v1822 = vadd.f32 %v1654, %v1790
        %v1823 = vadd.f32 %v1655, %v1791
        %v1824 = vadd.f32 %v1656, %v1792
        %v1825 = vadd.f32 %v1657, %v1793
        %v1826 = vadd.f32 %v1658, %v1794
        %v1827 = vadd.f32 %v1659, %v1795
        %v1828 = vadd.f32 %v1660, %v1796
        %v1829 = vadd.f32 %v1661, %v1797
        %v1830 = vadd.f32 %v1662, %v1798
        %v1831 = vadd.f32 %v1663, %v1799
        %v1832 = vadd.f32 %v1664, %v1800
        %v1833 = vadd.f32 %v1665, %v1801
        %v1834 = vadd.f32 %v1666, %v1802
        %v1835 = vadd.f32 %v1667, %v1803
        %v1836 = vadd.f32 %v1668, %v1804
        %v1837 = vadd.f32 %v1669, %v1805
        %v1838 = vadd.f32 %v1670, %v1806
        %v1839 = vadd.f32 %v1671, %v1807
        %v1840 = vadd.f32 %v1672, %v1808
        %v1841 = vadd.f32 %v1673, %v1809
        %v1842 = vadd.f32 %v1674, %v1810
        %v1843 = vadd.f32 %v1675, %v1811
        %v1844 = vadd.f32 %v1676, %v1812
        %v1845 = vadd.f32 %v1677, %v1813
        %v1846 = vadd.f32 %v1678, %v1814
        %v1847 = vadd.f32 %v1679, %v1815
        %v1852 = vrot.slane %v1391, 7
        %v1853 = vrot.slane %v1392, 7
        %v1854 = vrot.slane %v1393, 7
        %v1855 = vrot.slane %v1394, 7
        %v1860 = vsel %vm1490, 0.0, %v1852
        %v1861 = vsel %vm1490, 0.0, %v1853
        %v1862 = vsel %vm1490, 0.0, %v1854
        %v1863 = vsel %vm1490, 0.0, %v1855
        %v1864 = vlaneseq
        %v1865 = vshrl.u32 %v1864, 7
        %v1866 = vsub.s32 3, %v1865
        %v1867 = vrot.slane %v1395, %v1866
        %v1868 = vlaneseq
        %v1869 = vshrl.u32 %v1868, 7
        %v1870 = vsub.s32 3, %v1869
        %v1871 = vrot.slane %v1396, %v1870
        %v1872 = vlaneseq
        %v1873 = vshrl.u32 %v1872, 7
        %v1874 = vsub.s32 3, %v1873
        %v1875 = vrot.slane %v1397, %v1874
        %v1876 = vlaneseq
        %v1877 = vshrl.u32 %v1876, 7
        %v1878 = vsub.s32 3, %v1877
        %v1879 = vrot.slane %v1398, %v1878
        %v1880 = vmul.f32 %v1492, %v1867
        %v1881 = vmul.f32 %v1493, %v1871
        %v1882 = vmul.f32 %v1494, %v1875
        %v1883 = vmul.f32 %v1495, %v1879
        %v1884 = vmul.f32 %v1496, %v1867
        %v1885 = vmul.f32 %v1497, %v1871
        %v1886 = vmul.f32 %v1498, %v1875
        %v1887 = vmul.f32 %v1499, %v1879
        %v1888 = vmul.f32 %v1500, %v1867
        %v1889 = vmul.f32 %v1501, %v1871
        %v1890 = vmul.f32 %v1502, %v1875
        %v1891 = vmul.f32 %v1503, %v1879
        %v1892 = vmul.f32 %v1504, %v1867
        %v1893 = vmul.f32 %v1505, %v1871
        %v1894 = vmul.f32 %v1506, %v1875
        %v1895 = vmul.f32 %v1507, %v1879
        %v1896 = vmul.f32 %v1508, %v1867
        %v1897 = vmul.f32 %v1509, %v1871
        %v1898 = vmul.f32 %v1510, %v1875
        %v1899 = vmul.f32 %v1511, %v1879
        %v1900 = vmul.f32 %v1512, %v1867
        %v1901 = vmul.f32 %v1513, %v1871
        %v1902 = vmul.f32 %v1514, %v1875
        %v1903 = vmul.f32 %v1515, %v1879
        %v1904 = vmul.f32 %v1516, %v1867
        %v1905 = vmul.f32 %v1517, %v1871
        %v1906 = vmul.f32 %v1518, %v1875
        %v1907 = vmul.f32 %v1519, %v1879
        %v1908 = vmul.f32 %v1860, %v1867
        %v1909 = vmul.f32 %v1861, %v1871
        %v1910 = vmul.f32 %v1862, %v1875
        %v1911 = vmul.f32 %v1863, %v1879
        %v1912 = vadd.f32 %v1816, %v1880
        %v1913 = vadd.f32 %v1817, %v1881
        %v1914 = vadd.f32 %v1818, %v1882
        %v1915 = vadd.f32 %v1819, %v1883
        %v1916 = vadd.f32 %v1820, %v1884
        %v1917 = vadd.f32 %v1821, %v1885
        %v1918 = vadd.f32 %v1822, %v1886
        %v1919 = vadd.f32 %v1823, %v1887
        %v1920 = vadd.f32 %v1824, %v1888
        %v1921 = vadd.f32 %v1825, %v1889
        %v1922 = vadd.f32 %v1826, %v1890
        %v1923 = vadd.f32 %v1827, %v1891
        %v1924 = vadd.f32 %v1828, %v1892
        %v1925 = vadd.f32 %v1829, %v1893
        %v1926 = vadd.f32 %v1830, %v1894
        %v1927 = vadd.f32 %v1831, %v1895
        %v1928 = vadd.f32 %v1832, %v1896
        %v1929 = vadd.f32 %v1833, %v1897
        %v1930 = vadd.f32 %v1834, %v1898
        %v1931 = vadd.f32 %v1835, %v1899
        %v1932 = vadd.f32 %v1836, %v1900
        %v1933 = vadd.f32 %v1837, %v1901
        %v1934 = vadd.f32 %v1838, %v1902
        %v1935 = vadd.f32 %v1839, %v1903
        %v1936 = vadd.f32 %v1840, %v1904
        %v1937 = vadd.f32 %v1841, %v1905
        %v1938 = vadd.f32 %v1842, %v1906
        %v1939 = vadd.f32 %v1843, %v1907
        %v1940 = vadd.f32 %v1844, %v1908
        %v1941 = vadd.f32 %v1845, %v1909
        %v1942 = vadd.f32 %v1846, %v1910
        %v1943 = vadd.f32 %v1847, %v1911
        %v1944 = vlaneseq
        %v1945 = vshrl.u32 %v1944, 7
        %v1946 = vsub.s32 4, %v1945
        %v1947 = vrot.slane %v1395, %v1946
        %v1948 = vlaneseq
        %v1949 = vshrl.u32 %v1948, 7
        %v1950 = vsub.s32 4, %v1949
        %v1951 = vrot.slane %v1396, %v1950
        %v1952 = vlaneseq
        %v1953 = vshrl.u32 %v1952, 7
        %v1954 = vsub.s32 4, %v1953
        %v1955 = vrot.slane %v1397, %v1954
        %v1956 = vlaneseq
        %v1957 = vshrl.u32 %v1956, 7
        %v1958 = vsub.s32 4, %v1957
        %v1959 = vrot.slane %v1398, %v1958
        %v1960 = vmul.f32 %v1363, %v1947
        %v1961 = vmul.f32 %v1364, %v1951
        %v1962 = vmul.f32 %v1365, %v1955
        %v1963 = vmul.f32 %v1366, %v1959
        %v1964 = vmul.f32 %v1367, %v1947
        %v1965 = vmul.f32 %v1368, %v1951
        %v1966 = vmul.f32 %v1369, %v1955
        %v1967 = vmul.f32 %v1370, %v1959
        %v1968 = vmul.f32 %v1371, %v1947
        %v1969 = vmul.f32 %v1372, %v1951
        %v1970 = vmul.f32 %v1373, %v1955
        %v1971 = vmul.f32 %v1374, %v1959
        %v1972 = vmul.f32 %v1375, %v1947
        %v1973 = vmul.f32 %v1376, %v1951
        %v1974 = vmul.f32 %v1377, %v1955
        %v1975 = vmul.f32 %v1378, %v1959
        %v1976 = vmul.f32 %v1379, %v1947
        %v1977 = vmul.f32 %v1380, %v1951
        %v1978 = vmul.f32 %v1381, %v1955
        %v1979 = vmul.f32 %v1382, %v1959
        %v1980 = vmul.f32 %v1383, %v1947
        %v1981 = vmul.f32 %v1384, %v1951
        %v1982 = vmul.f32 %v1385, %v1955
        %v1983 = vmul.f32 %v1386, %v1959
        %v1984 = vmul.f32 %v1387, %v1947
        %v1985 = vmul.f32 %v1388, %v1951
        %v1986 = vmul.f32 %v1389, %v1955
        %v1987 = vmul.f32 %v1390, %v1959
        %v1988 = vmul.f32 %v1391, %v1947
        %v1989 = vmul.f32 %v1392, %v1951
        %v1990 = vmul.f32 %v1393, %v1955
        %v1991 = vmul.f32 %v1394, %v1959
        %v1992 = vadd.f32 %v1912, %v1960
        %v1993 = vadd.f32 %v1913, %v1961
        %v1994 = vadd.f32 %v1914, %v1962
        %v1995 = vadd.f32 %v1915, %v1963
        %v1996 = vadd.f32 %v1916, %v1964
        %v1997 = vadd.f32 %v1917, %v1965
        %v1998 = vadd.f32 %v1918, %v1966
        %v1999 = vadd.f32 %v1919, %v1967
        %v2000 = vadd.f32 %v1920, %v1968
        %v2001 = vadd.f32 %v1921, %v1969
        %v2002 = vadd.f32 %v1922, %v1970
        %v2003 = vadd.f32 %v1923, %v1971
        %v2004 = vadd.f32 %v1924, %v1972
        %v2005 = vadd.f32 %v1925, %v1973
        %v2006 = vadd.f32 %v1926, %v1974
        %v2007 = vadd.f32 %v1927, %v1975
        %v2008 = vadd.f32 %v1928, %v1976
        %v2009 = vadd.f32 %v1929, %v1977
        %v2010 = vadd.f32 %v1930, %v1978
        %v2011 = vadd.f32 %v1931, %v1979
        %v2012 = vadd.f32 %v1932, %v1980
        %v2013 = vadd.f32 %v1933, %v1981
        %v2014 = vadd.f32 %v1934, %v1982
        %v2015 = vadd.f32 %v1935, %v1983
        %v2016 = vadd.f32 %v1936, %v1984
        %v2017 = vadd.f32 %v1937, %v1985
        %v2018 = vadd.f32 %v1938, %v1986
        %v2019 = vadd.f32 %v1939, %v1987
        %v2020 = vadd.f32 %v1940, %v1988
        %v2021 = vadd.f32 %v1941, %v1989
        %v2022 = vadd.f32 %v1942, %v1990
        %v2023 = vadd.f32 %v1943, %v1991
        %v2024 = vrot.slane %v1391, 1
        %v2025 = vrot.slane %v1392, 1
        %v2026 = vrot.slane %v1393, 1
        %v2027 = vrot.slane %v1394, 1
        %v2032 = vsel %vm1738, %v2024, 0.0
        %v2033 = vsel %vm1738, %v2025, 0.0
        %v2034 = vsel %vm1738, %v2026, 0.0
        %v2035 = vsel %vm1738, %v2027, 0.0
        %v2036 = vlaneseq
        %v2037 = vshrl.u32 %v2036, 7
        %v2038 = vsub.s32 5, %v2037
        %v2039 = vrot.slane %v1395, %v2038
        %v2040 = vlaneseq
        %v2041 = vshrl.u32 %v2040, 7
        %v2042 = vsub.s32 5, %v2041
        %v2043 = vrot.slane %v1396, %v2042
        %v2044 = vlaneseq
        %v2045 = vshrl.u32 %v2044, 7
        %v2046 = vsub.s32 5, %v2045
        %v2047 = vrot.slane %v1397, %v2046
        %v2048 = vlaneseq
        %v2049 = vshrl.u32 %v2048, 7
        %v2050 = vsub.s32 5, %v2049
        %v2051 = vrot.slane %v1398, %v2050
        %v2052 = vmul.f32 %v1740, %v2039
        %v2053 = vmul.f32 %v1741, %v2043
        %v2054 = vmul.f32 %v1742, %v2047
        %v2055 = vmul.f32 %v1743, %v2051
        %v2056 = vmul.f32 %v1744, %v2039
        %v2057 = vmul.f32 %v1745, %v2043
        %v2058 = vmul.f32 %v1746, %v2047
        %v2059 = vmul.f32 %v1747, %v2051
        %v2060 = vmul.f32 %v1748, %v2039
        %v2061 = vmul.f32 %v1749, %v2043
        %v2062 = vmul.f32 %v1750, %v2047
        %v2063 = vmul.f32 %v1751, %v2051
        %v2064 = vmul.f32 %v1752, %v2039
        %v2065 = vmul.f32 %v1753, %v2043
        %v2066 = vmul.f32 %v1754, %v2047
        %v2067 = vmul.f32 %v1755, %v2051
        %v2068 = vmul.f32 %v1756, %v2039
        %v2069 = vmul.f32 %v1757, %v2043
        %v2070 = vmul.f32 %v1758, %v2047
        %v2071 = vmul.f32 %v1759, %v2051
        %v2072 = vmul.f32 %v1760, %v2039
        %v2073 = vmul.f32 %v1761, %v2043
        %v2074 = vmul.f32 %v1762, %v2047
        %v2075 = vmul.f32 %v1763, %v2051
        %v2076 = vmul.f32 %v1764, %v2039
        %v2077 = vmul.f32 %v1765, %v2043
        %v2078 = vmul.f32 %v1766, %v2047
        %v2079 = vmul.f32 %v1767, %v2051
        %v2080 = vmul.f32 %v2032, %v2039
        %v2081 = vmul.f32 %v2033, %v2043
        %v2082 = vmul.f32 %v2034, %v2047
        %v2083 = vmul.f32 %v2035, %v2051
        %v2084 = vadd.f32 %v1992, %v2052
        %v2085 = vadd.f32 %v1993, %v2053
        %v2086 = vadd.f32 %v1994, %v2054
        %v2087 = vadd.f32 %v1995, %v2055
        %v2088 = vadd.f32 %v1996, %v2056
        %v2089 = vadd.f32 %v1997, %v2057
        %v2090 = vadd.f32 %v1998, %v2058
        %v2091 = vadd.f32 %v1999, %v2059
        %v2092 = vadd.f32 %v2000, %v2060
        %v2093 = vadd.f32 %v2001, %v2061
        %v2094 = vadd.f32 %v2002, %v2062
        %v2095 = vadd.f32 %v2003, %v2063
        %v2096 = vadd.f32 %v2004, %v2064
        %v2097 = vadd.f32 %v2005, %v2065
        %v2098 = vadd.f32 %v2006, %v2066
        %v2099 = vadd.f32 %v2007, %v2067
        %v2100 = vadd.f32 %v2008, %v2068
        %v2101 = vadd.f32 %v2009, %v2069
        %v2102 = vadd.f32 %v2010, %v2070
        %v2103 = vadd.f32 %v2011, %v2071
        %v2104 = vadd.f32 %v2012, %v2072
        %v2105 = vadd.f32 %v2013, %v2073
        %v2106 = vadd.f32 %v2014, %v2074
        %v2107 = vadd.f32 %v2015, %v2075
        %v2108 = vadd.f32 %v2016, %v2076
        %v2109 = vadd.f32 %v2017, %v2077
        %v2110 = vadd.f32 %v2018, %v2078
        %v2111 = vadd.f32 %v2019, %v2079
        %v2112 = vadd.f32 %v2020, %v2080
        %v2113 = vadd.f32 %v2021, %v2081
        %v2114 = vadd.f32 %v2022, %v2082
        %v2115 = vadd.f32 %v2023, %v2083
        %v2116 = vlaneseq
        %v2117 = vshrl.u32 %v2116, 7
        %v2118 = vsub.s32 6, %v2117
        %v2119 = vrot.slane %v1395, %v2118
        %v2120 = vlaneseq
        %v2121 = vshrl.u32 %v2120, 7
        %v2122 = vsub.s32 6, %v2121
        %v2123 = vrot.slane %v1396, %v2122
        %v2124 = vlaneseq
        %v2125 = vshrl.u32 %v2124, 7
        %v2126 = vsub.s32 6, %v2125
        %v2127 = vrot.slane %v1397, %v2126
        %v2128 = vlaneseq
        %v2129 = vshrl.u32 %v2128, 7
        %v2130 = vsub.s32 6, %v2129
        %v2131 = vrot.slane %v1398, %v2130
        %v2132 = vmul.f32 %v1496, %v2119
        %v2133 = vmul.f32 %v1497, %v2123
        %v2134 = vmul.f32 %v1498, %v2127
        %v2135 = vmul.f32 %v1499, %v2131
        %v2136 = vmul.f32 %v1500, %v2119
        %v2137 = vmul.f32 %v1501, %v2123
        %v2138 = vmul.f32 %v1502, %v2127
        %v2139 = vmul.f32 %v1503, %v2131
        %v2140 = vmul.f32 %v1504, %v2119
        %v2141 = vmul.f32 %v1505, %v2123
        %v2142 = vmul.f32 %v1506, %v2127
        %v2143 = vmul.f32 %v1507, %v2131
        %v2144 = vmul.f32 %v1508, %v2119
        %v2145 = vmul.f32 %v1509, %v2123
        %v2146 = vmul.f32 %v1510, %v2127
        %v2147 = vmul.f32 %v1511, %v2131
        %v2148 = vmul.f32 %v1512, %v2119
        %v2149 = vmul.f32 %v1513, %v2123
        %v2150 = vmul.f32 %v1514, %v2127
        %v2151 = vmul.f32 %v1515, %v2131
        %v2152 = vmul.f32 %v1516, %v2119
        %v2153 = vmul.f32 %v1517, %v2123
        %v2154 = vmul.f32 %v1518, %v2127
        %v2155 = vmul.f32 %v1519, %v2131
        %v2156 = vmul.f32 %v1860, %v2119
        %v2157 = vmul.f32 %v1861, %v2123
        %v2158 = vmul.f32 %v1862, %v2127
        %v2159 = vmul.f32 %v1863, %v2131
        %v2160 = vmul.f32 %v1491, %v2119
        %v2161 = vmul.f32 %v1491, %v2123
        %v2162 = vmul.f32 %v1491, %v2127
        %v2163 = vmul.f32 %v1491, %v2131
        %v2164 = vadd.f32 %v2084, %v2132
        %v2165 = vadd.f32 %v2085, %v2133
        %v2166 = vadd.f32 %v2086, %v2134
        %v2167 = vadd.f32 %v2087, %v2135
        %v2168 = vadd.f32 %v2088, %v2136
        %v2169 = vadd.f32 %v2089, %v2137
        %v2170 = vadd.f32 %v2090, %v2138
        %v2171 = vadd.f32 %v2091, %v2139
        %v2172 = vadd.f32 %v2092, %v2140
        %v2173 = vadd.f32 %v2093, %v2141
        %v2174 = vadd.f32 %v2094, %v2142
        %v2175 = vadd.f32 %v2095, %v2143
        %v2176 = vadd.f32 %v2096, %v2144
        %v2177 = vadd.f32 %v2097, %v2145
        %v2178 = vadd.f32 %v2098, %v2146
        %v2179 = vadd.f32 %v2099, %v2147
        %v2180 = vadd.f32 %v2100, %v2148
        %v2181 = vadd.f32 %v2101, %v2149
        %v2182 = vadd.f32 %v2102, %v2150
        %v2183 = vadd.f32 %v2103, %v2151
        %v2184 = vadd.f32 %v2104, %v2152
        %v2185 = vadd.f32 %v2105, %v2153
        %v2186 = vadd.f32 %v2106, %v2154
        %v2187 = vadd.f32 %v2107, %v2155
        %v2188 = vadd.f32 %v2108, %v2156
        %v2189 = vadd.f32 %v2109, %v2157
        %v2190 = vadd.f32 %v2110, %v2158
        %v2191 = vadd.f32 %v2111, %v2159
        %v2192 = vadd.f32 %v2112, %v2160
        %v2193 = vadd.f32 %v2113, %v2161
        %v2194 = vadd.f32 %v2114, %v2162
        %v2195 = vadd.f32 %v2115, %v2163
        %v2196 = vlaneseq
        %v2197 = vshrl.u32 %v2196, 7
        %v2198 = vsub.s32 7, %v2197
        %v2199 = vrot.slane %v1395, %v2198
        %v2200 = vlaneseq
        %v2201 = vshrl.u32 %v2200, 7
        %v2202 = vsub.s32 7, %v2201
        %v2203 = vrot.slane %v1396, %v2202
        %v2204 = vlaneseq
        %v2205 = vshrl.u32 %v2204, 7
        %v2206 = vsub.s32 7, %v2205
        %v2207 = vrot.slane %v1397, %v2206
        %v2208 = vlaneseq
        %v2209 = vshrl.u32 %v2208, 7
        %v2210 = vsub.s32 7, %v2209
        %v2211 = vrot.slane %v1398, %v2210
        %v2212 = vmul.f32 %v1367, %v2199
        %v2213 = vmul.f32 %v1368, %v2203
        %v2214 = vmul.f32 %v1369, %v2207
        %v2215 = vmul.f32 %v1370, %v2211
        %v2216 = vmul.f32 %v1371, %v2199
        %v2217 = vmul.f32 %v1372, %v2203
        %v2218 = vmul.f32 %v1373, %v2207
        %v2219 = vmul.f32 %v1374, %v2211
        %v2220 = vmul.f32 %v1375, %v2199
        %v2221 = vmul.f32 %v1376, %v2203
        %v2222 = vmul.f32 %v1377, %v2207
        %v2223 = vmul.f32 %v1378, %v2211
        %v2224 = vmul.f32 %v1379, %v2199
        %v2225 = vmul.f32 %v1380, %v2203
        %v2226 = vmul.f32 %v1381, %v2207
        %v2227 = vmul.f32 %v1382, %v2211
        %v2228 = vmul.f32 %v1383, %v2199
        %v2229 = vmul.f32 %v1384, %v2203
        %v2230 = vmul.f32 %v1385, %v2207
        %v2231 = vmul.f32 %v1386, %v2211
        %v2232 = vmul.f32 %v1387, %v2199
        %v2233 = vmul.f32 %v1388, %v2203
        %v2234 = vmul.f32 %v1389, %v2207
        %v2235 = vmul.f32 %v1390, %v2211
        %v2236 = vmul.f32 %v1391, %v2199
        %v2237 = vmul.f32 %v1392, %v2203
        %v2238 = vmul.f32 %v1393, %v2207
        %v2239 = vmul.f32 %v1394, %v2211
        %v2240 = vmul.f32 %v2199, 0.0
        %v2241 = vmul.f32 %v2203, 0.0
        %v2242 = vmul.f32 %v2207, 0.0
        %v2243 = vmul.f32 %v2211, 0.0
        %v2244 = vadd.f32 %v2164, %v2212
        %v2245 = vadd.f32 %v2165, %v2213
        %v2246 = vadd.f32 %v2166, %v2214
        %v2247 = vadd.f32 %v2167, %v2215
        %v2248 = vadd.f32 %v2168, %v2216
        %v2249 = vadd.f32 %v2169, %v2217
        %v2250 = vadd.f32 %v2170, %v2218
        %v2251 = vadd.f32 %v2171, %v2219
        %v2252 = vadd.f32 %v2172, %v2220
        %v2253 = vadd.f32 %v2173, %v2221
        %v2254 = vadd.f32 %v2174, %v2222
        %v2255 = vadd.f32 %v2175, %v2223
        %v2256 = vadd.f32 %v2176, %v2224
        %v2257 = vadd.f32 %v2177, %v2225
        %v2258 = vadd.f32 %v2178, %v2226
        %v2259 = vadd.f32 %v2179, %v2227
        %v2260 = vadd.f32 %v2180, %v2228
        %v2261 = vadd.f32 %v2181, %v2229
        %v2262 = vadd.f32 %v2182, %v2230
        %v2263 = vadd.f32 %v2183, %v2231
        %v2264 = vadd.f32 %v2184, %v2232
        %v2265 = vadd.f32 %v2185, %v2233
        %v2266 = vadd.f32 %v2186, %v2234
        %v2267 = vadd.f32 %v2187, %v2235
        %v2268 = vadd.f32 %v2188, %v2236
        %v2269 = vadd.f32 %v2189, %v2237
        %v2270 = vadd.f32 %v2190, %v2238
        %v2271 = vadd.f32 %v2191, %v2239
        %v2272 = vadd.f32 %v2192, %v2240
        %v2273 = vadd.f32 %v2193, %v2241
        %v2274 = vadd.f32 %v2194, %v2242
        %v2275 = vadd.f32 %v2195, %v2243
        %v2276 = vlaneseq
        %v2277 = vshrl.u32 %v2276, 7
        %v2278 = vsub.s32 0, %v2277
        %v2279 = vrot.slane %v1399, %v2278
        %v2280 = vlaneseq
        %v2281 = vshrl.u32 %v2280, 7
        %v2282 = vsub.s32 0, %v2281
        %v2283 = vrot.slane %v1400, %v2282
        %v2284 = vlaneseq
        %v2285 = vshrl.u32 %v2284, 7
        %v2286 = vsub.s32 0, %v2285
        %v2287 = vrot.slane %v1401, %v2286
        %v2288 = vlaneseq
        %v2289 = vshrl.u32 %v2288, 7
        %v2290 = vsub.s32 0, %v2289
        %v2291 = vrot.slane %v1402, %v2290
        %v2292 = vmul.f32 %v1744, %v2279
        %v2293 = vmul.f32 %v1745, %v2283
        %v2294 = vmul.f32 %v1746, %v2287
        %v2295 = vmul.f32 %v1747, %v2291
        %v2296 = vmul.f32 %v1748, %v2279
        %v2297 = vmul.f32 %v1749, %v2283
        %v2298 = vmul.f32 %v1750, %v2287
        %v2299 = vmul.f32 %v1751, %v2291
        %v2300 = vmul.f32 %v1752, %v2279
        %v2301 = vmul.f32 %v1753, %v2283
        %v2302 = vmul.f32 %v1754, %v2287
        %v2303 = vmul.f32 %v1755, %v2291
        %v2304 = vmul.f32 %v1756, %v2279
        %v2305 = vmul.f32 %v1757, %v2283
        %v2306 = vmul.f32 %v1758, %v2287
        %v2307 = vmul.f32 %v1759, %v2291
        %v2308 = vmul.f32 %v1760, %v2279
        %v2309 = vmul.f32 %v1761, %v2283
        %v2310 = vmul.f32 %v1762, %v2287
        %v2311 = vmul.f32 %v1763, %v2291
        %v2312 = vmul.f32 %v1764, %v2279
        %v2313 = vmul.f32 %v1765, %v2283
        %v2314 = vmul.f32 %v1766, %v2287
        %v2315 = vmul.f32 %v1767, %v2291
        %v2316 = vmul.f32 %v2032, %v2279
        %v2317 = vmul.f32 %v2033, %v2283
        %v2318 = vmul.f32 %v2034, %v2287
        %v2319 = vmul.f32 %v2035, %v2291
        %v2320 = vmul.f32 %v1739, %v2279
        %v2321 = vmul.f32 %v1739, %v2283
        %v2322 = vmul.f32 %v1739, %v2287
        %v2323 = vmul.f32 %v1739, %v2291
        %v2324 = vadd.f32 %v2244, %v2292
        %v2325 = vadd.f32 %v2245, %v2293
        %v2326 = vadd.f32 %v2246, %v2294
        %v2327 = vadd.f32 %v2247, %v2295
        %v2328 = vadd.f32 %v2248, %v2296
        %v2329 = vadd.f32 %v2249, %v2297
        %v2330 = vadd.f32 %v2250, %v2298
        %v2331 = vadd.f32 %v2251, %v2299
        %v2332 = vadd.f32 %v2252, %v2300
        %v2333 = vadd.f32 %v2253, %v2301
        %v2334 = vadd.f32 %v2254, %v2302
        %v2335 = vadd.f32 %v2255, %v2303
        %v2336 = vadd.f32 %v2256, %v2304
        %v2337 = vadd.f32 %v2257, %v2305
        %v2338 = vadd.f32 %v2258, %v2306
        %v2339 = vadd.f32 %v2259, %v2307
        %v2340 = vadd.f32 %v2260, %v2308
        %v2341 = vadd.f32 %v2261, %v2309
        %v2342 = vadd.f32 %v2262, %v2310
        %v2343 = vadd.f32 %v2263, %v2311
        %v2344 = vadd.f32 %v2264, %v2312
        %v2345 = vadd.f32 %v2265, %v2313
        %v2346 = vadd.f32 %v2266, %v2314
        %v2347 = vadd.f32 %v2267, %v2315
        %v2348 = vadd.f32 %v2268, %v2316
        %v2349 = vadd.f32 %v2269, %v2317
        %v2350 = vadd.f32 %v2270, %v2318
        %v2351 = vadd.f32 %v2271, %v2319
        %v2352 = vadd.f32 %v2272, %v2320
        %v2353 = vadd.f32 %v2273, %v2321
        %v2354 = vadd.f32 %v2274, %v2322
        %v2355 = vadd.f32 %v2275, %v2323
        %v2356 = vlaneseq
        %v2357 = vshrl.u32 %v2356, 7
        %v2358 = vsub.s32 2, %v2357
        %v2359 = vrot.slane %v521, %v2358
        %v2360 = vlaneseq
        %v2361 = vshrl.u32 %v2360, 7
        %v2362 = vsub.s32 2, %v2361
        %v2363 = vrot.slane %v522, %v2362
        %v2364 = vlaneseq
        %v2365 = vshrl.u32 %v2364, 7
        %v2366 = vsub.s32 2, %v2365
        %v2367 = vrot.slane %v523, %v2366
        %v2368 = vlaneseq
        %v2369 = vshrl.u32 %v2368, 7
        %v2370 = vsub.s32 2, %v2369
        %v2371 = vrot.slane %v524, %v2370
        %v2372 = vmul.f32 %v2324, %v2359
        %v2373 = vmul.f32 %v2325, %v2363
        %v2374 = vmul.f32 %v2326, %v2367
        %v2375 = vmul.f32 %v2327, %v2371
        %v2376 = vmul.f32 %v2328, %v2359
        %v2377 = vmul.f32 %v2329, %v2363
        %v2378 = vmul.f32 %v2330, %v2367
        %v2379 = vmul.f32 %v2331, %v2371
        %v2380 = vmul.f32 %v2332, %v2359
        %v2381 = vmul.f32 %v2333, %v2363
        %v2382 = vmul.f32 %v2334, %v2367
        %v2383 = vmul.f32 %v2335, %v2371
        %v2384 = vmul.f32 %v2336, %v2359
        %v2385 = vmul.f32 %v2337, %v2363
        %v2386 = vmul.f32 %v2338, %v2367
        %v2387 = vmul.f32 %v2339, %v2371
        %v2388 = vmul.f32 %v2340, %v2359
        %v2389 = vmul.f32 %v2341, %v2363
        %v2390 = vmul.f32 %v2342, %v2367
        %v2391 = vmul.f32 %v2343, %v2371
        %v2392 = vmul.f32 %v2344, %v2359
        %v2393 = vmul.f32 %v2345, %v2363
        %v2394 = vmul.f32 %v2346, %v2367
        %v2395 = vmul.f32 %v2347, %v2371
        %v2396 = vmul.f32 %v2348, %v2359
        %v2397 = vmul.f32 %v2349, %v2363
        %v2398 = vmul.f32 %v2350, %v2367
        %v2399 = vmul.f32 %v2351, %v2371
        %v2400 = vmul.f32 %v2352, %v2359
        %v2401 = vmul.f32 %v2353, %v2363
        %v2402 = vmul.f32 %v2354, %v2367
        %v2403 = vmul.f32 %v2355, %v2371
        %v2404 = vlaneseq
        %v2405 = vshrl.u32 %v2404, 7
        %v2406 = vsub.s32 3, %v2405
        %v2407 = vrot.slane %v521, %v2406
        %v2408 = vlaneseq
        %v2409 = vshrl.u32 %v2408, 7
        %v2410 = vsub.s32 3, %v2409
        %v2411 = vrot.slane %v522, %v2410
        %v2412 = vlaneseq
        %v2413 = vshrl.u32 %v2412, 7
        %v2414 = vsub.s32 3, %v2413
        %v2415 = vrot.slane %v523, %v2414
        %v2416 = vlaneseq
        %v2417 = vshrl.u32 %v2416, 7
        %v2418 = vsub.s32 3, %v2417
        %v2419 = vrot.slane %v524, %v2418
        %v2420 = vadd.f32 %v2372, %v2407
        %v2421 = vadd.f32 %v2373, %v2411
        %v2422 = vadd.f32 %v2374, %v2415
        %v2423 = vadd.f32 %v2375, %v2419
        %v2424 = vadd.f32 %v2376, %v2407
        %v2425 = vadd.f32 %v2377, %v2411
        %v2426 = vadd.f32 %v2378, %v2415
        %v2427 = vadd.f32 %v2379, %v2419
        %v2428 = vadd.f32 %v2380, %v2407
        %v2429 = vadd.f32 %v2381, %v2411
        %v2430 = vadd.f32 %v2382, %v2415
        %v2431 = vadd.f32 %v2383, %v2419
        %v2432 = vadd.f32 %v2384, %v2407
        %v2433 = vadd.f32 %v2385, %v2411
        %v2434 = vadd.f32 %v2386, %v2415
        %v2435 = vadd.f32 %v2387, %v2419
        %v2436 = vadd.f32 %v2388, %v2407
        %v2437 = vadd.f32 %v2389, %v2411
        %v2438 = vadd.f32 %v2390, %v2415
        %v2439 = vadd.f32 %v2391, %v2419
        %v2440 = vadd.f32 %v2392, %v2407
        %v2441 = vadd.f32 %v2393, %v2411
        %v2442 = vadd.f32 %v2394, %v2415
        %v2443 = vadd.f32 %v2395, %v2419
        %v2444 = vadd.f32 %v2396, %v2407
        %v2445 = vadd.f32 %v2397, %v2411
        %v2446 = vadd.f32 %v2398, %v2415
        %v2447 = vadd.f32 %v2399, %v2419
        %v2448 = vadd.f32 %v2400, %v2407
        %v2449 = vadd.f32 %v2401, %v2411
        %v2450 = vadd.f32 %v2402, %v2415
        %v2451 = vadd.f32 %v2403, %v2419
        %v2452 = vxor.u32 %v2420, 2147483648
        %v2453 = vxor.u32 %v2421, 2147483648
        %v2454 = vxor.u32 %v2422, 2147483648
        %v2455 = vxor.u32 %v2423, 2147483648
        %v2456 = vxor.u32 %v2424, 2147483648
        %v2457 = vxor.u32 %v2425, 2147483648
        %v2458 = vxor.u32 %v2426, 2147483648
        %v2459 = vxor.u32 %v2427, 2147483648
        %v2460 = vxor.u32 %v2428, 2147483648
        %v2461 = vxor.u32 %v2429, 2147483648
        %v2462 = vxor.u32 %v2430, 2147483648
        %v2463 = vxor.u32 %v2431, 2147483648
        %v2464 = vxor.u32 %v2432, 2147483648
        %v2465 = vxor.u32 %v2433, 2147483648
        %v2466 = vxor.u32 %v2434, 2147483648
        %v2467 = vxor.u32 %v2435, 2147483648
        %v2468 = vxor.u32 %v2436, 2147483648
        %v2469 = vxor.u32 %v2437, 2147483648
        %v2470 = vxor.u32 %v2438, 2147483648
        %v2471 = vxor.u32 %v2439, 2147483648
        %v2472 = vxor.u32 %v2440, 2147483648
        %v2473 = vxor.u32 %v2441, 2147483648
        %v2474 = vxor.u32 %v2442, 2147483648
        %v2475 = vxor.u32 %v2443, 2147483648
        %v2476 = vxor.u32 %v2444, 2147483648
        %v2477 = vxor.u32 %v2445, 2147483648
        %v2478 = vxor.u32 %v2446, 2147483648
        %v2479 = vxor.u32 %v2447, 2147483648
        %v2480 = vxor.u32 %v2448, 2147483648
        %v2481 = vxor.u32 %v2449, 2147483648
        %v2482 = vxor.u32 %v2450, 2147483648
        %v2483 = vxor.u32 %v2451, 2147483648
        %v2484 = vmul.f32 %v2452, 1.442695
        %v2485 = vpow.pop %v2484
        %v2486 = vmul.f32 %v2453, 1.442695
        %v2487 = vpow.pop %v2486
        %v2488 = vmul.f32 %v2454, 1.442695
        %v2489 = vpow.pop %v2488
        %v2490 = vmul.f32 %v2455, 1.442695
        %v2491 = vpow.pop %v2490
        %v2492 = vmul.f32 %v2456, 1.442695
        %v2493 = vpow.pop %v2492
        %v2494 = vmul.f32 %v2457, 1.442695
        %v2495 = vpow.pop %v2494
        %v2496 = vmul.f32 %v2458, 1.442695
        %v2497 = vpow.pop %v2496
        %v2498 = vmul.f32 %v2459, 1.442695
        %v2499 = vpow.pop %v2498
        %v2500 = vmul.f32 %v2460, 1.442695
        %v2501 = vpow.pop %v2500
        %v2502 = vmul.f32 %v2461, 1.442695
        %v2503 = vpow.pop %v2502
        %v2504 = vmul.f32 %v2462, 1.442695
        %v2505 = vpow.pop %v2504
        %v2506 = vmul.f32 %v2463, 1.442695
        %v2507 = vpow.pop %v2506
        %v2508 = vmul.f32 %v2464, 1.442695
        %v2509 = vpow.pop %v2508
        %v2510 = vmul.f32 %v2465, 1.442695
        %v2511 = vpow.pop %v2510
        %v2512 = vmul.f32 %v2466, 1.442695
        %v2513 = vpow.pop %v2512
        %v2514 = vmul.f32 %v2467, 1.442695
        %v2515 = vpow.pop %v2514
        %v2516 = vmul.f32 %v2468, 1.442695
        %v2517 = vpow.pop %v2516
        %v2518 = vmul.f32 %v2469, 1.442695
        %v2519 = vpow.pop %v2518
        %v2520 = vmul.f32 %v2470, 1.442695
        %v2521 = vpow.pop %v2520
        %v2522 = vmul.f32 %v2471, 1.442695
        %v2523 = vpow.pop %v2522
        %v2524 = vmul.f32 %v2472, 1.442695
        %v2525 = vpow.pop %v2524
        %v2526 = vmul.f32 %v2473, 1.442695
        %v2527 = vpow.pop %v2526
        %v2528 = vmul.f32 %v2474, 1.442695
        %v2529 = vpow.pop %v2528
        %v2530 = vmul.f32 %v2475, 1.442695
        %v2531 = vpow.pop %v2530
        %v2532 = vmul.f32 %v2476, 1.442695
        %v2533 = vpow.pop %v2532
        %v2534 = vmul.f32 %v2477, 1.442695
        %v2535 = vpow.pop %v2534
        %v2536 = vmul.f32 %v2478, 1.442695
        %v2537 = vpow.pop %v2536
        %v2538 = vmul.f32 %v2479, 1.442695
        %v2539 = vpow.pop %v2538
        %v2540 = vmul.f32 %v2480, 1.442695
        %v2541 = vpow.pop %v2540
        %v2542 = vmul.f32 %v2481, 1.442695
        %v2543 = vpow.pop %v2542
        %v2544 = vmul.f32 %v2482, 1.442695
        %v2545 = vpow.pop %v2544
        %v2546 = vmul.f32 %v2483, 1.442695
        %v2547 = vpow.pop %v2546
        %v2548 = vadd.f32 %v2485, 1.0
        %v2549 = vadd.f32 %v2487, 1.0
        %v2550 = vadd.f32 %v2489, 1.0
        %v2551 = vadd.f32 %v2491, 1.0
        %v2552 = vadd.f32 %v2493, 1.0
        %v2553 = vadd.f32 %v2495, 1.0
        %v2554 = vadd.f32 %v2497, 1.0
        %v2555 = vadd.f32 %v2499, 1.0
        %v2556 = vadd.f32 %v2501, 1.0
        %v2557 = vadd.f32 %v2503, 1.0
        %v2558 = vadd.f32 %v2505, 1.0
        %v2559 = vadd.f32 %v2507, 1.0
        %v2560 = vadd.f32 %v2509, 1.0
        %v2561 = vadd.f32 %v2511, 1.0
        %v2562 = vadd.f32 %v2513, 1.0
        %v2563 = vadd.f32 %v2515, 1.0
        %v2564 = vadd.f32 %v2517, 1.0
        %v2565 = vadd.f32 %v2519, 1.0
        %v2566 = vadd.f32 %v2521, 1.0
        %v2567 = vadd.f32 %v2523, 1.0
        %v2568 = vadd.f32 %v2525, 1.0
        %v2569 = vadd.f32 %v2527, 1.0
        %v2570 = vadd.f32 %v2529, 1.0
        %v2571 = vadd.f32 %v2531, 1.0
        %v2572 = vadd.f32 %v2533, 1.0
        %v2573 = vadd.f32 %v2535, 1.0
        %v2574 = vadd.f32 %v2537, 1.0
        %v2575 = vadd.f32 %v2539, 1.0
        %v2576 = vadd.f32 %v2541, 1.0
        %v2577 = vadd.f32 %v2543, 1.0
        %v2578 = vadd.f32 %v2545, 1.0
        %v2579 = vadd.f32 %v2547, 1.0
        %v2580 = vrcp.pop %v2548
        %v2581 = vmul.f32 1.0, %v2580
        %v2582 = vrcp.pop %v2549
        %v2583 = vmul.f32 1.0, %v2582
        %v2584 = vrcp.pop %v2550
        %v2585 = vmul.f32 1.0, %v2584
        %v2586 = vrcp.pop %v2551
        %v2587 = vmul.f32 1.0, %v2586
        %v2588 = vrcp.pop %v2552
        %v2589 = vmul.f32 1.0, %v2588
        %v2590 = vrcp.pop %v2553
        %v2591 = vmul.f32 1.0, %v2590
        %v2592 = vrcp.pop %v2554
        %v2593 = vmul.f32 1.0, %v2592
        %v2594 = vrcp.pop %v2555
        %v2595 = vmul.f32 1.0, %v2594
        %v2596 = vrcp.pop %v2556
        %v2597 = vmul.f32 1.0, %v2596
        %v2598 = vrcp.pop %v2557
        %v2599 = vmul.f32 1.0, %v2598
        %v2600 = vrcp.pop %v2558
        %v2601 = vmul.f32 1.0, %v2600
        %v2602 = vrcp.pop %v2559
        %v2603 = vmul.f32 1.0, %v2602
        %v2604 = vrcp.pop %v2560
        %v2605 = vmul.f32 1.0, %v2604
        %v2606 = vrcp.pop %v2561
        %v2607 = vmul.f32 1.0, %v2606
        %v2608 = vrcp.pop %v2562
        %v2609 = vmul.f32 1.0, %v2608
        %v2610 = vrcp.pop %v2563
        %v2611 = vmul.f32 1.0, %v2610
        %v2612 = vrcp.pop %v2564
        %v2613 = vmul.f32 1.0, %v2612
        %v2614 = vrcp.pop %v2565
        %v2615 = vmul.f32 1.0, %v2614
        %v2616 = vrcp.pop %v2566
        %v2617 = vmul.f32 1.0, %v2616
        %v2618 = vrcp.pop %v2567
        %v2619 = vmul.f32 1.0, %v2618
        %v2620 = vrcp.pop %v2568
        %v2621 = vmul.f32 1.0, %v2620
        %v2622 = vrcp.pop %v2569
        %v2623 = vmul.f32 1.0, %v2622
        %v2624 = vrcp.pop %v2570
        %v2625 = vmul.f32 1.0, %v2624
        %v2626 = vrcp.pop %v2571
        %v2627 = vmul.f32 1.0, %v2626
        %v2628 = vrcp.pop %v2572
        %v2629 = vmul.f32 1.0, %v2628
        %v2630 = vrcp.pop %v2573
        %v2631 = vmul.f32 1.0, %v2630
        %v2632 = vrcp.pop %v2574
        %v2633 = vmul.f32 1.0, %v2632
        %v2634 = vrcp.pop %v2575
        %v2635 = vmul.f32 1.0, %v2634
        %v2636 = vrcp.pop %v2576
        %v2637 = vmul.f32 1.0, %v2636
        %v2638 = vrcp.pop %v2577
        %v2639 = vmul.f32 1.0, %v2638
        %v2640 = vrcp.pop %v2578
        %v2641 = vmul.f32 1.0, %v2640
        %v2642 = vrcp.pop %v2579
        %v2643 = vmul.f32 1.0, %v2642
        %v2644 = vmul.f32 %v2420, %v2581
        %v2645 = vmul.f32 %v2421, %v2583
        %v2646 = vmul.f32 %v2422, %v2585
        %v2647 = vmul.f32 %v2423, %v2587
        %v2648 = vmul.f32 %v2424, %v2589
        %v2649 = vmul.f32 %v2425, %v2591
        %v2650 = vmul.f32 %v2426, %v2593
        %v2651 = vmul.f32 %v2427, %v2595
        %v2652 = vmul.f32 %v2428, %v2597
        %v2653 = vmul.f32 %v2429, %v2599
        %v2654 = vmul.f32 %v2430, %v2601
        %v2655 = vmul.f32 %v2431, %v2603
        %v2656 = vmul.f32 %v2432, %v2605
        %v2657 = vmul.f32 %v2433, %v2607
        %v2658 = vmul.f32 %v2434, %v2609
        %v2659 = vmul.f32 %v2435, %v2611
        %v2660 = vmul.f32 %v2436, %v2613
        %v2661 = vmul.f32 %v2437, %v2615
        %v2662 = vmul.f32 %v2438, %v2617
        %v2663 = vmul.f32 %v2439, %v2619
        %v2664 = vmul.f32 %v2440, %v2621
        %v2665 = vmul.f32 %v2441, %v2623
        %v2666 = vmul.f32 %v2442, %v2625
        %v2667 = vmul.f32 %v2443, %v2627
        %v2668 = vmul.f32 %v2444, %v2629
        %v2669 = vmul.f32 %v2445, %v2631
        %v2670 = vmul.f32 %v2446, %v2633
        %v2671 = vmul.f32 %v2447, %v2635
        %v2672 = vmul.f32 %v2448, %v2637
        %v2673 = vmul.f32 %v2449, %v2639
        %v2674 = vmul.f32 %v2450, %v2641
        %v2675 = vmul.f32 %v2451, %v2643
        %v2676 = vadd.f32 %v2644, %v2648
        %v2677 = vadd.f32 %v2676, %v2652
        %v2678 = vadd.f32 %v2677, %v2656
        %v2679 = vadd.f32 %v2678, %v2660
        %v2680 = vadd.f32 %v2679, %v2664
        %v2681 = vadd.f32 %v2680, %v2668
        %v2682 = vadd.f32 %v2681, %v2672
        %v2683 = vrot.slane %v2682, 4
        %v2684 = vadd.f32 %v2682, %v2683
        %v2685 = vrot.slane %v2684, 2
        %v2686 = vadd.f32 %v2684, %v2685
        %v2687 = vrot.slane %v2686, 1
        %v2688 = vadd.f32 %v2686, %v2687
        %v2689 = vadd.f32 %v2645, %v2649
        %v2690 = vadd.f32 %v2689, %v2653
        %v2691 = vadd.f32 %v2690, %v2657
        %v2692 = vadd.f32 %v2691, %v2661
        %v2693 = vadd.f32 %v2692, %v2665
        %v2694 = vadd.f32 %v2693, %v2669
        %v2695 = vadd.f32 %v2694, %v2673
        %v2696 = vrot.slane %v2695, 4
        %v2697 = vadd.f32 %v2695, %v2696
        %v2698 = vrot.slane %v2697, 2
        %v2699 = vadd.f32 %v2697, %v2698
        %v2700 = vrot.slane %v2699, 1
        %v2701 = vadd.f32 %v2699, %v2700
        %v2702 = vadd.f32 %v2646, %v2650
        %v2703 = vadd.f32 %v2702, %v2654
        %v2704 = vadd.f32 %v2703, %v2658
        %v2705 = vadd.f32 %v2704, %v2662
        %v2706 = vadd.f32 %v2705, %v2666
        %v2707 = vadd.f32 %v2706, %v2670
        %v2708 = vadd.f32 %v2707, %v2674
        %v2709 = vrot.slane %v2708, 4
        %v2710 = vadd.f32 %v2708, %v2709
        %v2711 = vrot.slane %v2710, 2
        %v2712 = vadd.f32 %v2710, %v2711
        %v2713 = vrot.slane %v2712, 1
        %v2714 = vadd.f32 %v2712, %v2713
        %v2715 = vadd.f32 %v2647, %v2651
        %v2716 = vadd.f32 %v2715, %v2655
        %v2717 = vadd.f32 %v2716, %v2659
        %v2718 = vadd.f32 %v2717, %v2663
        %v2719 = vadd.f32 %v2718, %v2667
        %v2720 = vadd.f32 %v2719, %v2671
        %v2721 = vadd.f32 %v2720, %v2675
        %v2722 = vrot.slane %v2721, 4
        %v2723 = vadd.f32 %v2721, %v2722
        %v2724 = vrot.slane %v2723, 2
        %v2725 = vadd.f32 %v2723, %v2724
        %v2726 = vrot.slane %v2725, 1
        %v2727 = vadd.f32 %v2725, %v2726
        %v2728 = vmul.f32 %v2688, 0.015625
        %v2729 = vmul.f32 %v2701, 0.015625
        %v2730 = vmul.f32 %v2714, 0.015625
        %v2731 = vmul.f32 %v2727, 0.015625
        %v2732 = vld [vmem:[%s6] sm:$0xff]
        %v2733 = vld [vmem:[%s6 + $0x8] sm:$0xff]
        %v2734 = vld [vmem:[%s6 + $0x10] sm:$0xff]
        %v2735 = vld [vmem:[%s6 + $0x18] sm:$0xff]
        %v2736 = vld [vmem:[%s6 + $0x20] sm:$0xff]
        %v2737 = vld [vmem:[%s6 + $0x28] sm:$0xff]
        %v2738 = vld [vmem:[%s6 + $0x30] sm:$0xff]
        %v2739 = vld [vmem:[%s6 + $0x38] sm:$0xff]
        %v2740 = vld [vmem:[%s6 + $0x40] sm:$0xff]
        %v2741 = vld [vmem:[%s6 + $0x48] sm:$0xff]
        %v2742 = vld [vmem:[%s6 + $0x50] sm:$0xff]
        %v2743 = vld [vmem:[%s6 + $0x58] sm:$0xff]
        %v2744 = vld [vmem:[%s6 + $0x60] sm:$0xff]
        %v2745 = vld [vmem:[%s6 + $0x68] sm:$0xff]
        %v2746 = vld [vmem:[%s6 + $0x70] sm:$0xff]
        %v2747 = vld [vmem:[%s6 + $0x78] sm:$0xff]
        %v2748 = vld [vmem:[%s6 + $0x80] sm:$0xff]
        %v2749 = vld [vmem:[%s6 + $0x88] sm:$0xff]
        %v2750 = vld [vmem:[%s6 + $0x90] sm:$0xff]
        %v2751 = vld [vmem:[%s6 + $0x98] sm:$0xff]
        %v2752 = vld [vmem:[%s6 + $0xa0] sm:$0xff]
        %v2753 = vld [vmem:[%s6 + $0xa8] sm:$0xff]
        %v2754 = vld [vmem:[%s6 + $0xb0] sm:$0xff]
        %v2755 = vld [vmem:[%s6 + $0xb8] sm:$0xff]
        %v2756 = vld [vmem:[%s6 + $0xc0] sm:$0xff]
        %v2757 = vld [vmem:[%s6 + $0xc8] sm:$0xff]
        %v2758 = vld [vmem:[%s6 + $0xd0] sm:$0xff]
        %v2759 = vld [vmem:[%s6 + $0xd8] sm:$0xff]
        %v2760 = vld [vmem:[%s6 + $0xe0] sm:$0xff]
        %v2761 = vld [vmem:[%s6 + $0xe8] sm:$0xff]
        %v2762 = vld [vmem:[%s6 + $0xf0] sm:$0xff]
        %v2763 = vld [vmem:[%s6 + $0xf8] sm:$0xff]
        %v2764 = vld [vmem:[%s6 + $0x100] sm:$0xff]
        %v2765 = vld [vmem:[%s6 + $0x108] sm:$0xff]
        %v2766 = vld [vmem:[%s6 + $0x110] sm:$0xff]
        %v2767 = vld [vmem:[%s6 + $0x118] sm:$0xff]
        %v2768 = vld [vmem:[%s6 + $0x120] sm:$0xff]
        %v2769 = vld [vmem:[%s6 + $0x128] sm:$0xff]
        %v2770 = vld [vmem:[%s6 + $0x130] sm:$0xff]
        %v2771 = vld [vmem:[%s6 + $0x138] sm:$0xff]
        %v2772 = vld [vmem:[%s6 + $0x140] sm:$0xff]
        %v2773 = vld [vmem:[%s6 + $0x148] sm:$0xff]
        %v2774 = vld [vmem:[%s6 + $0x150] sm:$0xff]
        %v2775 = vld [vmem:[%s6 + $0x158] sm:$0xff]
        %v2776 = vld [vmem:[%s6 + $0x160] sm:$0xff]
        %v2777 = vld [vmem:[%s6 + $0x168] sm:$0xff]
        %v2778 = vld [vmem:[%s6 + $0x170] sm:$0xff]
        %v2779 = vld [vmem:[%s6 + $0x178] sm:$0xff]
        %v2780 = vld [vmem:[%s6 + $0x180] sm:$0xff]
        %v2781 = vld [vmem:[%s6 + $0x188] sm:$0xff]
        %v2782 = vld [vmem:[%s6 + $0x190] sm:$0xff]
        %v2783 = vld [vmem:[%s6 + $0x198] sm:$0xff]
        %v2784 = vld [vmem:[%s6 + $0x1a0] sm:$0xff]
        %v2785 = vld [vmem:[%s6 + $0x1a8] sm:$0xff]
        %v2786 = vld [vmem:[%s6 + $0x1b0] sm:$0xff]
        %v2787 = vld [vmem:[%s6 + $0x1b8] sm:$0xff]
        %v2788 = vld [vmem:[%s6 + $0x1c0] sm:$0xff]
        %v2789 = vld [vmem:[%s6 + $0x1c8] sm:$0xff]
        %v2790 = vld [vmem:[%s6 + $0x1d0] sm:$0xff]
        %v2791 = vld [vmem:[%s6 + $0x1d8] sm:$0xff]
        %v2792 = vld [vmem:[%s6 + $0x1e0] sm:$0xff]
        %v2793 = vld [vmem:[%s6 + $0x1e8] sm:$0xff]
        %v2794 = vld [vmem:[%s6 + $0x1f0] sm:$0xff]
        %v2795 = vld [vmem:[%s6 + $0x1f8] sm:$0xff]
        %v2796 = vld [vmem:[%s7] sm:$0x1]
        %2797 = vmatprep.subr.mxu0 0.0
        %2798 = vmatpush1.msra.mxu0 %v2732
        %2799 = vmatprep.subr.mxu0 0.0
        %2800 = vmatpush1.msra.mxu0 %v2733
        %2801 = vmatprep.subr.mxu0 0.0
        %2802 = vmatpush1.msra.mxu0 %v2734
        %2803 = vmatprep.subr.mxu0 0.0
        %2804 = vmatpush1.msra.mxu0 %v2735
        %2805 = vmatprep.subr.mxu0 0.0
        %2806 = vmatpush1.msra.mxu0 %v2736
        %2807 = vmatprep.subr.mxu0 0.0
        %2808 = vmatpush1.msra.mxu0 %v2737
        %2809 = vmatprep.subr.mxu0 0.0
        %2810 = vmatpush1.msra.mxu0 %v2738
        %2811 = vmatprep.subr.mxu0 0.0
        %2812 = vmatpush1.msra.mxu0 %v2739
        %2813 = vmatprep.subr.mxu0 0.0
        %2814 = vmatpush1.msra.mxu0 %v2740
        %2815 = vmatprep.subr.mxu0 0.0
        %2816 = vmatpush1.msra.mxu0 %v2741
        %2817 = vmatprep.subr.mxu0 0.0
        %2818 = vmatpush1.msra.mxu0 %v2742
        %2819 = vmatprep.subr.mxu0 0.0
        %2820 = vmatpush1.msra.mxu0 %v2743
        %2821 = vmatprep.subr.mxu0 0.0
        %2822 = vmatpush1.msra.mxu0 %v2744
        %2823 = vmatprep.subr.mxu0 0.0
        %2824 = vmatpush1.msra.mxu0 %v2745
        %2825 = vmatprep.subr.mxu0 0.0
        %2826 = vmatpush1.msra.mxu0 %v2746
        %2827 = vmatprep.subr.mxu0 0.0
        %2828 = vmatpush1.msra.mxu0 %v2747
        %2829 = vmatprep.subr.mxu0 0.0
        %2830 = vmatpush1.msra.mxu0 %v2748
        %2831 = vmatprep.subr.mxu0 0.0
        %2832 = vmatpush1.msra.mxu0 %v2749
        %2833 = vmatprep.subr.mxu0 0.0
        %2834 = vmatpush1.msra.mxu0 %v2750
        %2835 = vmatprep.subr.mxu0 0.0
        %2836 = vmatpush1.msra.mxu0 %v2751
        %2837 = vmatprep.subr.mxu0 0.0
        %2838 = vmatpush1.msra.mxu0 %v2752
        %2839 = vmatprep.subr.mxu0 0.0
        %2840 = vmatpush1.msra.mxu0 %v2753
        %2841 = vmatprep.subr.mxu0 0.0
        %2842 = vmatpush1.msra.mxu0 %v2754
        %2843 = vmatprep.subr.mxu0 0.0
        %2844 = vmatpush1.msra.mxu0 %v2755
        %2845 = vmatprep.subr.mxu0 0.0
        %2846 = vmatpush1.msra.mxu0 %v2756
        %2847 = vmatprep.subr.mxu0 0.0
        %2848 = vmatpush1.msra.mxu0 %v2757
        %2849 = vmatprep.subr.mxu0 0.0
        %2850 = vmatpush1.msra.mxu0 %v2758
        %2851 = vmatprep.subr.mxu0 0.0
        %2852 = vmatpush1.msra.mxu0 %v2759
        %2853 = vmatprep.subr.mxu0 0.0
        %2854 = vmatpush1.msra.mxu0 %v2760
        %2855 = vmatprep.subr.mxu0 0.0
        %2856 = vmatpush1.msra.mxu0 %v2761
        %2857 = vmatprep.subr.mxu0 0.0
        %2858 = vmatpush1.msra.mxu0 %v2762
        %2859 = vmatprep.subr.mxu0 0.0
        %2860 = vmatpush1.msra.mxu0 %v2763
        %2861 = vmatprep.mubr.f32.mxu0 %v2729
        %2862 = vmatmul.mubr.f32.gmra.mrb[0].mxu0 %v2728
        %v2863 = vpop.f32.mrb[0].mxu0
        %v2864 = vadd.f32 %v2796, %v2863
        %v2865 = vpop.f32.mrb[0].mxu0
        %2866 = vdwg.mxu0
        %2867 = vmatprep.subr.mxu0 0.0
        %2868 = vmatpush1.msra.mxu0 %v2764
        %2869 = vmatprep.subr.mxu0 0.0
        %2870 = vmatpush1.msra.mxu0 %v2765
        %2871 = vmatprep.subr.mxu0 0.0
        %2872 = vmatpush1.msra.mxu0 %v2766
        %2873 = vmatprep.subr.mxu0 0.0
        %2874 = vmatpush1.msra.mxu0 %v2767
        %2875 = vmatprep.subr.mxu0 0.0
        %2876 = vmatpush1.msra.mxu0 %v2768
        %2877 = vmatprep.subr.mxu0 0.0
        %2878 = vmatpush1.msra.mxu0 %v2769
        %2879 = vmatprep.subr.mxu0 0.0
        %2880 = vmatpush1.msra.mxu0 %v2770
        %2881 = vmatprep.subr.mxu0 0.0
        %2882 = vmatpush1.msra.mxu0 %v2771
        %2883 = vmatprep.subr.mxu0 0.0
        %2884 = vmatpush1.msra.mxu0 %v2772
        %2885 = vmatprep.subr.mxu0 0.0
        %2886 = vmatpush1.msra.mxu0 %v2773
        %2887 = vmatprep.subr.mxu0 0.0
        %2888 = vmatpush1.msra.mxu0 %v2774
        %2889 = vmatprep.subr.mxu0 0.0
        %2890 = vmatpush1.msra.mxu0 %v2775
        %2891 = vmatprep.subr.mxu0 0.0
        %2892 = vmatpush1.msra.mxu0 %v2776
        %2893 = vmatprep.subr.mxu0 0.0
        %2894 = vmatpush1.msra.mxu0 %v2777
        %2895 = vmatprep.subr.mxu0 0.0
        %2896 = vmatpush1.msra.mxu0 %v2778
        %2897 = vmatprep.subr.mxu0 0.0
        %2898 = vmatpush1.msra.mxu0 %v2779
        %2899 = vmatprep.subr.mxu0 0.0
        %2900 = vmatpush1.msra.mxu0 %v2780
        %2901 = vmatprep.subr.mxu0 0.0
        %2902 = vmatpush1.msra.mxu0 %v2781
        %2903 = vmatprep.subr.mxu0 0.0
        %2904 = vmatpush1.msra.mxu0 %v2782
        %2905 = vmatprep.subr.mxu0 0.0
        %2906 = vmatpush1.msra.mxu0 %v2783
        %2907 = vmatprep.subr.mxu0 0.0
        %2908 = vmatpush1.msra.mxu0 %v2784
        %2909 = vmatprep.subr.mxu0 0.0
        %2910 = vmatpush1.msra.mxu0 %v2785
        %2911 = vmatprep.subr.mxu0 0.0
        %2912 = vmatpush1.msra.mxu0 %v2786
        %2913 = vmatprep.subr.mxu0 0.0
        %2914 = vmatpush1.msra.mxu0 %v2787
        %2915 = vmatprep.subr.mxu0 0.0
        %2916 = vmatpush1.msra.mxu0 %v2788
        %2917 = vmatprep.subr.mxu0 0.0
        %2918 = vmatpush1.msra.mxu0 %v2789
        %2919 = vmatprep.subr.mxu0 0.0
        %2920 = vmatpush1.msra.mxu0 %v2790
        %2921 = vmatprep.subr.mxu0 0.0
        %2922 = vmatpush1.msra.mxu0 %v2791
        %2923 = vmatprep.subr.mxu0 0.0
        %2924 = vmatpush1.msra.mxu0 %v2792
        %2925 = vmatprep.subr.mxu0 0.0
        %2926 = vmatpush1.msra.mxu0 %v2793
        %2927 = vmatprep.subr.mxu0 0.0
        %2928 = vmatpush1.msra.mxu0 %v2794
        %2929 = vmatprep.subr.mxu0 0.0
        %2930 = vmatpush1.msra.mxu0 %v2795
        %2931 = vmatprep.mubr.f32.mxu0 %v2731
        %2932 = vmatmul.mubr.f32.gmra.mrb[0].mxu0 %v2730
        %v2933 = vpop.f32.mrb[0].mxu0
        %v2934 = vadd.f32 %v2864, %v2933
        %v2935 = vpop.f32.mrb[0].mxu0
        %2936 = vdwg.mxu0
        %v2937 = vxor.u32 %v2934, 2147483648
        %v2938 = vmul.f32 %v2937, 1.442695
        %v2939 = vpow.pop %v2938
        %v2940 = vadd.f32 %v2939, 1.0
        %v2941 = vrcp.pop %v2940
        %v2942 = vmul.f32 1.0, %v2941
        %v2943 = vmul.f32 %v2934, %v2942
        %v2944 = vld [vmem:[%s8] sm:$0xff]
        %v2945 = vld [vmem:[%s8 + $0x8] sm:$0xff]
        %v2946 = vld [vmem:[%s8 + $0x10] sm:$0xff]
        %v2947 = vld [vmem:[%s8 + $0x18] sm:$0xff]
        %v2948 = vld [vmem:[%s8 + $0x20] sm:$0xff]
        %v2949 = vld [vmem:[%s8 + $0x28] sm:$0xff]
        %v2950 = vld [vmem:[%s8 + $0x30] sm:$0xff]
        %v2951 = vld [vmem:[%s8 + $0x38] sm:$0xff]
        %v2952 = vld [vmem:[%s8 + $0x40] sm:$0xff]
        %v2953 = vld [vmem:[%s8 + $0x48] sm:$0xff]
        %v2954 = vld [vmem:[%s8 + $0x50] sm:$0xff]
        %v2955 = vld [vmem:[%s8 + $0x58] sm:$0xff]
        %v2956 = vld [vmem:[%s8 + $0x60] sm:$0xff]
        %v2957 = vld [vmem:[%s8 + $0x68] sm:$0xff]
        %v2958 = vld [vmem:[%s8 + $0x70] sm:$0xff]
        %v2959 = vld [vmem:[%s8 + $0x78] sm:$0xff]
        %v2964 = vrot.slane %v521, 4
        %v2965 = vrot.slane %v522, 4
        %v2966 = vrot.slane %v523, 4
        %v2967 = vrot.slane %v524, 4
        %vm2972 = vcmask 261120
        %v2974 = vsel %vm2972, %v2943, 0
        %2976 = vmatprep.subr.mxu0 %v2945
        %2977 = vmatpush1.msra.mxu0 %v2944
        %2978 = vmatprep.subr.mxu0 %v2949
        %2979 = vmatpush1.msra.mxu0 %v2948
        %2980 = vmatprep.subr.mxu0 %v2953
        %2981 = vmatpush1.msra.mxu0 %v2952
        %2982 = vmatprep.subr.mxu0 %v2957
        %2983 = vmatpush1.msra.mxu0 %v2956
        %2984 = vmatprep.subr.mxu0 0.0
        %2985 = vmatpush1.msra.mxu0 0.0
        %2986 = vmatprep.subr.mxu0 0.0
        %2987 = vmatpush1.msra.mxu0 0.0
        %2988 = vmatprep.subr.mxu0 0.0
        %2989 = vmatpush1.msra.mxu0 0.0
        %2990 = vmatprep.subr.mxu0 0.0
        %2991 = vmatpush1.msra.mxu0 0.0
        %2992 = vmatprep.subr.mxu0 0.0
        %2993 = vmatpush1.msra.mxu0 0.0
        %2994 = vmatprep.subr.mxu0 0.0
        %2995 = vmatpush1.msra.mxu0 0.0
        %2996 = vmatprep.subr.mxu0 0.0
        %2997 = vmatpush1.msra.mxu0 0.0
        %2998 = vmatprep.subr.mxu0 0.0
        %2999 = vmatpush1.msra.mxu0 0.0
        %3000 = vmatprep.subr.mxu0 0.0
        %3001 = vmatpush1.msra.mxu0 0.0
        %3002 = vmatprep.subr.mxu0 0.0
        %3003 = vmatpush1.msra.mxu0 0.0
        %3004 = vmatprep.subr.mxu0 0.0
        %3005 = vmatpush1.msra.mxu0 0.0
        %3006 = vmatprep.subr.mxu0 0.0
        %3007 = vmatpush1.msra.mxu0 0.0
        %3008 = vmatprep.subr.mxu0 0.0
        %3009 = vmatpush1.msra.mxu0 0.0
        %3010 = vmatprep.subr.mxu0 0.0
        %3011 = vmatpush1.msra.mxu0 0.0
        %3012 = vmatprep.subr.mxu0 0.0
        %3013 = vmatpush1.msra.mxu0 0.0
        %3014 = vmatprep.subr.mxu0 0.0
        %3015 = vmatpush1.msra.mxu0 0.0
        %3016 = vmatprep.subr.mxu0 0.0
        %3017 = vmatpush1.msra.mxu0 0.0
        %3018 = vmatprep.subr.mxu0 0.0
        %3019 = vmatpush1.msra.mxu0 0.0
        %3020 = vmatprep.subr.mxu0 0.0
        %3021 = vmatpush1.msra.mxu0 0.0
        %3022 = vmatprep.subr.mxu0 0.0
        %3023 = vmatpush1.msra.mxu0 0.0
        %3024 = vmatprep.subr.mxu0 0.0
        %3025 = vmatpush1.msra.mxu0 0.0
        %3026 = vmatprep.subr.mxu0 0.0
        %3027 = vmatpush1.msra.mxu0 0.0
        %3028 = vmatprep.subr.mxu0 0.0
        %3029 = vmatpush1.msra.mxu0 0.0
        %3030 = vmatprep.subr.mxu0 0.0
        %3031 = vmatpush1.msra.mxu0 0.0
        %3032 = vmatprep.subr.mxu0 0.0
        %3033 = vmatpush1.msra.mxu0 0.0
        %3034 = vmatprep.subr.mxu0 0.0
        %3035 = vmatpush1.msra.mxu0 0.0
        %3036 = vmatprep.subr.mxu0 0.0
        %3037 = vmatpush1.msra.mxu0 0.0
        %3038 = vmatprep.subr.mxu0 0.0
        %3039 = vmatpush1.msra.mxu0 0.0
        %3040 = vmatprep.mubr.f32.mxu0 0.0
        %3041 = vmatmul.mubr.f32.gmra.mrb[0].mxu0 %v2974
        %v3042 = vpop.f32.mrb[0].mxu0
        %v3043 = vadd.f32 %v2964, %v3042
        %v3044 = vpop.f32.mrb[0].mxu0
        %v3045 = vadd.f32 %v2965, %v3044
        %3046 = vdwg.mxu0
        %3047 = vmatprep.subr.mxu0 %v2947
        %3048 = vmatpush1.msra.mxu0 %v2946
        %3049 = vmatprep.subr.mxu0 %v2951
        %3050 = vmatpush1.msra.mxu0 %v2950
        %3051 = vmatprep.subr.mxu0 %v2955
        %3052 = vmatpush1.msra.mxu0 %v2954
        %3053 = vmatprep.subr.mxu0 %v2959
        %3054 = vmatpush1.msra.mxu0 %v2958
        %3055 = vmatprep.subr.mxu0 0.0
        %3056 = vmatpush1.msra.mxu0 0.0
        %3057 = vmatprep.subr.mxu0 0.0
        %3058 = vmatpush1.msra.mxu0 0.0
        %3059 = vmatprep.subr.mxu0 0.0
        %3060 = vmatpush1.msra.mxu0 0.0
        %3061 = vmatprep.subr.mxu0 0.0
        %3062 = vmatpush1.msra.mxu0 0.0
        %3063 = vmatprep.subr.mxu0 0.0
        %3064 = vmatpush1.msra.mxu0 0.0
        %3065 = vmatprep.subr.mxu0 0.0
        %3066 = vmatpush1.msra.mxu0 0.0
        %3067 = vmatprep.subr.mxu0 0.0
        %3068 = vmatpush1.msra.mxu0 0.0
        %3069 = vmatprep.subr.mxu0 0.0
        %3070 = vmatpush1.msra.mxu0 0.0
        %3071 = vmatprep.subr.mxu0 0.0
        %3072 = vmatpush1.msra.mxu0 0.0
        %3073 = vmatprep.subr.mxu0 0.0
        %3074 = vmatpush1.msra.mxu0 0.0
        %3075 = vmatprep.subr.mxu0 0.0
        %3076 = vmatpush1.msra.mxu0 0.0
        %3077 = vmatprep.subr.mxu0 0.0
        %3078 = vmatpush1.msra.mxu0 0.0
        %3079 = vmatprep.subr.mxu0 0.0
        %3080 = vmatpush1.msra.mxu0 0.0
        %3081 = vmatprep.subr.mxu0 0.0
        %3082 = vmatpush1.msra.mxu0 0.0
        %3083 = vmatprep.subr.mxu0 0.0
        %3084 = vmatpush1.msra.mxu0 0.0
        %3085 = vmatprep.subr.mxu0 0.0
        %3086 = vmatpush1.msra.mxu0 0.0
        %3087 = vmatprep.subr.mxu0 0.0
        %3088 = vmatpush1.msra.mxu0 0.0
        %3089 = vmatprep.subr.mxu0 0.0
        %3090 = vmatpush1.msra.mxu0 0.0
        %3091 = vmatprep.subr.mxu0 0.0
        %3092 = vmatpush1.msra.mxu0 0.0
        %3093 = vmatprep.subr.mxu0 0.0
        %3094 = vmatpush1.msra.mxu0 0.0
        %3095 = vmatprep.subr.mxu0 0.0
        %3096 = vmatpush1.msra.mxu0 0.0
        %3097 = vmatprep.subr.mxu0 0.0
        %3098 = vmatpush1.msra.mxu0 0.0
        %3099 = vmatprep.subr.mxu0 0.0
        %3100 = vmatpush1.msra.mxu0 0.0
        %3101 = vmatprep.subr.mxu0 0.0
        %3102 = vmatpush1.msra.mxu0 0.0
        %3103 = vmatprep.subr.mxu0 0.0
        %3104 = vmatpush1.msra.mxu0 0.0
        %3105 = vmatprep.subr.mxu0 0.0
        %3106 = vmatpush1.msra.mxu0 0.0
        %3107 = vmatprep.subr.mxu0 0.0
        %3108 = vmatpush1.msra.mxu0 0.0
        %3109 = vmatprep.subr.mxu0 0.0
        %3110 = vmatpush1.msra.mxu0 0.0
        %3111 = vmatprep.mubr.f32.mxu0 0.0
        %3112 = vmatmul.mubr.f32.gmra.mrb[0].mxu0 %v2974
        %v3113 = vpop.f32.mrb[0].mxu0
        %v3114 = vadd.f32 %v2966, %v3113
        %v3115 = vpop.f32.mrb[0].mxu0
        %v3116 = vadd.f32 %v2967, %v3115
        %3117 = vdwg.mxu0
        %v3118 = vxor.u32 %v3043, 2147483648
        %v3119 = vxor.u32 %v3045, 2147483648
        %v3120 = vxor.u32 %v3114, 2147483648
        %v3121 = vxor.u32 %v3116, 2147483648
        %v3122 = vmul.f32 %v3118, 1.442695
        %v3123 = vpow.pop %v3122
        %v3124 = vmul.f32 %v3119, 1.442695
        %v3125 = vpow.pop %v3124
        %v3126 = vmul.f32 %v3120, 1.442695
        %v3127 = vpow.pop %v3126
        %v3128 = vmul.f32 %v3121, 1.442695
        %v3129 = vpow.pop %v3128
        %v3130 = vadd.f32 %v3123, 1.0
        %v3131 = vadd.f32 %v3125, 1.0
        %v3132 = vadd.f32 %v3127, 1.0
        %v3133 = vadd.f32 %v3129, 1.0
        %v3134 = vrcp.pop %v3130
        %v3135 = vmul.f32 1.0, %v3134
        %v3136 = vrcp.pop %v3131
        %v3137 = vmul.f32 1.0, %v3136
        %v3138 = vrcp.pop %v3132
        %v3139 = vmul.f32 1.0, %v3138
        %v3140 = vrcp.pop %v3133
        %v3141 = vmul.f32 1.0, %v3140
        %v3142 = vlaneseq
        %v3143 = vshrl.u32 %v3142, 7
        %v3144 = vsub.s32 0, %v3143
        %v3145 = vrot.slane %v3135, %v3144
        %v3146 = vlaneseq
        %v3147 = vshrl.u32 %v3146, 7
        %v3148 = vsub.s32 0, %v3147
        %v3149 = vrot.slane %v3137, %v3148
        %v3150 = vlaneseq
        %v3151 = vshrl.u32 %v3150, 7
        %v3152 = vsub.s32 0, %v3151
        %v3153 = vrot.slane %v3139, %v3152
        %v3154 = vlaneseq
        %v3155 = vshrl.u32 %v3154, 7
        %v3156 = vsub.s32 0, %v3155
        %v3157 = vrot.slane %v3141, %v3156
        %v3158 = vmul.f32 %v2644, %v3145
        %v3159 = vmul.f32 %v2645, %v3149
        %v3160 = vmul.f32 %v2646, %v3153
        %v3161 = vmul.f32 %v2647, %v3157
        %v3162 = vmul.f32 %v2648, %v3145
        %v3163 = vmul.f32 %v2649, %v3149
        %v3164 = vmul.f32 %v2650, %v3153
        %v3165 = vmul.f32 %v2651, %v3157
        %v3166 = vmul.f32 %v2652, %v3145
        %v3167 = vmul.f32 %v2653, %v3149
        %v3168 = vmul.f32 %v2654, %v3153
        %v3169 = vmul.f32 %v2655, %v3157
        %v3170 = vmul.f32 %v2656, %v3145
        %v3171 = vmul.f32 %v2657, %v3149
        %v3172 = vmul.f32 %v2658, %v3153
        %v3173 = vmul.f32 %v2659, %v3157
        %v3174 = vmul.f32 %v2660, %v3145
        %v3175 = vmul.f32 %v2661, %v3149
        %v3176 = vmul.f32 %v2662, %v3153
        %v3177 = vmul.f32 %v2663, %v3157
        %v3178 = vmul.f32 %v2664, %v3145
        %v3179 = vmul.f32 %v2665, %v3149
        %v3180 = vmul.f32 %v2666, %v3153
        %v3181 = vmul.f32 %v2667, %v3157
        %v3182 = vmul.f32 %v2668, %v3145
        %v3183 = vmul.f32 %v2669, %v3149
        %v3184 = vmul.f32 %v2670, %v3153
        %v3185 = vmul.f32 %v2671, %v3157
        %v3186 = vmul.f32 %v2672, %v3145
        %v3187 = vmul.f32 %v2673, %v3149
        %v3188 = vmul.f32 %v2674, %v3153
        %v3189 = vmul.f32 %v2675, %v3157
        %v3190 = vpack.c.bf16 %v3162, %v3158
        %v3191 = vpack.c.bf16 %v3163, %v3159
        %v3192 = vpack.c.bf16 %v3164, %v3160
        %v3193 = vpack.c.bf16 %v3165, %v3161
        %v3194 = vpack.c.bf16 %v3170, %v3166
        %v3195 = vpack.c.bf16 %v3171, %v3167
        %v3196 = vpack.c.bf16 %v3172, %v3168
        %v3197 = vpack.c.bf16 %v3173, %v3169
        %v3198 = vpack.c.bf16 %v3178, %v3174
        %v3199 = vpack.c.bf16 %v3179, %v3175
        %v3200 = vpack.c.bf16 %v3180, %v3176
        %v3201 = vpack.c.bf16 %v3181, %v3177
        %v3202 = vpack.c.bf16 %v3186, %v3182
        %v3203 = vpack.c.bf16 %v3187, %v3183
        %v3204 = vpack.c.bf16 %v3188, %v3184
        %v3205 = vpack.c.bf16 %v3189, %v3185
        %v3206 = vld [vmem:[%s9] sm:$0xf]
        %v3207 = vld [vmem:[%s9 + $0x4] sm:$0xf]
        %v3208 = vld [vmem:[%s9 + $0x8] sm:$0xf]
        %v3209 = vld [vmem:[%s9 + $0xc] sm:$0xf]
        %v3210 = vld [vmem:[%s9 + $0x10] sm:$0xf]
        %v3211 = vld [vmem:[%s9 + $0x14] sm:$0xf]
        %v3212 = vld [vmem:[%s9 + $0x18] sm:$0xf]
        %v3213 = vld [vmem:[%s9 + $0x1c] sm:$0xf]
        %v3214 = vld [vmem:[%s9 + $0x20] sm:$0xf]
        %v3215 = vld [vmem:[%s9 + $0x24] sm:$0xf]
        %v3216 = vld [vmem:[%s9 + $0x28] sm:$0xf]
        %v3217 = vld [vmem:[%s9 + $0x2c] sm:$0xf]
        %v3218 = vld [vmem:[%s9 + $0x30] sm:$0xf]
        %v3219 = vld [vmem:[%s9 + $0x34] sm:$0xf]
        %v3220 = vld [vmem:[%s9 + $0x38] sm:$0xf]
        %v3221 = vld [vmem:[%s9 + $0x3c] sm:$0xf]
        %v3222 = vld [vmem:[%s9 + $0x40] sm:$0xf]
        %v3223 = vld [vmem:[%s9 + $0x44] sm:$0xf]
        %v3224 = vld [vmem:[%s9 + $0x48] sm:$0xf]
        %v3225 = vld [vmem:[%s9 + $0x4c] sm:$0xf]
        %v3226 = vld [vmem:[%s9 + $0x50] sm:$0xf]
        %v3227 = vld [vmem:[%s9 + $0x54] sm:$0xf]
        %v3228 = vld [vmem:[%s9 + $0x58] sm:$0xf]
        %v3229 = vld [vmem:[%s9 + $0x5c] sm:$0xf]
        %v3230 = vld [vmem:[%s9 + $0x60] sm:$0xf]
        %v3231 = vld [vmem:[%s9 + $0x64] sm:$0xf]
        %v3232 = vld [vmem:[%s9 + $0x68] sm:$0xf]
        %v3233 = vld [vmem:[%s9 + $0x6c] sm:$0xf]
        %v3234 = vld [vmem:[%s9 + $0x70] sm:$0xf]
        %v3235 = vld [vmem:[%s9 + $0x74] sm:$0xf]
        %v3236 = vld [vmem:[%s9 + $0x78] sm:$0xf]
        %v3237 = vld [vmem:[%s9 + $0x7c] sm:$0xf]
        %v3238 = vld [vmem:[%s9 + $0x80] sm:$0xf]
        %v3239 = vld [vmem:[%s9 + $0x84] sm:$0xf]
        %v3240 = vld [vmem:[%s9 + $0x88] sm:$0xf]
        %v3241 = vld [vmem:[%s9 + $0x8c] sm:$0xf]
        %v3242 = vld [vmem:[%s9 + $0x90] sm:$0xf]
        %v3243 = vld [vmem:[%s9 + $0x94] sm:$0xf]
        %v3244 = vld [vmem:[%s9 + $0x98] sm:$0xf]
        %v3245 = vld [vmem:[%s9 + $0x9c] sm:$0xf]
        %v3246 = vld [vmem:[%s9 + $0xa0] sm:$0xf]
        %v3247 = vld [vmem:[%s9 + $0xa4] sm:$0xf]
        %v3248 = vld [vmem:[%s9 + $0xa8] sm:$0xf]
        %v3249 = vld [vmem:[%s9 + $0xac] sm:$0xf]
        %v3250 = vld [vmem:[%s9 + $0xb0] sm:$0xf]
        %v3251 = vld [vmem:[%s9 + $0xb4] sm:$0xf]
        %v3252 = vld [vmem:[%s9 + $0xb8] sm:$0xf]
        %v3253 = vld [vmem:[%s9 + $0xbc] sm:$0xf]
        %v3254 = vld [vmem:[%s9 + $0xc0] sm:$0xf]
        %v3255 = vld [vmem:[%s9 + $0xc4] sm:$0xf]
        %v3256 = vld [vmem:[%s9 + $0xc8] sm:$0xf]
        %v3257 = vld [vmem:[%s9 + $0xcc] sm:$0xf]
        %v3258 = vld [vmem:[%s9 + $0xd0] sm:$0xf]
        %v3259 = vld [vmem:[%s9 + $0xd4] sm:$0xf]
        %v3260 = vld [vmem:[%s9 + $0xd8] sm:$0xf]
        %v3261 = vld [vmem:[%s9 + $0xdc] sm:$0xf]
        %v3262 = vld [vmem:[%s9 + $0xe0] sm:$0xf]
        %v3263 = vld [vmem:[%s9 + $0xe4] sm:$0xf]
        %v3264 = vld [vmem:[%s9 + $0xe8] sm:$0xf]
        %v3265 = vld [vmem:[%s9 + $0xec] sm:$0xf]
        %v3266 = vld [vmem:[%s9 + $0xf0] sm:$0xf]
        %v3267 = vld [vmem:[%s9 + $0xf4] sm:$0xf]
        %v3268 = vld [vmem:[%s9 + $0xf8] sm:$0xf]
        %v3269 = vld [vmem:[%s9 + $0xfc] sm:$0xf]
        %v3334 = vunpack.c.l.b16 %v3206
        %v3335 = vunpack.c.l.b16 %v3207
        %v3336 = vunpack.c.l.b16 %v3208
        %v3337 = vunpack.c.l.b16 %v3209
        %v3338 = vunpack.c.l.b16 %v3210
        %v3339 = vunpack.c.l.b16 %v3211
        %v3340 = vunpack.c.l.b16 %v3212
        %v3341 = vunpack.c.l.b16 %v3213
        %v3342 = vunpack.c.l.b16 %v3214
        %v3343 = vunpack.c.l.b16 %v3215
        %v3344 = vunpack.c.l.b16 %v3216
        %v3345 = vunpack.c.l.b16 %v3217
        %v3346 = vunpack.c.l.b16 %v3218
        %v3347 = vunpack.c.l.b16 %v3219
        %v3348 = vunpack.c.l.b16 %v3220
        %v3349 = vunpack.c.l.b16 %v3221
        %v3350 = vunpack.c.l.b16 %v3222
        %v3351 = vunpack.c.l.b16 %v3223
        %v3352 = vunpack.c.l.b16 %v3224
        %v3353 = vunpack.c.l.b16 %v3225
        %v3354 = vunpack.c.l.b16 %v3226
        %v3355 = vunpack.c.l.b16 %v3227
        %v3356 = vunpack.c.l.b16 %v3228
        %v3357 = vunpack.c.l.b16 %v3229
        %v3358 = vunpack.c.l.b16 %v3230
        %v3359 = vunpack.c.l.b16 %v3231
        %v3360 = vunpack.c.l.b16 %v3232
        %v3361 = vunpack.c.l.b16 %v3233
        %v3362 = vunpack.c.l.b16 %v3234
        %v3363 = vunpack.c.l.b16 %v3235
        %v3364 = vunpack.c.l.b16 %v3236
        %v3365 = vunpack.c.l.b16 %v3237
        %v3366 = vunpack.c.l.b16 %v3238
        %v3367 = vunpack.c.l.b16 %v3239
        %v3368 = vunpack.c.l.b16 %v3240
        %v3369 = vunpack.c.l.b16 %v3241
        %v3370 = vunpack.c.l.b16 %v3242
        %v3371 = vunpack.c.l.b16 %v3243
        %v3372 = vunpack.c.l.b16 %v3244
        %v3373 = vunpack.c.l.b16 %v3245
        %v3374 = vunpack.c.l.b16 %v3246
        %v3375 = vunpack.c.l.b16 %v3247
        %v3376 = vunpack.c.l.b16 %v3248
        %v3377 = vunpack.c.l.b16 %v3249
        %v3378 = vunpack.c.l.b16 %v3250
        %v3379 = vunpack.c.l.b16 %v3251
        %v3380 = vunpack.c.l.b16 %v3252
        %v3381 = vunpack.c.l.b16 %v3253
        %v3382 = vunpack.c.l.b16 %v3254
        %v3383 = vunpack.c.l.b16 %v3255
        %v3384 = vunpack.c.l.b16 %v3256
        %v3385 = vunpack.c.l.b16 %v3257
        %v3386 = vunpack.c.l.b16 %v3258
        %v3387 = vunpack.c.l.b16 %v3259
        %v3388 = vunpack.c.l.b16 %v3260
        %v3389 = vunpack.c.l.b16 %v3261
        %v3390 = vunpack.c.l.b16 %v3262
        %v3391 = vunpack.c.l.b16 %v3263
        %v3392 = vunpack.c.l.b16 %v3264
        %v3393 = vunpack.c.l.b16 %v3265
        %v3394 = vunpack.c.l.b16 %v3266
        %v3395 = vunpack.c.l.b16 %v3267
        %v3396 = vunpack.c.l.b16 %v3268
        %v3397 = vunpack.c.l.b16 %v3269
        %v3398 = vpack.c.b16 %v3335, %v3334
        %v3399 = vpack.c.b16 %v3337, %v3336
        %v3400 = vpack.c.b16 %v3339, %v3338
        %v3401 = vpack.c.b16 %v3341, %v3340
        %v3402 = vpack.c.b16 %v3343, %v3342
        %v3403 = vpack.c.b16 %v3345, %v3344
        %v3404 = vpack.c.b16 %v3347, %v3346
        %v3405 = vpack.c.b16 %v3349, %v3348
        %v3406 = vpack.c.b16 %v3351, %v3350
        %v3407 = vpack.c.b16 %v3353, %v3352
        %v3408 = vpack.c.b16 %v3355, %v3354
        %v3409 = vpack.c.b16 %v3357, %v3356
        %v3410 = vpack.c.b16 %v3359, %v3358
        %v3411 = vpack.c.b16 %v3361, %v3360
        %v3412 = vpack.c.b16 %v3363, %v3362
        %v3413 = vpack.c.b16 %v3365, %v3364
        %v3414 = vpack.c.b16 %v3367, %v3366
        %v3415 = vpack.c.b16 %v3369, %v3368
        %v3416 = vpack.c.b16 %v3371, %v3370
        %v3417 = vpack.c.b16 %v3373, %v3372
        %v3418 = vpack.c.b16 %v3375, %v3374
        %v3419 = vpack.c.b16 %v3377, %v3376
        %v3420 = vpack.c.b16 %v3379, %v3378
        %v3421 = vpack.c.b16 %v3381, %v3380
        %v3422 = vpack.c.b16 %v3383, %v3382
        %v3423 = vpack.c.b16 %v3385, %v3384
        %v3424 = vpack.c.b16 %v3387, %v3386
        %v3425 = vpack.c.b16 %v3389, %v3388
        %v3426 = vpack.c.b16 %v3391, %v3390
        %v3427 = vpack.c.b16 %v3393, %v3392
        %v3428 = vpack.c.b16 %v3395, %v3394
        %v3429 = vpack.c.b16 %v3397, %v3396
        %3462 = vmatprep.subr.bf16.mxu0 0
        %3463 = vmatpush1.bf16.msra.mxu0 %v3398
        %3464 = vmatprep.subr.bf16.mxu0 0
        %3465 = vmatpush1.bf16.msra.mxu0 %v3399
        %3466 = vmatprep.subr.bf16.mxu0 0
        %3467 = vmatpush1.bf16.msra.mxu0 %v3400
        %3468 = vmatprep.subr.bf16.mxu0 0
        %3469 = vmatpush1.bf16.msra.mxu0 %v3401
        %3470 = vmatprep.subr.bf16.mxu0 0
        %3471 = vmatpush1.bf16.msra.mxu0 %v3402
        %3472 = vmatprep.subr.bf16.mxu0 0
        %3473 = vmatpush1.bf16.msra.mxu0 %v3403
        %3474 = vmatprep.subr.bf16.mxu0 0
        %3475 = vmatpush1.bf16.msra.mxu0 %v3404
        %3476 = vmatprep.subr.bf16.mxu0 0
        %3477 = vmatpush1.bf16.msra.mxu0 %v3405
        %3478 = vmatprep.subr.bf16.mxu0 0
        %3479 = vmatpush1.bf16.msra.mxu0 %v3406
        %3480 = vmatprep.subr.bf16.mxu0 0
        %3481 = vmatpush1.bf16.msra.mxu0 %v3407
        %3482 = vmatprep.subr.bf16.mxu0 0
        %3483 = vmatpush1.bf16.msra.mxu0 %v3408
        %3484 = vmatprep.subr.bf16.mxu0 0
        %3485 = vmatpush1.bf16.msra.mxu0 %v3409
        %3486 = vmatprep.subr.bf16.mxu0 0
        %3487 = vmatpush1.bf16.msra.mxu0 %v3410
        %3488 = vmatprep.subr.bf16.mxu0 0
        %3489 = vmatpush1.bf16.msra.mxu0 %v3411
        %3490 = vmatprep.subr.bf16.mxu0 0
        %3491 = vmatpush1.bf16.msra.mxu0 %v3412
        %3492 = vmatprep.subr.bf16.mxu0 0
        %3493 = vmatpush1.bf16.msra.mxu0 %v3413
        %3494 = vmatprep.mubr.bf16.mxu0 %v3191
        %3495 = vmatmul.mubr.bf16.gmra.mrb[0].mxu0 %v3190
        %v3496 = vpop.f32.mrb[0].mxu0
        %v3497 = vadd.f32 0.0, %v3496
        %v3498 = vpop.f32.mrb[0].mxu0
        %v3499 = vpop.f32.mrb[0].mxu0
        %v3500 = vadd.f32 0.0, %v3499
        %v3501 = vpop.f32.mrb[0].mxu0
        %3502 = vmatprep.mubr.bf16.mxu0 %v3195
        %3503 = vmatmul.mubr.bf16.gmra.mrb[0].mxu0 %v3194
        %v3504 = vpop.f32.mrb[0].mxu0
        %v3505 = vadd.f32 0.0, %v3504
        %v3506 = vpop.f32.mrb[0].mxu0
        %v3507 = vpop.f32.mrb[0].mxu0
        %v3508 = vadd.f32 0.0, %v3507
        %v3509 = vpop.f32.mrb[0].mxu0
        %3510 = vmatprep.mubr.bf16.mxu0 %v3199
        %3511 = vmatmul.mubr.bf16.gmra.mrb[0].mxu0 %v3198
        %v3512 = vpop.f32.mrb[0].mxu0
        %v3513 = vadd.f32 0.0, %v3512
        %v3514 = vpop.f32.mrb[0].mxu0
        %v3515 = vpop.f32.mrb[0].mxu0
        %v3516 = vadd.f32 0.0, %v3515
        %v3517 = vpop.f32.mrb[0].mxu0
        %3518 = vmatprep.mubr.bf16.mxu0 %v3203
        %3519 = vmatmul.mubr.bf16.gmra.mrb[0].mxu0 %v3202
        %v3520 = vpop.f32.mrb[0].mxu0
        %v3521 = vadd.f32 0.0, %v3520
        %v3522 = vpop.f32.mrb[0].mxu0
        %v3523 = vpop.f32.mrb[0].mxu0
        %v3524 = vadd.f32 0.0, %v3523
        %v3525 = vpop.f32.mrb[0].mxu0
        %3526 = vdwg.mxu0
        %3527 = vmatprep.subr.bf16.mxu0 0
        %3528 = vmatpush1.bf16.msra.mxu0 %v3414
        %3529 = vmatprep.subr.bf16.mxu0 0
        %3530 = vmatpush1.bf16.msra.mxu0 %v3415
        %3531 = vmatprep.subr.bf16.mxu0 0
        %3532 = vmatpush1.bf16.msra.mxu0 %v3416
        %3533 = vmatprep.subr.bf16.mxu0 0
        %3534 = vmatpush1.bf16.msra.mxu0 %v3417
        %3535 = vmatprep.subr.bf16.mxu0 0
        %3536 = vmatpush1.bf16.msra.mxu0 %v3418
        %3537 = vmatprep.subr.bf16.mxu0 0
        %3538 = vmatpush1.bf16.msra.mxu0 %v3419
        %3539 = vmatprep.subr.bf16.mxu0 0
        %3540 = vmatpush1.bf16.msra.mxu0 %v3420
        %3541 = vmatprep.subr.bf16.mxu0 0
        %3542 = vmatpush1.bf16.msra.mxu0 %v3421
        %3543 = vmatprep.subr.bf16.mxu0 0
        %3544 = vmatpush1.bf16.msra.mxu0 %v3422
        %3545 = vmatprep.subr.bf16.mxu0 0
        %3546 = vmatpush1.bf16.msra.mxu0 %v3423
        %3547 = vmatprep.subr.bf16.mxu0 0
        %3548 = vmatpush1.bf16.msra.mxu0 %v3424
        %3549 = vmatprep.subr.bf16.mxu0 0
        %3550 = vmatpush1.bf16.msra.mxu0 %v3425
        %3551 = vmatprep.subr.bf16.mxu0 0
        %3552 = vmatpush1.bf16.msra.mxu0 %v3426
        %3553 = vmatprep.subr.bf16.mxu0 0
        %3554 = vmatpush1.bf16.msra.mxu0 %v3427
        %3555 = vmatprep.subr.bf16.mxu0 0
        %3556 = vmatpush1.bf16.msra.mxu0 %v3428
        %3557 = vmatprep.subr.bf16.mxu0 0
        %3558 = vmatpush1.bf16.msra.mxu0 %v3429
        %3559 = vmatprep.mubr.bf16.mxu0 %v3193
        %3560 = vmatmul.mubr.bf16.gmra.mrb[0].mxu0 %v3192
        %v3561 = vpop.f32.mrb[0].mxu0
        %v3562 = vadd.f32 %v3497, %v3561
        %v3563 = vpop.f32.mrb[0].mxu0
        %v3564 = vpop.f32.mrb[0].mxu0
        %v3565 = vadd.f32 %v3500, %v3564
        %v3566 = vpop.f32.mrb[0].mxu0
        %3567 = vmatprep.mubr.bf16.mxu0 %v3197
        %3568 = vmatmul.mubr.bf16.gmra.mrb[0].mxu0 %v3196
        %v3569 = vpop.f32.mrb[0].mxu0
        %v3570 = vadd.f32 %v3505, %v3569
        %v3571 = vpop.f32.mrb[0].mxu0
        %v3572 = vpop.f32.mrb[0].mxu0
        %v3573 = vadd.f32 %v3508, %v3572
        %v3574 = vpop.f32.mrb[0].mxu0
        %3575 = vmatprep.mubr.bf16.mxu0 %v3201
        %3576 = vmatmul.mubr.bf16.gmra.mrb[0].mxu0 %v3200
        %v3577 = vpop.f32.mrb[0].mxu0
        %v3578 = vadd.f32 %v3513, %v3577
        %v3579 = vpop.f32.mrb[0].mxu0
        %v3580 = vpop.f32.mrb[0].mxu0
        %v3581 = vadd.f32 %v3516, %v3580
        %v3582 = vpop.f32.mrb[0].mxu0
        %3583 = vmatprep.mubr.bf16.mxu0 %v3205
        %3584 = vmatmul.mubr.bf16.gmra.mrb[0].mxu0 %v3204
        %v3585 = vpop.f32.mrb[0].mxu0
        %v3586 = vadd.f32 %v3521, %v3585
        %v3587 = vpop.f32.mrb[0].mxu0
        %v3588 = vpop.f32.mrb[0].mxu0
        %v3589 = vadd.f32 %v3524, %v3588
        %v3590 = vpop.f32.mrb[0].mxu0
        %3591 = vdwg.mxu0
        %v3592 = vlaneseq
        %v3593 = vshrl.u32 %v3592, 7
        %v3594 = vsub.s32 2, %v3593
        %v3595 = vrot.slane %v520, %v3594
        %v3596 = vmul.f32 %v3562, %v3595
        %v3597 = vmul.f32 %v3565, %v3595
        %v3598 = vmul.f32 %v3570, %v3595
        %v3599 = vmul.f32 %v3573, %v3595
        %v3600 = vmul.f32 %v3578, %v3595
        %v3601 = vmul.f32 %v3581, %v3595
        %v3602 = vmul.f32 %v3586, %v3595
        %v3603 = vmul.f32 %v3589, %v3595
        %v3604 = vlaneseq
        %v3605 = vshrl.u32 %v3604, 7
        %v3606 = vsub.s32 3, %v3605
        %v3607 = vrot.slane %v520, %v3606
        %v3608 = vadd.f32 %v3596, %v3607
        %v3609 = vadd.f32 %v3597, %v3607
        %v3610 = vadd.f32 %v3598, %v3607
        %v3611 = vadd.f32 %v3599, %v3607
        %v3612 = vadd.f32 %v3600, %v3607
        %v3613 = vadd.f32 %v3601, %v3607
        %v3614 = vadd.f32 %v3602, %v3607
        %v3615 = vadd.f32 %v3603, %v3607
        %v3616 = vadd.f32 %v3608, %v725
        %v3617 = vadd.f32 %v3609, %v726
        %v3618 = vadd.f32 %v3610, %v727
        %v3619 = vadd.f32 %v3611, %v728
        %v3620 = vadd.f32 %v3612, %v729
        %v3621 = vadd.f32 %v3613, %v730
        %v3622 = vadd.f32 %v3614, %v731
        %v3623 = vadd.f32 %v3615, %v732
        %v3624 = vpack.c.bf16 %v3617, %v3616
        %v3625 = vpack.c.bf16 %v3619, %v3618
        %v3626 = vpack.c.bf16 %v3621, %v3620
        %v3627 = vpack.c.bf16 %v3623, %v3622
        %v3628 = vld [vmem:[%s10] sm:$0xff]
        %v3629 = vld [vmem:[%s10 + $0x8] sm:$0xff]
        %v3630 = vld [vmem:[%s10 + $0x10] sm:$0xff]
        %v3631 = vld [vmem:[%s10 + $0x18] sm:$0xff]
        %v3632 = vld [vmem:[%s10 + $0x20] sm:$0xff]
        %v3633 = vld [vmem:[%s10 + $0x28] sm:$0xff]
        %v3634 = vld [vmem:[%s10 + $0x30] sm:$0xff]
        %v3635 = vld [vmem:[%s10 + $0x38] sm:$0xff]
        %v3636 = vld [vmem:[%s10 + $0x40] sm:$0xff]
        %v3637 = vld [vmem:[%s10 + $0x48] sm:$0xff]
        %v3638 = vld [vmem:[%s10 + $0x50] sm:$0xff]
        %v3639 = vld [vmem:[%s10 + $0x58] sm:$0xff]
        %v3640 = vld [vmem:[%s10 + $0x60] sm:$0xff]
        %v3641 = vld [vmem:[%s10 + $0x68] sm:$0xff]
        %v3642 = vld [vmem:[%s10 + $0x70] sm:$0xff]
        %v3643 = vld [vmem:[%s10 + $0x78] sm:$0xff]
        %v3660 = vunpack.c.l.b16 %v3628
        %v3661 = vunpack.c.h.b16 %v3628
        %v3662 = vunpack.c.l.b16 %v3629
        %v3663 = vunpack.c.h.b16 %v3629
        %v3664 = vunpack.c.l.b16 %v3630
        %v3665 = vunpack.c.h.b16 %v3630
        %v3666 = vunpack.c.l.b16 %v3631
        %v3667 = vunpack.c.h.b16 %v3631
        %v3668 = vunpack.c.l.b16 %v3632
        %v3669 = vunpack.c.h.b16 %v3632
        %v3670 = vunpack.c.l.b16 %v3633
        %v3671 = vunpack.c.h.b16 %v3633
        %v3672 = vunpack.c.l.b16 %v3634
        %v3673 = vunpack.c.h.b16 %v3634
        %v3674 = vunpack.c.l.b16 %v3635
        %v3675 = vunpack.c.h.b16 %v3635
        %v3676 = vunpack.c.l.b16 %v3636
        %v3677 = vunpack.c.h.b16 %v3636
        %v3678 = vunpack.c.l.b16 %v3637
        %v3679 = vunpack.c.h.b16 %v3637
        %v3680 = vunpack.c.l.b16 %v3638
        %v3681 = vunpack.c.h.b16 %v3638
        %v3682 = vunpack.c.l.b16 %v3639
        %v3683 = vunpack.c.h.b16 %v3639
        %v3684 = vunpack.c.l.b16 %v3640
        %v3685 = vunpack.c.h.b16 %v3640
        %v3686 = vunpack.c.l.b16 %v3641
        %v3687 = vunpack.c.h.b16 %v3641
        %v3688 = vunpack.c.l.b16 %v3642
        %v3689 = vunpack.c.h.b16 %v3642
        %v3690 = vunpack.c.l.b16 %v3643
        %v3691 = vunpack.c.h.b16 %v3643
        %v3692 = vpack.c.b16 %v3662, %v3660
        %v3693 = vpack.c.b16 %v3663, %v3661
        %v3694 = vpack.c.b16 %v3666, %v3664
        %v3695 = vpack.c.b16 %v3667, %v3665
        %v3696 = vpack.c.b16 %v3670, %v3668
        %v3697 = vpack.c.b16 %v3671, %v3669
        %v3698 = vpack.c.b16 %v3674, %v3672
        %v3699 = vpack.c.b16 %v3675, %v3673
        %v3700 = vpack.c.b16 %v3678, %v3676
        %v3701 = vpack.c.b16 %v3679, %v3677
        %v3702 = vpack.c.b16 %v3682, %v3680
        %v3703 = vpack.c.b16 %v3683, %v3681
        %v3704 = vpack.c.b16 %v3686, %v3684
        %v3705 = vpack.c.b16 %v3687, %v3685
        %v3706 = vpack.c.b16 %v3690, %v3688
        %v3707 = vpack.c.b16 %v3691, %v3689
        %3724 = vmatprep.subr.bf16.mxu0 %v3693
        %3725 = vmatpush1.bf16.msra.mxu0 %v3692
        %3726 = vmatprep.subr.bf16.mxu0 %v3695
        %3727 = vmatpush1.bf16.msra.mxu0 %v3694
        %3728 = vmatprep.subr.bf16.mxu0 %v3697
        %3729 = vmatpush1.bf16.msra.mxu0 %v3696
        %3730 = vmatprep.subr.bf16.mxu0 %v3699
        %3731 = vmatpush1.bf16.msra.mxu0 %v3698
        %3732 = vmatprep.subr.bf16.mxu0 %v3701
        %3733 = vmatpush1.bf16.msra.mxu0 %v3700
        %3734 = vmatprep.subr.bf16.mxu0 %v3703
        %3735 = vmatpush1.bf16.msra.mxu0 %v3702
        %3736 = vmatprep.subr.bf16.mxu0 %v3705
        %3737 = vmatpush1.bf16.msra.mxu0 %v3704
        %3738 = vmatprep.subr.bf16.mxu0 %v3707
        %3739 = vmatpush1.bf16.msra.mxu0 %v3706
        %3740 = vmatprep.subr.bf16.mxu0 0
        %3741 = vmatpush1.bf16.msra.mxu0 0
        %3742 = vmatprep.subr.bf16.mxu0 0
        %3743 = vmatpush1.bf16.msra.mxu0 0
        %3744 = vmatprep.subr.bf16.mxu0 0
        %3745 = vmatpush1.bf16.msra.mxu0 0
        %3746 = vmatprep.subr.bf16.mxu0 0
        %3747 = vmatpush1.bf16.msra.mxu0 0
        %3748 = vmatprep.subr.bf16.mxu0 0
        %3749 = vmatpush1.bf16.msra.mxu0 0
        %3750 = vmatprep.subr.bf16.mxu0 0
        %3751 = vmatpush1.bf16.msra.mxu0 0
        %3752 = vmatprep.subr.bf16.mxu0 0
        %3753 = vmatpush1.bf16.msra.mxu0 0
        %3754 = vmatprep.subr.bf16.mxu0 0
        %3755 = vmatpush1.bf16.msra.mxu0 0
        %3756 = vmatprep.mubr.bf16.mxu0 0
        %3757 = vmatmul.mubr.bf16.gmra.mrb[0].mxu0 %v3624
        %v3758 = vpop.f32.mrb[0].mxu0
        %v3759 = vadd.f32 0.0, %v3758
        %v3760 = vpop.f32.mrb[0].mxu0
        %v3761 = vadd.f32 0.0, %v3760
        %v3762 = vpop.f32.mrb[0].mxu0
        %v3763 = vadd.f32 0.0, %v3762
        %v3764 = vpop.f32.mrb[0].mxu0
        %v3765 = vadd.f32 0.0, %v3764
        %3766 = vmatprep.mubr.bf16.mxu0 0
        %3767 = vmatmul.mubr.bf16.gmra.mrb[0].mxu0 %v3625
        %v3768 = vpop.f32.mrb[0].mxu0
        %v3769 = vadd.f32 0.0, %v3768
        %v3770 = vpop.f32.mrb[0].mxu0
        %v3771 = vadd.f32 0.0, %v3770
        %v3772 = vpop.f32.mrb[0].mxu0
        %v3773 = vadd.f32 0.0, %v3772
        %v3774 = vpop.f32.mrb[0].mxu0
        %v3775 = vadd.f32 0.0, %v3774
        %3776 = vmatprep.mubr.bf16.mxu0 0
        %3777 = vmatmul.mubr.bf16.gmra.mrb[0].mxu0 %v3626
        %v3778 = vpop.f32.mrb[0].mxu0
        %v3779 = vadd.f32 0.0, %v3778
        %v3780 = vpop.f32.mrb[0].mxu0
        %v3781 = vadd.f32 0.0, %v3780
        %v3782 = vpop.f32.mrb[0].mxu0
        %v3783 = vadd.f32 0.0, %v3782
        %v3784 = vpop.f32.mrb[0].mxu0
        %v3785 = vadd.f32 0.0, %v3784
        %3786 = vmatprep.mubr.bf16.mxu0 0
        %3787 = vmatmul.mubr.bf16.gmra.mrb[0].mxu0 %v3627
        %v3788 = vpop.f32.mrb[0].mxu0
        %v3789 = vadd.f32 0.0, %v3788
        %v3790 = vpop.f32.mrb[0].mxu0
        %v3791 = vadd.f32 0.0, %v3790
        %v3792 = vpop.f32.mrb[0].mxu0
        %v3793 = vadd.f32 0.0, %v3792
        %v3794 = vpop.f32.mrb[0].mxu0
        %v3795 = vadd.f32 0.0, %v3794
        %3796 = vdwg.mxu0
        %v3797 = vld [vmem:[%s11] ss:$2 sm:$0x3]
        %v3799 = vlaneseq
        %v3800 = vshrl.u32 %v3799, 7
        %v3801 = vsub.s32 0, %v3800
        %v3802 = vrot.slane %v3797, %v3801
        %v3803 = vlaneseq
        %v3804 = vshrl.u32 %v3803, 7
        %v3805 = vsub.s32 1, %v3804
        %v3806 = vrot.slane %v3797, %v3805
        %v3809 = vmul.f32 %v3759, %v3802
        %v3810 = vmul.f32 %v3761, %v3806
        %v3811 = vmul.f32 %v3763, %v3802
        %v3812 = vmul.f32 %v3765, %v3806
        %v3813 = vmul.f32 %v3769, %v3802
        %v3814 = vmul.f32 %v3771, %v3806
        %v3815 = vmul.f32 %v3773, %v3802
        %v3816 = vmul.f32 %v3775, %v3806
        %v3817 = vmul.f32 %v3779, %v3802
        %v3818 = vmul.f32 %v3781, %v3806
        %v3819 = vmul.f32 %v3783, %v3802
        %v3820 = vmul.f32 %v3785, %v3806
        %v3821 = vmul.f32 %v3789, %v3802
        %v3822 = vmul.f32 %v3791, %v3806
        %v3823 = vmul.f32 %v3793, %v3802
        %v3824 = vmul.f32 %v3795, %v3806
        %s3825 = scalar_lea.vmem %s11, 1
        %v3826 = vld [vmem:[%s3825] ss:$2 sm:$0x3]
        %v3828 = vlaneseq
        %v3829 = vshrl.u32 %v3828, 7
        %v3830 = vsub.s32 0, %v3829
        %v3831 = vrot.slane %v3826, %v3830
        %v3832 = vlaneseq
        %v3833 = vshrl.u32 %v3832, 7
        %v3834 = vsub.s32 1, %v3833
        %v3835 = vrot.slane %v3826, %v3834
        %v3838 = vadd.f32 %v3809, %v3831
        %v3839 = vadd.f32 %v3810, %v3835
        %v3840 = vadd.f32 %v3811, %v3831
        %v3841 = vadd.f32 %v3812, %v3835
        %v3842 = vadd.f32 %v3813, %v3831
        %v3843 = vadd.f32 %v3814, %v3835
        %v3844 = vadd.f32 %v3815, %v3831
        %v3845 = vadd.f32 %v3816, %v3835
        %v3846 = vadd.f32 %v3817, %v3831
        %v3847 = vadd.f32 %v3818, %v3835
        %v3848 = vadd.f32 %v3819, %v3831
        %v3849 = vadd.f32 %v3820, %v3835
        %v3850 = vadd.f32 %v3821, %v3831
        %v3851 = vadd.f32 %v3822, %v3835
        %v3852 = vadd.f32 %v3823, %v3831
        %v3853 = vadd.f32 %v3824, %v3835
        %v3854 = vxor.u32 %v3838, 2147483648
        %v3855 = vxor.u32 %v3839, 2147483648
        %v3856 = vxor.u32 %v3840, 2147483648
        %v3857 = vxor.u32 %v3841, 2147483648
        %v3858 = vxor.u32 %v3842, 2147483648
        %v3859 = vxor.u32 %v3843, 2147483648
        %v3860 = vxor.u32 %v3844, 2147483648
        %v3861 = vxor.u32 %v3845, 2147483648
        %v3862 = vxor.u32 %v3846, 2147483648
        %v3863 = vxor.u32 %v3847, 2147483648
        %v3864 = vxor.u32 %v3848, 2147483648
        %v3865 = vxor.u32 %v3849, 2147483648
        %v3866 = vxor.u32 %v3850, 2147483648
        %v3867 = vxor.u32 %v3851, 2147483648
        %v3868 = vxor.u32 %v3852, 2147483648
        %v3869 = vxor.u32 %v3853, 2147483648
        %v3870 = vmul.f32 %v3854, 1.442695
        %v3871 = vpow.pop %v3870
        %v3872 = vmul.f32 %v3855, 1.442695
        %v3873 = vpow.pop %v3872
        %v3874 = vmul.f32 %v3856, 1.442695
        %v3875 = vpow.pop %v3874
        %v3876 = vmul.f32 %v3857, 1.442695
        %v3877 = vpow.pop %v3876
        %v3878 = vmul.f32 %v3858, 1.442695
        %v3879 = vpow.pop %v3878
        %v3880 = vmul.f32 %v3859, 1.442695
        %v3881 = vpow.pop %v3880
        %v3882 = vmul.f32 %v3860, 1.442695
        %v3883 = vpow.pop %v3882
        %v3884 = vmul.f32 %v3861, 1.442695
        %v3885 = vpow.pop %v3884
        %v3886 = vmul.f32 %v3862, 1.442695
        %v3887 = vpow.pop %v3886
        %v3888 = vmul.f32 %v3863, 1.442695
        %v3889 = vpow.pop %v3888
        %v3890 = vmul.f32 %v3864, 1.442695
        %v3891 = vpow.pop %v3890
        %v3892 = vmul.f32 %v3865, 1.442695
        %v3893 = vpow.pop %v3892
        %v3894 = vmul.f32 %v3866, 1.442695
        %v3895 = vpow.pop %v3894
        %v3896 = vmul.f32 %v3867, 1.442695
        %v3897 = vpow.pop %v3896
        %v3898 = vmul.f32 %v3868, 1.442695
        %v3899 = vpow.pop %v3898
        %v3900 = vmul.f32 %v3869, 1.442695
        %v3901 = vpow.pop %v3900
        %v3902 = vadd.f32 %v3871, 1.0
        %v3903 = vadd.f32 %v3873, 1.0
        %v3904 = vadd.f32 %v3875, 1.0
        %v3905 = vadd.f32 %v3877, 1.0
        %v3906 = vadd.f32 %v3879, 1.0
        %v3907 = vadd.f32 %v3881, 1.0
        %v3908 = vadd.f32 %v3883, 1.0
        %v3909 = vadd.f32 %v3885, 1.0
        %v3910 = vadd.f32 %v3887, 1.0
        %v3911 = vadd.f32 %v3889, 1.0
        %v3912 = vadd.f32 %v3891, 1.0
        %v3913 = vadd.f32 %v3893, 1.0
        %v3914 = vadd.f32 %v3895, 1.0
        %v3915 = vadd.f32 %v3897, 1.0
        %v3916 = vadd.f32 %v3899, 1.0
        %v3917 = vadd.f32 %v3901, 1.0
        %v3918 = vrcp.pop %v3902
        %v3919 = vmul.f32 1.0, %v3918
        %v3920 = vrcp.pop %v3903
        %v3921 = vmul.f32 1.0, %v3920
        %v3922 = vrcp.pop %v3904
        %v3923 = vmul.f32 1.0, %v3922
        %v3924 = vrcp.pop %v3905
        %v3925 = vmul.f32 1.0, %v3924
        %v3926 = vrcp.pop %v3906
        %v3927 = vmul.f32 1.0, %v3926
        %v3928 = vrcp.pop %v3907
        %v3929 = vmul.f32 1.0, %v3928
        %v3930 = vrcp.pop %v3908
        %v3931 = vmul.f32 1.0, %v3930
        %v3932 = vrcp.pop %v3909
        %v3933 = vmul.f32 1.0, %v3932
        %v3934 = vrcp.pop %v3910
        %v3935 = vmul.f32 1.0, %v3934
        %v3936 = vrcp.pop %v3911
        %v3937 = vmul.f32 1.0, %v3936
        %v3938 = vrcp.pop %v3912
        %v3939 = vmul.f32 1.0, %v3938
        %v3940 = vrcp.pop %v3913
        %v3941 = vmul.f32 1.0, %v3940
        %v3942 = vrcp.pop %v3914
        %v3943 = vmul.f32 1.0, %v3942
        %v3944 = vrcp.pop %v3915
        %v3945 = vmul.f32 1.0, %v3944
        %v3946 = vrcp.pop %v3916
        %v3947 = vmul.f32 1.0, %v3946
        %v3948 = vrcp.pop %v3917
        %v3949 = vmul.f32 1.0, %v3948
        %v3950 = vmul.f32 %v3838, %v3919
        %v3951 = vmul.f32 %v3839, %v3921
        %v3952 = vmul.f32 %v3840, %v3923
        %v3953 = vmul.f32 %v3841, %v3925
        %v3954 = vmul.f32 %v3842, %v3927
        %v3955 = vmul.f32 %v3843, %v3929
        %v3956 = vmul.f32 %v3844, %v3931
        %v3957 = vmul.f32 %v3845, %v3933
        %v3958 = vmul.f32 %v3846, %v3935
        %v3959 = vmul.f32 %v3847, %v3937
        %v3960 = vmul.f32 %v3848, %v3939
        %v3961 = vmul.f32 %v3849, %v3941
        %v3962 = vmul.f32 %v3850, %v3943
        %v3963 = vmul.f32 %v3851, %v3945
        %v3964 = vmul.f32 %v3852, %v3947
        %v3965 = vmul.f32 %v3853, %v3949
        %v3966 = vadd.f32 %v3950, %v3952
        %v3967 = vadd.f32 %v3966, %v3954
        %v3968 = vadd.f32 %v3967, %v3956
        %v3969 = vadd.f32 %v3968, %v3958
        %v3970 = vadd.f32 %v3969, %v3960
        %v3971 = vadd.f32 %v3970, %v3962
        %v3972 = vadd.f32 %v3971, %v3964
        %v3973 = vrot.slane %v3972, 4
        %v3974 = vadd.f32 %v3972, %v3973
        %v3975 = vrot.slane %v3974, 2
        %v3976 = vadd.f32 %v3974, %v3975
        %v3977 = vrot.slane %v3976, 1
        %v3978 = vadd.f32 %v3976, %v3977
        %v3979 = vadd.f32 %v3951, %v3953
        %v3980 = vadd.f32 %v3979, %v3955
        %v3981 = vadd.f32 %v3980, %v3957
        %v3982 = vadd.f32 %v3981, %v3959
        %v3983 = vadd.f32 %v3982, %v3961
        %v3984 = vadd.f32 %v3983, %v3963
        %v3985 = vadd.f32 %v3984, %v3965
        %v3986 = vrot.slane %v3985, 4
        %v3987 = vadd.f32 %v3985, %v3986
        %v3988 = vrot.slane %v3987, 2
        %v3989 = vadd.f32 %v3987, %v3988
        %v3990 = vrot.slane %v3989, 1
        %v3991 = vadd.f32 %v3989, %v3990
        %v3992 = vmul.f32 %v3978, 0.015625
        %v3993 = vmul.f32 %v3991, 0.015625
        %v3994 = vld [vmem:[%s13] sm:$0x77]
        %v3995 = vld [vmem:[%s13 + $0x8] sm:$0x77]
        %v3996 = vpack.c.bf16 %v3992, %v3992
        %v3997 = vpack.c.bf16 %v3993, %v3993
        %v3998 = vld [vmem:[%s12] sm:$0xff]
        %v3999 = vld [vmem:[%s12 + $0x8] sm:$0xff]
        %v4000 = vld [vmem:[%s12 + $0x10] sm:$0xff]
        %v4001 = vld [vmem:[%s12 + $0x18] sm:$0xff]
        %v4002 = vld [vmem:[%s12 + $0x20] sm:$0xff]
        %v4003 = vld [vmem:[%s12 + $0x28] sm:$0xff]
        %v4004 = vld [vmem:[%s12 + $0x30] sm:$0xff]
        %v4005 = vld [vmem:[%s12 + $0x38] sm:$0xff]
        %v4006 = vld [vmem:[%s12 + $0x40] sm:$0xff]
        %v4007 = vld [vmem:[%s12 + $0x48] sm:$0xff]
        %v4008 = vld [vmem:[%s12 + $0x50] sm:$0xff]
        %v4009 = vld [vmem:[%s12 + $0x58] sm:$0xff]
        %v4010 = vld [vmem:[%s12 + $0x60] sm:$0xff]
        %v4011 = vld [vmem:[%s12 + $0x68] sm:$0xff]
        %v4012 = vld [vmem:[%s12 + $0x70] sm:$0xff]
        %v4013 = vld [vmem:[%s12 + $0x78] sm:$0xff]
        %v4014 = vld [vmem:[%s12 + $0x80] sm:$0xff]
        %v4015 = vld [vmem:[%s12 + $0x88] sm:$0xff]
        %v4016 = vld [vmem:[%s12 + $0x90] sm:$0xff]
        %v4017 = vld [vmem:[%s12 + $0x98] sm:$0xff]
        %v4018 = vld [vmem:[%s12 + $0xa0] sm:$0xff]
        %v4019 = vld [vmem:[%s12 + $0xa8] sm:$0xff]
        %v4020 = vld [vmem:[%s12 + $0xb0] sm:$0xff]
        %v4021 = vld [vmem:[%s12 + $0xb8] sm:$0xff]
        %v4022 = vld [vmem:[%s12 + $0xc0] sm:$0xff]
        %v4023 = vld [vmem:[%s12 + $0xc8] sm:$0xff]
        %v4024 = vld [vmem:[%s12 + $0xd0] sm:$0xff]
        %v4025 = vld [vmem:[%s12 + $0xd8] sm:$0xff]
        %v4026 = vld [vmem:[%s12 + $0xe0] sm:$0xff]
        %v4027 = vld [vmem:[%s12 + $0xe8] sm:$0xff]
        %v4028 = vld [vmem:[%s12 + $0xf0] sm:$0xff]
        %v4029 = vld [vmem:[%s12 + $0xf8] sm:$0xff]
        %v4030 = vld [vmem:[%s12 + $0x100] sm:$0xff]
        %v4031 = vld [vmem:[%s12 + $0x108] sm:$0xff]
        %v4032 = vld [vmem:[%s12 + $0x110] sm:$0xff]
        %v4033 = vld [vmem:[%s12 + $0x118] sm:$0xff]
        %v4034 = vld [vmem:[%s12 + $0x120] sm:$0xff]
        %v4035 = vld [vmem:[%s12 + $0x128] sm:$0xff]
        %v4036 = vld [vmem:[%s12 + $0x130] sm:$0xff]
        %v4037 = vld [vmem:[%s12 + $0x138] sm:$0xff]
        %v4038 = vld [vmem:[%s12 + $0x140] sm:$0xff]
        %v4039 = vld [vmem:[%s12 + $0x148] sm:$0xff]
        %v4040 = vld [vmem:[%s12 + $0x150] sm:$0xff]
        %v4041 = vld [vmem:[%s12 + $0x158] sm:$0xff]
        %v4042 = vld [vmem:[%s12 + $0x160] sm:$0xff]
        %v4043 = vld [vmem:[%s12 + $0x168] sm:$0xff]
        %v4044 = vld [vmem:[%s12 + $0x170] sm:$0xff]
        %v4045 = vld [vmem:[%s12 + $0x178] sm:$0xff]
        %v4046 = vld [vmem:[%s12 + $0x180] sm:$0xff]
        %v4047 = vld [vmem:[%s12 + $0x188] sm:$0xff]
        %v4048 = vld [vmem:[%s12 + $0x190] sm:$0xff]
        %v4049 = vld [vmem:[%s12 + $0x198] sm:$0xff]
        %v4050 = vld [vmem:[%s12 + $0x1a0] sm:$0xff]
        %v4051 = vld [vmem:[%s12 + $0x1a8] sm:$0xff]
        %v4052 = vld [vmem:[%s12 + $0x1b0] sm:$0xff]
        %v4053 = vld [vmem:[%s12 + $0x1b8] sm:$0xff]
        %v4054 = vld [vmem:[%s12 + $0x1c0] sm:$0xff]
        %v4055 = vld [vmem:[%s12 + $0x1c8] sm:$0xff]
        %v4056 = vld [vmem:[%s12 + $0x1d0] sm:$0xff]
        %v4057 = vld [vmem:[%s12 + $0x1d8] sm:$0xff]
        %v4058 = vld [vmem:[%s12 + $0x1e0] sm:$0xff]
        %v4059 = vld [vmem:[%s12 + $0x1e8] sm:$0xff]
        %v4060 = vld [vmem:[%s12 + $0x1f0] sm:$0xff]
        %v4061 = vld [vmem:[%s12 + $0x1f8] sm:$0xff]
        %v4126 = vunpack.c.l.b16 %v3998
        %v4127 = vunpack.c.h.b16 %v3998
        %v4128 = vunpack.c.l.b16 %v3999
        %v4129 = vunpack.c.h.b16 %v3999
        %v4130 = vunpack.c.l.b16 %v4000
        %v4131 = vunpack.c.h.b16 %v4000
        %v4132 = vunpack.c.l.b16 %v4001
        %v4133 = vunpack.c.h.b16 %v4001
        %v4134 = vunpack.c.l.b16 %v4002
        %v4135 = vunpack.c.h.b16 %v4002
        %v4136 = vunpack.c.l.b16 %v4003
        %v4137 = vunpack.c.h.b16 %v4003
        %v4138 = vunpack.c.l.b16 %v4004
        %v4139 = vunpack.c.h.b16 %v4004
        %v4140 = vunpack.c.l.b16 %v4005
        %v4141 = vunpack.c.h.b16 %v4005
        %v4142 = vunpack.c.l.b16 %v4006
        %v4143 = vunpack.c.h.b16 %v4006
        %v4144 = vunpack.c.l.b16 %v4007
        %v4145 = vunpack.c.h.b16 %v4007
        %v4146 = vunpack.c.l.b16 %v4008
        %v4147 = vunpack.c.h.b16 %v4008
        %v4148 = vunpack.c.l.b16 %v4009
        %v4149 = vunpack.c.h.b16 %v4009
        %v4150 = vunpack.c.l.b16 %v4010
        %v4151 = vunpack.c.h.b16 %v4010
        %v4152 = vunpack.c.l.b16 %v4011
        %v4153 = vunpack.c.h.b16 %v4011
        %v4154 = vunpack.c.l.b16 %v4012
        %v4155 = vunpack.c.h.b16 %v4012
        %v4156 = vunpack.c.l.b16 %v4013
        %v4157 = vunpack.c.h.b16 %v4013
        %v4158 = vunpack.c.l.b16 %v4014
        %v4159 = vunpack.c.h.b16 %v4014
        %v4160 = vunpack.c.l.b16 %v4015
        %v4161 = vunpack.c.h.b16 %v4015
        %v4162 = vunpack.c.l.b16 %v4016
        %v4163 = vunpack.c.h.b16 %v4016
        %v4164 = vunpack.c.l.b16 %v4017
        %v4165 = vunpack.c.h.b16 %v4017
        %v4166 = vunpack.c.l.b16 %v4018
        %v4167 = vunpack.c.h.b16 %v4018
        %v4168 = vunpack.c.l.b16 %v4019
        %v4169 = vunpack.c.h.b16 %v4019
        %v4170 = vunpack.c.l.b16 %v4020
        %v4171 = vunpack.c.h.b16 %v4020
        %v4172 = vunpack.c.l.b16 %v4021
        %v4173 = vunpack.c.h.b16 %v4021
        %v4174 = vunpack.c.l.b16 %v4022
        %v4175 = vunpack.c.h.b16 %v4022
        %v4176 = vunpack.c.l.b16 %v4023
        %v4177 = vunpack.c.h.b16 %v4023
        %v4178 = vunpack.c.l.b16 %v4024
        %v4179 = vunpack.c.h.b16 %v4024
        %v4180 = vunpack.c.l.b16 %v4025
        %v4181 = vunpack.c.h.b16 %v4025
        %v4182 = vunpack.c.l.b16 %v4026
        %v4183 = vunpack.c.h.b16 %v4026
        %v4184 = vunpack.c.l.b16 %v4027
        %v4185 = vunpack.c.h.b16 %v4027
        %v4186 = vunpack.c.l.b16 %v4028
        %v4187 = vunpack.c.h.b16 %v4028
        %v4188 = vunpack.c.l.b16 %v4029
        %v4189 = vunpack.c.h.b16 %v4029
        %v4190 = vunpack.c.l.b16 %v4030
        %v4191 = vunpack.c.h.b16 %v4030
        %v4192 = vunpack.c.l.b16 %v4031
        %v4193 = vunpack.c.h.b16 %v4031
        %v4194 = vunpack.c.l.b16 %v4032
        %v4195 = vunpack.c.h.b16 %v4032
        %v4196 = vunpack.c.l.b16 %v4033
        %v4197 = vunpack.c.h.b16 %v4033
        %v4198 = vunpack.c.l.b16 %v4034
        %v4199 = vunpack.c.h.b16 %v4034
        %v4200 = vunpack.c.l.b16 %v4035
        %v4201 = vunpack.c.h.b16 %v4035
        %v4202 = vunpack.c.l.b16 %v4036
        %v4203 = vunpack.c.h.b16 %v4036
        %v4204 = vunpack.c.l.b16 %v4037
        %v4205 = vunpack.c.h.b16 %v4037
        %v4206 = vunpack.c.l.b16 %v4038
        %v4207 = vunpack.c.h.b16 %v4038
        %v4208 = vunpack.c.l.b16 %v4039
        %v4209 = vunpack.c.h.b16 %v4039
        %v4210 = vunpack.c.l.b16 %v4040
        %v4211 = vunpack.c.h.b16 %v4040
        %v4212 = vunpack.c.l.b16 %v4041
        %v4213 = vunpack.c.h.b16 %v4041
        %v4214 = vunpack.c.l.b16 %v4042
        %v4215 = vunpack.c.h.b16 %v4042
        %v4216 = vunpack.c.l.b16 %v4043
        %v4217 = vunpack.c.h.b16 %v4043
        %v4218 = vunpack.c.l.b16 %v4044
        %v4219 = vunpack.c.h.b16 %v4044
        %v4220 = vunpack.c.l.b16 %v4045
        %v4221 = vunpack.c.h.b16 %v4045
        %v4222 = vunpack.c.l.b16 %v4046
        %v4223 = vunpack.c.h.b16 %v4046
        %v4224 = vunpack.c.l.b16 %v4047
        %v4225 = vunpack.c.h.b16 %v4047
        %v4226 = vunpack.c.l.b16 %v4048
        %v4227 = vunpack.c.h.b16 %v4048
        %v4228 = vunpack.c.l.b16 %v4049
        %v4229 = vunpack.c.h.b16 %v4049
        %v4230 = vunpack.c.l.b16 %v4050
        %v4231 = vunpack.c.h.b16 %v4050
        %v4232 = vunpack.c.l.b16 %v4051
        %v4233 = vunpack.c.h.b16 %v4051
        %v4234 = vunpack.c.l.b16 %v4052
        %v4235 = vunpack.c.h.b16 %v4052
        %v4236 = vunpack.c.l.b16 %v4053
        %v4237 = vunpack.c.h.b16 %v4053
        %v4238 = vunpack.c.l.b16 %v4054
        %v4239 = vunpack.c.h.b16 %v4054
        %v4240 = vunpack.c.l.b16 %v4055
        %v4241 = vunpack.c.h.b16 %v4055
        %v4242 = vunpack.c.l.b16 %v4056
        %v4243 = vunpack.c.h.b16 %v4056
        %v4244 = vunpack.c.l.b16 %v4057
        %v4245 = vunpack.c.h.b16 %v4057
        %v4246 = vunpack.c.l.b16 %v4058
        %v4247 = vunpack.c.h.b16 %v4058
        %v4248 = vunpack.c.l.b16 %v4059
        %v4249 = vunpack.c.h.b16 %v4059
        %v4250 = vunpack.c.l.b16 %v4060
        %v4251 = vunpack.c.h.b16 %v4060
        %v4252 = vunpack.c.l.b16 %v4061
        %v4253 = vunpack.c.h.b16 %v4061
        %v4254 = vpack.c.b16 %v4130, %v4126
        %v4255 = vpack.c.b16 %v4131, %v4127
        %v4256 = vpack.c.b16 %v4132, %v4128
        %v4257 = vpack.c.b16 %v4133, %v4129
        %v4258 = vpack.c.b16 %v4138, %v4134
        %v4259 = vpack.c.b16 %v4139, %v4135
        %v4260 = vpack.c.b16 %v4140, %v4136
        %v4261 = vpack.c.b16 %v4141, %v4137
        %v4262 = vpack.c.b16 %v4146, %v4142
        %v4263 = vpack.c.b16 %v4147, %v4143
        %v4264 = vpack.c.b16 %v4148, %v4144
        %v4265 = vpack.c.b16 %v4149, %v4145
        %v4266 = vpack.c.b16 %v4154, %v4150
        %v4267 = vpack.c.b16 %v4155, %v4151
        %v4268 = vpack.c.b16 %v4156, %v4152
        %v4269 = vpack.c.b16 %v4157, %v4153
        %v4270 = vpack.c.b16 %v4162, %v4158
        %v4271 = vpack.c.b16 %v4163, %v4159
        %v4272 = vpack.c.b16 %v4164, %v4160
        %v4273 = vpack.c.b16 %v4165, %v4161
        %v4274 = vpack.c.b16 %v4170, %v4166
        %v4275 = vpack.c.b16 %v4171, %v4167
        %v4276 = vpack.c.b16 %v4172, %v4168
        %v4277 = vpack.c.b16 %v4173, %v4169
        %v4278 = vpack.c.b16 %v4178, %v4174
        %v4279 = vpack.c.b16 %v4179, %v4175
        %v4280 = vpack.c.b16 %v4180, %v4176
        %v4281 = vpack.c.b16 %v4181, %v4177
        %v4282 = vpack.c.b16 %v4186, %v4182
        %v4283 = vpack.c.b16 %v4187, %v4183
        %v4284 = vpack.c.b16 %v4188, %v4184
        %v4285 = vpack.c.b16 %v4189, %v4185
        %v4286 = vpack.c.b16 %v4194, %v4190
        %v4287 = vpack.c.b16 %v4195, %v4191
        %v4288 = vpack.c.b16 %v4196, %v4192
        %v4289 = vpack.c.b16 %v4197, %v4193
        %v4290 = vpack.c.b16 %v4202, %v4198
        %v4291 = vpack.c.b16 %v4203, %v4199
        %v4292 = vpack.c.b16 %v4204, %v4200
        %v4293 = vpack.c.b16 %v4205, %v4201
        %v4294 = vpack.c.b16 %v4210, %v4206
        %v4295 = vpack.c.b16 %v4211, %v4207
        %v4296 = vpack.c.b16 %v4212, %v4208
        %v4297 = vpack.c.b16 %v4213, %v4209
        %v4298 = vpack.c.b16 %v4218, %v4214
        %v4299 = vpack.c.b16 %v4219, %v4215
        %v4300 = vpack.c.b16 %v4220, %v4216
        %v4301 = vpack.c.b16 %v4221, %v4217
        %v4302 = vpack.c.b16 %v4226, %v4222
        %v4303 = vpack.c.b16 %v4227, %v4223
        %v4304 = vpack.c.b16 %v4228, %v4224
        %v4305 = vpack.c.b16 %v4229, %v4225
        %v4306 = vpack.c.b16 %v4234, %v4230
        %v4307 = vpack.c.b16 %v4235, %v4231
        %v4308 = vpack.c.b16 %v4236, %v4232
        %v4309 = vpack.c.b16 %v4237, %v4233
        %v4310 = vpack.c.b16 %v4242, %v4238
        %v4311 = vpack.c.b16 %v4243, %v4239
        %v4312 = vpack.c.b16 %v4244, %v4240
        %v4313 = vpack.c.b16 %v4245, %v4241
        %v4314 = vpack.c.b16 %v4250, %v4246
        %v4315 = vpack.c.b16 %v4251, %v4247
        %v4316 = vpack.c.b16 %v4252, %v4248
        %v4317 = vpack.c.b16 %v4253, %v4249
        %v4384 = vlaneseq
        %v4385 = vshrl.u32 %v4384, 7
        %v4386 = vsub.s32 0, %v4385
        %v4387 = vrot.slane %v3994, %v4386
        %v4388 = vlaneseq
        %v4389 = vshrl.u32 %v4388, 7
        %v4390 = vsub.s32 4, %v4389
        %v4391 = vrot.slane %v3994, %v4390
        %v4392 = vlaneseq
        %v4393 = vshrl.u32 %v4392, 7
        %v4394 = vsub.s32 0, %v4393
        %v4395 = vrot.slane %v3995, %v4394
        %v4396 = vlaneseq
        %v4397 = vshrl.u32 %v4396, 7
        %v4398 = vsub.s32 4, %v4397
        %v4399 = vrot.slane %v3995, %v4398
        %4404 = vmatprep.subr.bf16.mxu0 %v4255
        %4405 = vmatpush1.bf16.msra.mxu0 %v4254
        %4406 = vmatprep.subr.bf16.mxu0 %v4259
        %4407 = vmatpush1.bf16.msra.mxu0 %v4258
        %4408 = vmatprep.subr.bf16.mxu0 %v4263
        %4409 = vmatpush1.bf16.msra.mxu0 %v4262
        %4410 = vmatprep.subr.bf16.mxu0 %v4267
        %4411 = vmatpush1.bf16.msra.mxu0 %v4266
        %4412 = vmatprep.subr.bf16.mxu0 %v4271
        %4413 = vmatpush1.bf16.msra.mxu0 %v4270
        %4414 = vmatprep.subr.bf16.mxu0 %v4275
        %4415 = vmatpush1.bf16.msra.mxu0 %v4274
        %4416 = vmatprep.subr.bf16.mxu0 %v4279
        %4417 = vmatpush1.bf16.msra.mxu0 %v4278
        %4418 = vmatprep.subr.bf16.mxu0 %v4283
        %4419 = vmatpush1.bf16.msra.mxu0 %v4282
        %4420 = vmatprep.subr.bf16.mxu0 %v4287
        %4421 = vmatpush1.bf16.msra.mxu0 %v4286
        %4422 = vmatprep.subr.bf16.mxu0 %v4291
        %4423 = vmatpush1.bf16.msra.mxu0 %v4290
        %4424 = vmatprep.subr.bf16.mxu0 %v4295
        %4425 = vmatpush1.bf16.msra.mxu0 %v4294
        %4426 = vmatprep.subr.bf16.mxu0 %v4299
        %4427 = vmatpush1.bf16.msra.mxu0 %v4298
        %4428 = vmatprep.subr.bf16.mxu0 %v4303
        %4429 = vmatpush1.bf16.msra.mxu0 %v4302
        %4430 = vmatprep.subr.bf16.mxu0 %v4307
        %4431 = vmatpush1.bf16.msra.mxu0 %v4306
        %4432 = vmatprep.subr.bf16.mxu0 %v4311
        %4433 = vmatpush1.bf16.msra.mxu0 %v4310
        %4434 = vmatprep.subr.bf16.mxu0 %v4315
        %4435 = vmatpush1.bf16.msra.mxu0 %v4314
        %4436 = vmatprep.mubr.bf16.mxu0 %v3997
        %4437 = vmatmul.mubr.bf16.gmra.mrb[0].mxu0 %v3996
        %v4438 = vpop.f32.mrb[0].mxu0
        %v4439 = vadd.f32 %v4387, %v4438
        %v4440 = vpop.f32.mrb[0].mxu0
        %v4441 = vadd.f32 %v4391, %v4440
        %v4442 = vpop.f32.mrb[0].mxu0
        %v4443 = vpop.f32.mrb[0].mxu0
        %4444 = vdwg.mxu0
        %4445 = vmatprep.subr.bf16.mxu0 %v4257
        %4446 = vmatpush1.bf16.msra.mxu0 %v4256
        %4447 = vmatprep.subr.bf16.mxu0 %v4261
        %4448 = vmatpush1.bf16.msra.mxu0 %v4260
        %4449 = vmatprep.subr.bf16.mxu0 %v4265
        %4450 = vmatpush1.bf16.msra.mxu0 %v4264
        %4451 = vmatprep.subr.bf16.mxu0 %v4269
        %4452 = vmatpush1.bf16.msra.mxu0 %v4268
        %4453 = vmatprep.subr.bf16.mxu0 %v4273
        %4454 = vmatpush1.bf16.msra.mxu0 %v4272
        %4455 = vmatprep.subr.bf16.mxu0 %v4277
        %4456 = vmatpush1.bf16.msra.mxu0 %v4276
        %4457 = vmatprep.subr.bf16.mxu0 %v4281
        %4458 = vmatpush1.bf16.msra.mxu0 %v4280
        %4459 = vmatprep.subr.bf16.mxu0 %v4285
        %4460 = vmatpush1.bf16.msra.mxu0 %v4284
        %4461 = vmatprep.subr.bf16.mxu0 %v4289
        %4462 = vmatpush1.bf16.msra.mxu0 %v4288
        %4463 = vmatprep.subr.bf16.mxu0 %v4293
        %4464 = vmatpush1.bf16.msra.mxu0 %v4292
        %4465 = vmatprep.subr.bf16.mxu0 %v4297
        %4466 = vmatpush1.bf16.msra.mxu0 %v4296
        %4467 = vmatprep.subr.bf16.mxu0 %v4301
        %4468 = vmatpush1.bf16.msra.mxu0 %v4300
        %4469 = vmatprep.subr.bf16.mxu0 %v4305
        %4470 = vmatpush1.bf16.msra.mxu0 %v4304
        %4471 = vmatprep.subr.bf16.mxu0 %v4309
        %4472 = vmatpush1.bf16.msra.mxu0 %v4308
        %4473 = vmatprep.subr.bf16.mxu0 %v4313
        %4474 = vmatpush1.bf16.msra.mxu0 %v4312
        %4475 = vmatprep.subr.bf16.mxu0 %v4317
        %4476 = vmatpush1.bf16.msra.mxu0 %v4316
        %4477 = vmatprep.mubr.bf16.mxu0 %v3997
        %4478 = vmatmul.mubr.bf16.gmra.mrb[0].mxu0 %v3996
        %v4479 = vpop.f32.mrb[0].mxu0
        %v4480 = vadd.f32 %v4395, %v4479
        %v4481 = vpop.f32.mrb[0].mxu0
        %v4482 = vadd.f32 %v4399, %v4481
        %v4483 = vpop.f32.mrb[0].mxu0
        %v4484 = vpop.f32.mrb[0].mxu0
        %4485 = vdwg.mxu0
        %v4486 = vlaneseq
        %v4487 = vshrl.u32 %v4486, 7
        %v4488 = vsub.s32 1, %v4487
        %v4489 = vrot.slane %v3994, %v4488
        %v4490 = vlaneseq
        %v4491 = vshrl.u32 %v4490, 7
        %v4492 = vsub.s32 5, %v4491
        %v4493 = vrot.slane %v3994, %v4492
        %v4494 = vlaneseq
        %v4495 = vshrl.u32 %v4494, 7
        %v4496 = vsub.s32 1, %v4495
        %v4497 = vrot.slane %v3995, %v4496
        %v4498 = vlaneseq
        %v4499 = vshrl.u32 %v4498, 7
        %v4500 = vsub.s32 5, %v4499
        %v4501 = vrot.slane %v3995, %v4500
        %v4506 = vmul.f32 %v4439, %v4489
        %v4507 = vmul.f32 %v4441, %v4493
        %v4508 = vmul.f32 %v4480, %v4497
        %v4509 = vmul.f32 %v4482, %v4501
        %v4510 = vlaneseq
        %v4511 = vshrl.u32 %v4510, 7
        %v4512 = vsub.s32 2, %v4511
        %v4513 = vrot.slane %v3994, %v4512
        %v4514 = vlaneseq
        %v4515 = vshrl.u32 %v4514, 7
        %v4516 = vsub.s32 6, %v4515
        %v4517 = vrot.slane %v3994, %v4516
        %v4518 = vlaneseq
        %v4519 = vshrl.u32 %v4518, 7
        %v4520 = vsub.s32 2, %v4519
        %v4521 = vrot.slane %v3995, %v4520
        %v4522 = vlaneseq
        %v4523 = vshrl.u32 %v4522, 7
        %v4524 = vsub.s32 6, %v4523
        %v4525 = vrot.slane %v3995, %v4524
        %v4530 = vadd.f32 %v4506, %v4513
        %v4531 = vadd.f32 %v4507, %v4517
        %v4532 = vadd.f32 %v4508, %v4521
        %v4533 = vadd.f32 %v4509, %v4525
        %v4534 = vmax.f32 %v4530, 0.0
        %v4535 = vmax.f32 %v4531, 0.0
        %v4536 = vmax.f32 %v4532, 0.0
        %v4537 = vmax.f32 %v4533, 0.0
        %v4538 = vpack.c.bf16 %v4534, %v4534
        %v4539 = vpack.c.bf16 %v4535, %v4535
        %v4540 = vpack.c.bf16 %v4536, %v4536
        %v4541 = vpack.c.bf16 %v4537, %v4537
        %v4542 = vld [vmem:[%s14] sm:$0xf]
        %v4543 = vld [vmem:[%s14 + $0x4] sm:$0xf]
        %v4544 = vld [vmem:[%s14 + $0x8] sm:$0xf]
        %v4545 = vld [vmem:[%s14 + $0xc] sm:$0xf]
        %v4546 = vld [vmem:[%s14 + $0x10] sm:$0xf]
        %v4547 = vld [vmem:[%s14 + $0x14] sm:$0xf]
        %v4548 = vld [vmem:[%s14 + $0x18] sm:$0xf]
        %v4549 = vld [vmem:[%s14 + $0x1c] sm:$0xf]
        %v4550 = vld [vmem:[%s14 + $0x20] sm:$0xf]
        %v4551 = vld [vmem:[%s14 + $0x24] sm:$0xf]
        %v4552 = vld [vmem:[%s14 + $0x28] sm:$0xf]
        %v4553 = vld [vmem:[%s14 + $0x2c] sm:$0xf]
        %v4554 = vld [vmem:[%s14 + $0x30] sm:$0xf]
        %v4555 = vld [vmem:[%s14 + $0x34] sm:$0xf]
        %v4556 = vld [vmem:[%s14 + $0x38] sm:$0xf]
        %v4557 = vld [vmem:[%s14 + $0x3c] sm:$0xf]
        %v4558 = vld [vmem:[%s14 + $0x40] sm:$0xf]
        %v4559 = vld [vmem:[%s14 + $0x44] sm:$0xf]
        %v4560 = vld [vmem:[%s14 + $0x48] sm:$0xf]
        %v4561 = vld [vmem:[%s14 + $0x4c] sm:$0xf]
        %v4562 = vld [vmem:[%s14 + $0x50] sm:$0xf]
        %v4563 = vld [vmem:[%s14 + $0x54] sm:$0xf]
        %v4564 = vld [vmem:[%s14 + $0x58] sm:$0xf]
        %v4565 = vld [vmem:[%s14 + $0x5c] sm:$0xf]
        %v4566 = vld [vmem:[%s14 + $0x60] sm:$0xf]
        %v4567 = vld [vmem:[%s14 + $0x64] sm:$0xf]
        %v4568 = vld [vmem:[%s14 + $0x68] sm:$0xf]
        %v4569 = vld [vmem:[%s14 + $0x6c] sm:$0xf]
        %v4570 = vld [vmem:[%s14 + $0x70] sm:$0xf]
        %v4571 = vld [vmem:[%s14 + $0x74] sm:$0xf]
        %v4572 = vld [vmem:[%s14 + $0x78] sm:$0xf]
        %v4573 = vld [vmem:[%s14 + $0x7c] sm:$0xf]
        %v4574 = vld [vmem:[%s14 + $0x80] sm:$0xf]
        %v4575 = vld [vmem:[%s14 + $0x84] sm:$0xf]
        %v4576 = vld [vmem:[%s14 + $0x88] sm:$0xf]
        %v4577 = vld [vmem:[%s14 + $0x8c] sm:$0xf]
        %v4578 = vld [vmem:[%s14 + $0x90] sm:$0xf]
        %v4579 = vld [vmem:[%s14 + $0x94] sm:$0xf]
        %v4580 = vld [vmem:[%s14 + $0x98] sm:$0xf]
        %v4581 = vld [vmem:[%s14 + $0x9c] sm:$0xf]
        %v4582 = vld [vmem:[%s14 + $0xa0] sm:$0xf]
        %v4583 = vld [vmem:[%s14 + $0xa4] sm:$0xf]
        %v4584 = vld [vmem:[%s14 + $0xa8] sm:$0xf]
        %v4585 = vld [vmem:[%s14 + $0xac] sm:$0xf]
        %v4586 = vld [vmem:[%s14 + $0xb0] sm:$0xf]
        %v4587 = vld [vmem:[%s14 + $0xb4] sm:$0xf]
        %v4588 = vld [vmem:[%s14 + $0xb8] sm:$0xf]
        %v4589 = vld [vmem:[%s14 + $0xbc] sm:$0xf]
        %v4590 = vld [vmem:[%s14 + $0xc0] sm:$0xf]
        %v4591 = vld [vmem:[%s14 + $0xc4] sm:$0xf]
        %v4592 = vld [vmem:[%s14 + $0xc8] sm:$0xf]
        %v4593 = vld [vmem:[%s14 + $0xcc] sm:$0xf]
        %v4594 = vld [vmem:[%s14 + $0xd0] sm:$0xf]
        %v4595 = vld [vmem:[%s14 + $0xd4] sm:$0xf]
        %v4596 = vld [vmem:[%s14 + $0xd8] sm:$0xf]
        %v4597 = vld [vmem:[%s14 + $0xdc] sm:$0xf]
        %v4598 = vld [vmem:[%s14 + $0xe0] sm:$0xf]
        %v4599 = vld [vmem:[%s14 + $0xe4] sm:$0xf]
        %v4600 = vld [vmem:[%s14 + $0xe8] sm:$0xf]
        %v4601 = vld [vmem:[%s14 + $0xec] sm:$0xf]
        %v4602 = vld [vmem:[%s14 + $0xf0] sm:$0xf]
        %v4603 = vld [vmem:[%s14 + $0xf4] sm:$0xf]
        %v4604 = vld [vmem:[%s14 + $0xf8] sm:$0xf]
        %v4605 = vld [vmem:[%s14 + $0xfc] sm:$0xf]
        %v4606 = vld [vmem:[%s15] sm:$0x1]
        %v4671 = vunpack.c.l.b16 %v4542
        %v4672 = vunpack.c.l.b16 %v4543
        %v4673 = vunpack.c.l.b16 %v4544
        %v4674 = vunpack.c.l.b16 %v4545
        %v4675 = vunpack.c.l.b16 %v4546
        %v4676 = vunpack.c.l.b16 %v4547
        %v4677 = vunpack.c.l.b16 %v4548
        %v4678 = vunpack.c.l.b16 %v4549
        %v4679 = vunpack.c.l.b16 %v4550
        %v4680 = vunpack.c.l.b16 %v4551
        %v4681 = vunpack.c.l.b16 %v4552
        %v4682 = vunpack.c.l.b16 %v4553
        %v4683 = vunpack.c.l.b16 %v4554
        %v4684 = vunpack.c.l.b16 %v4555
        %v4685 = vunpack.c.l.b16 %v4556
        %v4686 = vunpack.c.l.b16 %v4557
        %v4687 = vunpack.c.l.b16 %v4558
        %v4688 = vunpack.c.l.b16 %v4559
        %v4689 = vunpack.c.l.b16 %v4560
        %v4690 = vunpack.c.l.b16 %v4561
        %v4691 = vunpack.c.l.b16 %v4562
        %v4692 = vunpack.c.l.b16 %v4563
        %v4693 = vunpack.c.l.b16 %v4564
        %v4694 = vunpack.c.l.b16 %v4565
        %v4695 = vunpack.c.l.b16 %v4566
        %v4696 = vunpack.c.l.b16 %v4567
        %v4697 = vunpack.c.l.b16 %v4568
        %v4698 = vunpack.c.l.b16 %v4569
        %v4699 = vunpack.c.l.b16 %v4570
        %v4700 = vunpack.c.l.b16 %v4571
        %v4701 = vunpack.c.l.b16 %v4572
        %v4702 = vunpack.c.l.b16 %v4573
        %v4703 = vunpack.c.l.b16 %v4574
        %v4704 = vunpack.c.l.b16 %v4575
        %v4705 = vunpack.c.l.b16 %v4576
        %v4706 = vunpack.c.l.b16 %v4577
        %v4707 = vunpack.c.l.b16 %v4578
        %v4708 = vunpack.c.l.b16 %v4579
        %v4709 = vunpack.c.l.b16 %v4580
        %v4710 = vunpack.c.l.b16 %v4581
        %v4711 = vunpack.c.l.b16 %v4582
        %v4712 = vunpack.c.l.b16 %v4583
        %v4713 = vunpack.c.l.b16 %v4584
        %v4714 = vunpack.c.l.b16 %v4585
        %v4715 = vunpack.c.l.b16 %v4586
        %v4716 = vunpack.c.l.b16 %v4587
        %v4717 = vunpack.c.l.b16 %v4588
        %v4718 = vunpack.c.l.b16 %v4589
        %v4719 = vunpack.c.l.b16 %v4590
        %v4720 = vunpack.c.l.b16 %v4591
        %v4721 = vunpack.c.l.b16 %v4592
        %v4722 = vunpack.c.l.b16 %v4593
        %v4723 = vunpack.c.l.b16 %v4594
        %v4724 = vunpack.c.l.b16 %v4595
        %v4725 = vunpack.c.l.b16 %v4596
        %v4726 = vunpack.c.l.b16 %v4597
        %v4727 = vunpack.c.l.b16 %v4598
        %v4728 = vunpack.c.l.b16 %v4599
        %v4729 = vunpack.c.l.b16 %v4600
        %v4730 = vunpack.c.l.b16 %v4601
        %v4731 = vunpack.c.l.b16 %v4602
        %v4732 = vunpack.c.l.b16 %v4603
        %v4733 = vunpack.c.l.b16 %v4604
        %v4734 = vunpack.c.l.b16 %v4605
        %v4735 = vpack.c.b16 %v4672, %v4671
        %v4736 = vpack.c.b16 %v4674, %v4673
        %v4737 = vpack.c.b16 %v4676, %v4675
        %v4738 = vpack.c.b16 %v4678, %v4677
        %v4739 = vpack.c.b16 %v4680, %v4679
        %v4740 = vpack.c.b16 %v4682, %v4681
        %v4741 = vpack.c.b16 %v4684, %v4683
        %v4742 = vpack.c.b16 %v4686, %v4685
        %v4743 = vpack.c.b16 %v4688, %v4687
        %v4744 = vpack.c.b16 %v4690, %v4689
        %v4745 = vpack.c.b16 %v4692, %v4691
        %v4746 = vpack.c.b16 %v4694, %v4693
        %v4747 = vpack.c.b16 %v4696, %v4695
        %v4748 = vpack.c.b16 %v4698, %v4697
        %v4749 = vpack.c.b16 %v4700, %v4699
        %v4750 = vpack.c.b16 %v4702, %v4701
        %v4751 = vpack.c.b16 %v4704, %v4703
        %v4752 = vpack.c.b16 %v4706, %v4705
        %v4753 = vpack.c.b16 %v4708, %v4707
        %v4754 = vpack.c.b16 %v4710, %v4709
        %v4755 = vpack.c.b16 %v4712, %v4711
        %v4756 = vpack.c.b16 %v4714, %v4713
        %v4757 = vpack.c.b16 %v4716, %v4715
        %v4758 = vpack.c.b16 %v4718, %v4717
        %v4759 = vpack.c.b16 %v4720, %v4719
        %v4760 = vpack.c.b16 %v4722, %v4721
        %v4761 = vpack.c.b16 %v4724, %v4723
        %v4762 = vpack.c.b16 %v4726, %v4725
        %v4763 = vpack.c.b16 %v4728, %v4727
        %v4764 = vpack.c.b16 %v4730, %v4729
        %v4765 = vpack.c.b16 %v4732, %v4731
        %v4766 = vpack.c.b16 %v4734, %v4733
        %4799 = vmatprep.subr.bf16.mxu0 0
        %4800 = vmatpush1.bf16.msra.mxu0 %v4735
        %4801 = vmatprep.subr.bf16.mxu0 0
        %4802 = vmatpush1.bf16.msra.mxu0 %v4736
        %4803 = vmatprep.subr.bf16.mxu0 0
        %4804 = vmatpush1.bf16.msra.mxu0 %v4737
        %4805 = vmatprep.subr.bf16.mxu0 0
        %4806 = vmatpush1.bf16.msra.mxu0 %v4738
        %4807 = vmatprep.subr.bf16.mxu0 0
        %4808 = vmatpush1.bf16.msra.mxu0 %v4739
        %4809 = vmatprep.subr.bf16.mxu0 0
        %4810 = vmatpush1.bf16.msra.mxu0 %v4740
        %4811 = vmatprep.subr.bf16.mxu0 0
        %4812 = vmatpush1.bf16.msra.mxu0 %v4741
        %4813 = vmatprep.subr.bf16.mxu0 0
        %4814 = vmatpush1.bf16.msra.mxu0 %v4742
        %4815 = vmatprep.subr.bf16.mxu0 0
        %4816 = vmatpush1.bf16.msra.mxu0 %v4743
        %4817 = vmatprep.subr.bf16.mxu0 0
        %4818 = vmatpush1.bf16.msra.mxu0 %v4744
        %4819 = vmatprep.subr.bf16.mxu0 0
        %4820 = vmatpush1.bf16.msra.mxu0 %v4745
        %4821 = vmatprep.subr.bf16.mxu0 0
        %4822 = vmatpush1.bf16.msra.mxu0 %v4746
        %4823 = vmatprep.subr.bf16.mxu0 0
        %4824 = vmatpush1.bf16.msra.mxu0 %v4747
        %4825 = vmatprep.subr.bf16.mxu0 0
        %4826 = vmatpush1.bf16.msra.mxu0 %v4748
        %4827 = vmatprep.subr.bf16.mxu0 0
        %4828 = vmatpush1.bf16.msra.mxu0 %v4749
        %4829 = vmatprep.subr.bf16.mxu0 0
        %4830 = vmatpush1.bf16.msra.mxu0 %v4750
        %4831 = vmatprep.mubr.bf16.mxu0 %v4539
        %4832 = vmatmul.mubr.bf16.gmra.mrb[0].mxu0 %v4538
        %v4833 = vpop.f32.mrb[0].mxu0
        %v4834 = vadd.f32 %v4606, %v4833
        %v4835 = vpop.f32.mrb[0].mxu0
        %v4836 = vpop.f32.mrb[0].mxu0
        %v4837 = vpop.f32.mrb[0].mxu0
        %4838 = vdwg.mxu0
        %4839 = vmatprep.subr.bf16.mxu0 0
        %4840 = vmatpush1.bf16.msra.mxu0 %v4751
        %4841 = vmatprep.subr.bf16.mxu0 0
        %4842 = vmatpush1.bf16.msra.mxu0 %v4752
        %4843 = vmatprep.subr.bf16.mxu0 0
        %4844 = vmatpush1.bf16.msra.mxu0 %v4753
        %4845 = vmatprep.subr.bf16.mxu0 0
        %4846 = vmatpush1.bf16.msra.mxu0 %v4754
        %4847 = vmatprep.subr.bf16.mxu0 0
        %4848 = vmatpush1.bf16.msra.mxu0 %v4755
        %4849 = vmatprep.subr.bf16.mxu0 0
        %4850 = vmatpush1.bf16.msra.mxu0 %v4756
        %4851 = vmatprep.subr.bf16.mxu0 0
        %4852 = vmatpush1.bf16.msra.mxu0 %v4757
        %4853 = vmatprep.subr.bf16.mxu0 0
        %4854 = vmatpush1.bf16.msra.mxu0 %v4758
        %4855 = vmatprep.subr.bf16.mxu0 0
        %4856 = vmatpush1.bf16.msra.mxu0 %v4759
        %4857 = vmatprep.subr.bf16.mxu0 0
        %4858 = vmatpush1.bf16.msra.mxu0 %v4760
        %4859 = vmatprep.subr.bf16.mxu0 0
        %4860 = vmatpush1.bf16.msra.mxu0 %v4761
        %4861 = vmatprep.subr.bf16.mxu0 0
        %4862 = vmatpush1.bf16.msra.mxu0 %v4762
        %4863 = vmatprep.subr.bf16.mxu0 0
        %4864 = vmatpush1.bf16.msra.mxu0 %v4763
        %4865 = vmatprep.subr.bf16.mxu0 0
        %4866 = vmatpush1.bf16.msra.mxu0 %v4764
        %4867 = vmatprep.subr.bf16.mxu0 0
        %4868 = vmatpush1.bf16.msra.mxu0 %v4765
        %4869 = vmatprep.subr.bf16.mxu0 0
        %4870 = vmatpush1.bf16.msra.mxu0 %v4766
        %4871 = vmatprep.mubr.bf16.mxu0 %v4541
        %4872 = vmatmul.mubr.bf16.gmra.mrb[0].mxu0 %v4540
        %v4873 = vpop.f32.mrb[0].mxu0
        %v4874 = vadd.f32 %v4834, %v4873
        %v4875 = vpop.f32.mrb[0].mxu0
        %v4876 = vpop.f32.mrb[0].mxu0
        %v4877 = vpop.f32.mrb[0].mxu0
        %4878 = vdwg.mxu0
        %4879 = vst [vmem:[%s513] sm:$0x1] %v4874
        %s4880 = sand.u32 %s379, 1
        %s4881 = scalar_lea.sflag [#allocation3], %s4880
        %s4882 = sand.u32 %s379, 1
        %s4883 = scalar_lea.vmem [#allocation2], %s4882
        // Predicated region
        $region85: #{efficientnet_large_scale_forward.1} parent=83 // pred_check
          %p4884 = pneg %p389
        $region86: #{efficientnet_large_scale_forward.1} parent=83 // pred_check_branch
          %4886 = sbr.rel (%p4884) target = $region88
        $region87: #{efficientnet_large_scale_forward.1} parent=83 // pred_region
          %s4888 = ssub.s32 16, 16
          %4889 = vsyncadd %s4881, %s4888
          %s4890 = smul.addr %s30, 16
          %s4891 = scalar_lea.hbm %s16, %s4890
          %s4893 = sshll.u32 %s4883, 4
          %s4894 = int_to_ptr.vmem [resolvable:$true] %s4893
          %4896 = dma.vmem_to_hbm [thread:$0]  %s4894, 16, %s4891, %s4881
        $region88: #{efficientnet_large_scale_forward.1} parent=83 // pred_fallthru
          _
      $region84: #{efficientnet_large_scale_forward.1} parent=5 // pred_fallthru
        _
      %p4897 = scmp.le.s32.totalorder 2, %s25
      // Predicated region
      $region89: #{efficientnet_large_scale_forward.1} parent=5 // pred_check
        %p4898 = pneg %p4897
      $region90: #{efficientnet_large_scale_forward.1} parent=5 // pred_check_branch
        %4900 = sbr.rel (%p4898) target = $region92
      $region91: #{efficientnet_large_scale_forward.1} parent=5 // pred_region
        %s4901 = ssub.s32 %s25, 2
        // Predicated region
        $region93: #{efficientnet_large_scale_forward.1} parent=91 // pred_check
          %p4902 = pneg %p395
        $region94: #{efficientnet_large_scale_forward.1} parent=91 // pred_check_branch
          %4904 = sbr.rel (%p4902) target = $region96
        $region95: #{efficientnet_large_scale_forward.1} parent=91 // pred_region
          %s4905 = sand.u32 %s380, 1
          %s4906 = scalar_lea.sflag [#allocation3], %s4905
          %s4907 = sand.u32 %s380, 1
          %s4908 = scalar_lea.vmem [#allocation2], %s4907
          %4909 = dma.done %s4906, 16
        $region96: #{efficientnet_large_scale_forward.1} parent=91 // pred_fallthru
          _
      $region92: #{efficientnet_large_scale_forward.1} parent=5 // pred_fallthru
        _
    $region6: #{efficientnet_large_scale_forward.1} parent=1 // loop_footer
      %s29 = sadd.s32 1, %s25
    $region7: #{efficientnet_large_scale_forward.1} parent=1 // loop_footer_branch
      %24 = sbr.rel target = $region3
    $region8: #{efficientnet_large_scale_forward.1} parent=1 // loop_exit
      _
    %4910 = vsyncpa [#allocation3], 1
    %s4911 = scalar_lea.sflag [#allocation3], 1
    %4912 = vsyncpa %s4911, 1

</llo_original>
